<compile_context>
chip_gen: v7x
topology: tpu7x:2x2x1
jax: 0.10.0
libtpu: 0.0.40
codegen_flags: <defaults>
</compile_context>

<pallas_src>
import functools

import jax
import jax.numpy as jnp
from jax import lax
from jax.experimental import pallas as pl
from jax.experimental.pallas import tpu as pltpu


def _upsample_conv_kernel(x_ref, w_ref, b_ref, o_ref, acc_ref):
    """Fused x2-nearest-upsample + 3x3 conv for one (column-tile, batch) step.

    x_ref:   (H+2, TW, 3*Cin) bf16. Column-triple of the zero-padded original
             input: channel group g in {0,1,2} holds padded column (c + g).
    w_ref:   (8, 2*Cin, Cout) bf16 folded weights, index = 4*p + 2*q + dh.
    b_ref:   (1, Cout) f32 bias.
    o_ref:   (H, 2, TW, 2*Cout); o_ref[r, p, c, q*Cout + co] = y[2r+p, 2c+q, co].
    acc_ref: (H*TW, Cout) f32 VMEM accumulator scratch.
    """
    Hp2, TW, C3 = x_ref.shape
    H = Hp2 - 2
    Cin = C3 // 3
    Cout = b_ref.shape[-1]
    bias = b_ref[...]                                     # (1, Cout) f32

    for p in range(2):        # output row parity
        for q in range(2):    # output column parity
            lo, hi = q * Cin, (q + 2) * Cin               # lane-aligned when Cin % 128 == 0
            # Row taps are free leading-dim slices of the VMEM block; the two
            # column taps are already concatenated along K (width 2*Cin).
            lhs0 = x_ref[p:p + H, :, lo:hi].reshape(H * TW, 2 * Cin)
            lhs1 = x_ref[p + 1:p + 1 + H, :, lo:hi].reshape(H * TW, 2 * Cin)
            wi = 4 * p + 2 * q
            acc_ref[...] = jnp.dot(lhs0, w_ref[wi],
                                   preferred_element_type=jnp.float32)
            acc_ref[...] += jnp.dot(lhs1, w_ref[wi + 1],
                                    preferred_element_type=jnp.float32)
            o_ref[:, p, :, q * Cout:(q + 1) * Cout] = (
                (acc_ref[...] + bias).reshape(H, TW, Cout).astype(o_ref.dtype)
            )


def _pick_tile_w(H, W, Cin, Cout, out_itemsize, budget_bytes=40 * 1024 * 1024):
    """Largest column tile (multiple of 8 dividing W) whose working set fits VMEM."""
    cands = [tw for tw in (512, 256, 128, 64, 32, 16, 8) if W % tw == 0]
    if not cands:
        return W  # odd / tiny width: single full-width tile (still a legal block)
    for tw in cands:
        in_blk = (H + 2) * tw * 3 * Cin * 2                 # bf16 input tile
        out_blk = H * 2 * tw * 2 * Cout * out_itemsize      # output tile
        wgt = 8 * 2 * Cin * Cout * 2                        # folded bf16 weights
        acc = H * tw * Cout * 4                             # f32 accumulator scratch
        lhs = 2 * H * tw * 2 * Cin * 2                      # live matmul operands
        # NOTE: weights are constant across the grid; pl.Buffered(1) on that
        # BlockSpec would drop one of the two weight buffers on v7x.
        if 2 * (in_blk + out_blk + wgt) + acc + lhs <= budget_bytes:
            return tw
    return cands[-1]


@functools.partial(jax.jit,
                   static_argnames=("stride", "padding", "dilation", "groups", "tile_w"))
def tt_upsample2d_forward(x_nhwc, weight_hwio, bias,
                          stride=1, padding=1, dilation=1, groups=1, tile_w=None):
    """Forward pass of TtUpsample2D: x2 nearest upsample + conv3x3 + bias (NHWC)."""
    # The SDXL VAE upsampler always uses these conv hyper-parameters.
    assert stride == 1 and padding == 1 and dilation == 1 and groups == 1

    B, H, W, Cin = x_nhwc.shape
    kH, kW, wCin, Cout = weight_hwio.shape
    assert (kH, kW) == (3, 3) and wCin == Cin

    out_dtype = x_nhwc.dtype
    cdt = jnp.bfloat16        # MXU compute dtype (f32 accumulation in the kernel)

    # ---- fold the nearest x2 upsample into parity-specific 2x2 conv weights ----
    # Row folding (kh):  p=0 -> {w0, w1+w2},  p=1 -> {w0+w1, w2}
    w = weight_hwio.astype(jnp.float32)                               # (3, 3, Cin, Cout)
    wr = jnp.stack([jnp.stack([w[0], w[1] + w[2]], axis=0),           # p = 0
                    jnp.stack([w[0] + w[1], w[2]], axis=0)],          # p = 1
                   axis=0)                                            # (2, 2, 3, Cin, Cout) [p, dh, kw]
    # Column folding (kw):  q=0 -> {a0, a1+a2},  q=1 -> {a0+a1, a2}
    a0, a1, a2 = wr[:, :, 0], wr[:, :, 1], wr[:, :, 2]
    wf = jnp.stack([jnp.stack([a0, a1 + a2], axis=2),                 # q = 0
                    jnp.stack([a0 + a1, a2], axis=2)],                # q = 1
                   axis=2)                                            # (2, 2, 2, 2, Cin, Cout) [p, dh, q, dw]
    wf = jnp.transpose(wf, (0, 2, 1, 3, 4, 5))                        # [p, q, dh, dw, ci, co]
    wcat = wf.reshape(8, 2 * Cin, Cout).astype(cdt)                   # [4p+2q+dh, dw*Cin+ci, co]

    # ---- original-resolution input: zero-pad once, pre-gather the 3 column taps ----
    xp = jnp.pad(x_nhwc.astype(cdt), ((0, 0), (1, 1), (1, 1), (0, 0)))        # (B, H+2, W+2, Cin)
    x3 = jnp.concatenate([xp[:, :, 0:W], xp[:, :, 1:W + 1], xp[:, :, 2:W + 2]],
                         axis=-1)                                             # (B, H+2, W, 3*Cin)

    bias2d = bias.reshape(1, Cout).astype(jnp.float32)

    TW = tile_w if tile_w is not None else _pick_tile_w(
        H, W, Cin, Cout, jnp.dtype(out_dtype).itemsize)
    n_w = W // TW

    out5 = pl.pallas_call(
        _upsample_conv_kernel,
        out_shape=jax.ShapeDtypeStruct((B, H, 2, W, 2 * Cout), out_dtype),
        grid_spec=pltpu.PrefetchScalarGridSpec(
            num_scalar_prefetch=0,
            grid=(n_w, B),                      # tile axis first: feeds both v7x cores at B=1
            in_specs=[
                pl.BlockSpec((None, H + 2, TW, 3 * Cin), lambda wi, b: (b, 0, wi, 0)),
                pl.BlockSpec((8, 2 * Cin, Cout), lambda wi, b: (0, 0, 0)),
                pl.BlockSpec((1, Cout), lambda wi, b: (0, 0)),
            ],
            out_specs=pl.BlockSpec((None, H, 2, TW, 2 * Cout),
                                   lambda wi, b: (b, 0, 0, wi, 0)),
            scratch_shapes=[pltpu.VMEM((H * TW, Cout), jnp.float32)],
        ),
        compiler_params=pltpu.CompilerParams(
            dimension_semantics=("parallel", "parallel"),
            vmem_limit_bytes=56 * 1024 * 1024,
        ),
    )(x3, wcat, bias2d)

    # Free (metadata-only) reshape: (B, H, 2, W, 2*Cout) == interleaved (B, 2H, 2W, Cout).
    return out5.reshape(B, 2 * H, 2 * W, Cout)


def _reference(x_nhwc, weight_hwio, bias):
    x_up = jnp.repeat(jnp.repeat(x_nhwc, 2, axis=1), 2, axis=2)
    y = lax.conv_general_dilated(
        x_up, weight_hwio,
        window_strides=(1, 1), padding=((1, 1), (1, 1)),
        dimension_numbers=("NHWC", "HWIO", "NHWC"))
    return y + bias.reshape(1, 1, 1, -1)


if __name__ == "__main__":
    # Small shapes consistent with the module: C_in == C_out, 3x3 conv, NHWC.
    B, C, H, W = 2, 32, 16, 16

    key = jax.random.PRNGKey(0)
    kx, kw, kb = jax.random.split(key, 3)

    x = jax.random.normal(kx, (B, H, W, C), dtype=jnp.float32)                # NHWC
    weight_oihw = jax.random.normal(kw, (C, C, 3, 3), dtype=jnp.float32) * 0.05
    bias = jax.random.normal(kb, (C,), dtype=jnp.float32) * 0.1
    weight_hwio = jnp.transpose(weight_oihw, (2, 3, 1, 0))                    # OIHW -> HWIO

    out = tt_upsample2d_forward(x, weight_hwio, bias,
                                stride=1, padding=1, dilation=1, groups=1)
    out = jax.block_until_ready(out)

    ref = _reference(x, weight_hwio, bias)
    assert out.shape == (B, 2 * H, 2 * W, C)
    # bf16 matmuls with f32 accumulation -> loosened tolerance vs the f32 reference.
    assert jnp.allclose(out, ref, atol=5e-2, rtol=5e-2), "mismatch vs reference conv"

    print("KERNEL_OK")
</pallas_src>

<mosaic_0001>
module attributes {stable_mosaic.version = 11 : i64} {
  func.func @_upsample_conv_kernel(%arg0: i32, %arg1: i32, %arg2: memref<1x18x16x96xbf16, #tpu.memory_space<vmem>>, %arg3: memref<8x64x32xbf16, #tpu.memory_space<vmem>>, %arg4: memref<1x32xf32, #tpu.memory_space<vmem>>, %arg5: memref<1x16x2x16x64xf32, #tpu.memory_space<vmem>>, %arg6: memref<256x32xf32, #tpu.memory_space<vmem>>) attributes {dimension_semantics = [#tpu.dimension_semantics<parallel>, #tpu.dimension_semantics<parallel>], iteration_bounds = array<i64: 1, 2>, scalar_prefetch = 0 : i64, scratch_operands = 1 : i64, tpu.core_type = #tpu.core_type<tc>, window_params = [{transform_indices = @transform_0, window_bounds = array<i64: 1, 18, 16, 96>}, {pipeline_mode = #tpu.pipeline_mode<synchronous>, transform_indices = @transform_1, window_bounds = array<i64: 8, 64, 32>}, {pipeline_mode = #tpu.pipeline_mode<synchronous>, transform_indices = @transform_2, window_bounds = array<i64: 1, 32>}, {transform_indices = @transform_3, window_bounds = array<i64: 1, 16, 2, 16, 64>}]} {
    %c0 = arith.constant 0 : index
    %c0_0 = arith.constant 0 : index
    %0 = vector.load %arg4[%c0, %c0_0] : memref<1x32xf32, #tpu.memory_space<vmem>>, vector<1x32xf32>
    %c0_1 = arith.constant 0 : index
    %c0_2 = arith.constant 0 : index
    %c0_3 = arith.constant 0 : index
    %c0_4 = arith.constant 0 : index
    %1 = vector.load %arg2[%c0_1, %c0_2, %c0_3, %c0_4] : memref<1x18x16x96xbf16, #tpu.memory_space<vmem>>, vector<1x16x16x64xbf16>
    %2 = vector.shape_cast %1 : vector<1x16x16x64xbf16> to vector<16x16x64xbf16>
    %3 = vector.shape_cast %2 : vector<16x16x64xbf16> to vector<256x64xbf16>
    %c0_5 = arith.constant 0 : index
    %c1 = arith.constant 1 : index
    %c0_6 = arith.constant 0 : index
    %c0_7 = arith.constant 0 : index
    %4 = vector.load %arg2[%c0_5, %c1, %c0_6, %c0_7] : memref<1x18x16x96xbf16, #tpu.memory_space<vmem>>, vector<1x16x16x64xbf16>
    %5 = vector.shape_cast %4 : vector<1x16x16x64xbf16> to vector<16x16x64xbf16>
    %6 = vector.shape_cast %5 : vector<16x16x64xbf16> to vector<256x64xbf16>
    %c0_8 = arith.constant 0 : index
    %c0_9 = arith.constant 0 : index
    %c0_10 = arith.constant 0 : index
    %7 = vector.load %arg3[%c0_8, %c0_9, %c0_10] : memref<8x64x32xbf16, #tpu.memory_space<vmem>>, vector<1x64x32xbf16>
    %8 = vector.shape_cast %7 : vector<1x64x32xbf16> to vector<64x32xbf16>
    %cst = arith.constant dense<0.000000e+00> : vector<256x32xf32>
    %9 = tpu.matmul %3, %8, %cst {dimension_numbers = #tpu.dot_dimension_numbers<[1], [0], [0], [1], [0, 0, 1, 1], [], []>} : vector<256x64xbf16>, vector<64x32xbf16>, vector<256x32xf32> -> vector<256x32xf32>
    %c0_11 = arith.constant 0 : index
    %c0_12 = arith.constant 0 : index
    %10 = vector.load %arg6[%c0_11, %c0_12] : memref<256x32xf32, #tpu.memory_space<vmem>>, vector<256x32xf32>
    tpu.vector_store %arg6[%c0_11, %c0_12], %9 {strides = array<i32>} : memref<256x32xf32, #tpu.memory_space<vmem>>, vector<256x32xf32>,
    %c0_13 = arith.constant 0 : index
    %c0_14 = arith.constant 0 : index
    %11 = vector.load %arg6[%c0_13, %c0_14] : memref<256x32xf32, #tpu.memory_space<vmem>>, vector<256x32xf32>
    %c1_15 = arith.constant 1 : index
    %c0_16 = arith.constant 0 : index
    %c0_17 = arith.constant 0 : index
    %12 = vector.load %arg3[%c1_15, %c0_16, %c0_17] : memref<8x64x32xbf16, #tpu.memory_space<vmem>>, vector<1x64x32xbf16>
    %13 = vector.shape_cast %12 : vector<1x64x32xbf16> to vector<64x32xbf16>
    %cst_18 = arith.constant dense<0.000000e+00> : vector<256x32xf32>
    %14 = tpu.matmul %6, %13, %cst_18 {dimension_numbers = #tpu.dot_dimension_numbers<[1], [0], [0], [1], [0, 0, 1, 1], [], []>} : vector<256x64xbf16>, vector<64x32xbf16>, vector<256x32xf32> -> vector<256x32xf32>
    %15 = arith.addf %11, %14 : vector<256x32xf32>
    %c0_19 = arith.constant 0 : index
    %c0_20 = arith.constant 0 : index
    %16 = vector.load %arg6[%c0_19, %c0_20] : memref<256x32xf32, #tpu.memory_space<vmem>>, vector<256x32xf32>
    tpu.vector_store %arg6[%c0_19, %c0_20], %15 {strides = array<i32>} : memref<256x32xf32, #tpu.memory_space<vmem>>, vector<256x32xf32>,
    %c0_21 = arith.constant 0 : index
    %c0_22 = arith.constant 0 : index
    %17 = vector.load %arg6[%c0_21, %c0_22] : memref<256x32xf32, #tpu.memory_space<vmem>>, vector<256x32xf32>
    %18 = vector.broadcast %0 : vector<1x32xf32> to vector<256x32xf32>
    %19 = arith.addf %17, %18 : vector<256x32xf32>
    %20 = vector.shape_cast %19 : vector<256x32xf32> to vector<16x16x32xf32>
    %c0_23 = arith.constant 0 : index
    %c0_24 = arith.constant 0 : index
    %c0_25 = arith.constant 0 : index
    %c0_26 = arith.constant 0 : index
    %c0_27 = arith.constant 0 : index
    %21 = vector.load %arg5[%c0_23, %c0_24, %c0_25, %c0_26, %c0_27] : memref<1x16x2x16x64xf32, #tpu.memory_space<vmem>>, vector<1x16x1x16x32xf32>
    %22 = vector.shape_cast %21 : vector<1x16x1x16x32xf32> to vector<16x16x32xf32>
    %23 = vector.shape_cast %20 : vector<16x16x32xf32> to vector<1x16x1x16x32xf32>
    tpu.vector_store %arg5[%c0_23, %c0_24, %c0_25, %c0_26, %c0_27], %23 {strides = array<i32>} : memref<1x16x2x16x64xf32, #tpu.memory_space<vmem>>, vector<1x16x1x16x32xf32>,
    %c0_28 = arith.constant 0 : index
    %c0_29 = arith.constant 0 : index
    %c0_30 = arith.constant 0 : index
    %c32 = arith.constant 32 : index
    %24 = vector.load %arg2[%c0_28, %c0_29, %c0_30, %c32] : memref<1x18x16x96xbf16, #tpu.memory_space<vmem>>, vector<1x16x16x64xbf16>
    %25 = vector.shape_cast %24 : vector<1x16x16x64xbf16> to vector<16x16x64xbf16>
    %26 = vector.shape_cast %25 : vector<16x16x64xbf16> to vector<256x64xbf16>
    %c0_31 = arith.constant 0 : index
    %c1_32 = arith.constant 1 : index
    %c0_33 = arith.constant 0 : index
    %c32_34 = arith.constant 32 : index
    %27 = vector.load %arg2[%c0_31, %c1_32, %c0_33, %c32_34] : memref<1x18x16x96xbf16, #tpu.memory_space<vmem>>, vector<1x16x16x64xbf16>
    %28 = vector.shape_cast %27 : vector<1x16x16x64xbf16> to vector<16x16x64xbf16>
    %29 = vector.shape_cast %28 : vector<16x16x64xbf16> to vector<256x64xbf16>
    %c2 = arith.constant 2 : index
    %c0_35 = arith.constant 0 : index
    %c0_36 = arith.constant 0 : index
    %30 = vector.load %arg3[%c2, %c0_35, %c0_36] : memref<8x64x32xbf16, #tpu.memory_space<vmem>>, vector<1x64x32xbf16>
    %31 = vector.shape_cast %30 : vector<1x64x32xbf16> to vector<64x32xbf16>
    %cst_37 = arith.constant dense<0.000000e+00> : vector<256x32xf32>
    %32 = tpu.matmul %26, %31, %cst_37 {dimension_numbers = #tpu.dot_dimension_numbers<[1], [0], [0], [1], [0, 0, 1, 1], [], []>} : vector<256x64xbf16>, vector<64x32xbf16>, vector<256x32xf32> -> vector<256x32xf32>
    %c0_38 = arith.constant 0 : index
    %c0_39 = arith.constant 0 : index
    %33 = vector.load %arg6[%c0_38, %c0_39] : memref<256x32xf32, #tpu.memory_space<vmem>>, vector<256x32xf32>
    tpu.vector_store %arg6[%c0_38, %c0_39], %32 {strides = array<i32>} : memref<256x32xf32, #tpu.memory_space<vmem>>, vector<256x32xf32>,
    %c0_40 = arith.constant 0 : index
    %c0_41 = arith.constant 0 : index
    %34 = vector.load %arg6[%c0_40, %c0_41] : memref<256x32xf32, #tpu.memory_space<vmem>>, vector<256x32xf32>
    %c3 = arith.constant 3 : index
    %c0_42 = arith.constant 0 : index
    %c0_43 = arith.constant 0 : index
    %35 = vector.load %arg3[%c3, %c0_42, %c0_43] : memref<8x64x32xbf16, #tpu.memory_space<vmem>>, vector<1x64x32xbf16>
    %36 = vector.shape_cast %35 : vector<1x64x32xbf16> to vector<64x32xbf16>
    %cst_44 = arith.constant dense<0.000000e+00> : vector<256x32xf32>
    %37 = tpu.matmul %29, %36, %cst_44 {dimension_numbers = #tpu.dot_dimension_numbers<[1], [0], [0], [1], [0, 0, 1, 1], [], []>} : vector<256x64xbf16>, vector<64x32xbf16>, vector<256x32xf32> -> vector<256x32xf32>
    %38 = arith.addf %34, %37 : vector<256x32xf32>
    %c0_45 = arith.constant 0 : index
    %c0_46 = arith.constant 0 : index
    %39 = vector.load %arg6[%c0_45, %c0_46] : memref<256x32xf32, #tpu.memory_space<vmem>>, vector<256x32xf32>
    tpu.vector_store %arg6[%c0_45, %c0_46], %38 {strides = array<i32>} : memref<256x32xf32, #tpu.memory_space<vmem>>, vector<256x32xf32>,
    %c0_47 = arith.constant 0 : index
    %c0_48 = arith.constant 0 : index
    %40 = vector.load %arg6[%c0_47, %c0_48] : memref<256x32xf32, #tpu.memory_space<vmem>>, vector<256x32xf32>
    %41 = vector.broadcast %0 : vector<1x32xf32> to vector<256x32xf32>
    %42 = arith.addf %40, %41 : vector<256x32xf32>
    %43 = vector.shape_cast %42 : vector<256x32xf32> to vector<16x16x32xf32>
    %c0_49 = arith.constant 0 : index
    %c0_50 = arith.constant 0 : index
    %c0_51 = arith.constant 0 : index
    %c0_52 = arith.constant 0 : index
    %c32_53 = arith.constant 32 : index
    %44 = vector.load %arg5[%c0_49, %c0_50, %c0_51, %c0_52, %c32_53] : memref<1x16x2x16x64xf32, #tpu.memory_space<vmem>>, vector<1x16x1x16x32xf32>
    %45 = vector.shape_cast %44 : vector<1x16x1x16x32xf32> to vector<16x16x32xf32>
    %46 = vector.shape_cast %43 : vector<16x16x32xf32> to vector<1x16x1x16x32xf32>
    tpu.vector_store %arg5[%c0_49, %c0_50, %c0_51, %c0_52, %c32_53], %46 {strides = array<i32>} : memref<1x16x2x16x64xf32, #tpu.memory_space<vmem>>, vector<1x16x1x16x32xf32>,
    %c0_54 = arith.constant 0 : index
    %c1_55 = arith.constant 1 : index
    %c0_56 = arith.constant 0 : index
    %c0_57 = arith.constant 0 : index
    %47 = vector.load %arg2[%c0_54, %c1_55, %c0_56, %c0_57] : memref<1x18x16x96xbf16, #tpu.memory_space<vmem>>, vector<1x16x16x64xbf16>
    %48 = vector.shape_cast %47 : vector<1x16x16x64xbf16> to vector<16x16x64xbf16>
    %49 = vector.shape_cast %48 : vector<16x16x64xbf16> to vector<256x64xbf16>
    %c0_58 = arith.constant 0 : index
    %c2_59 = arith.constant 2 : index
    %c0_60 = arith.constant 0 : index
    %c0_61 = arith.constant 0 : index
    %50 = vector.load %arg2[%c0_58, %c2_59, %c0_60, %c0_61] : memref<1x18x16x96xbf16, #tpu.memory_space<vmem>>, vector<1x16x16x64xbf16>
    %51 = vector.shape_cast %50 : vector<1x16x16x64xbf16> to vector<16x16x64xbf16>
    %52 = vector.shape_cast %51 : vector<16x16x64xbf16> to vector<256x64xbf16>
    %c4 = arith.constant 4 : index
    %c0_62 = arith.constant 0 : index
    %c0_63 = arith.constant 0 : index
    %53 = vector.load %arg3[%c4, %c0_62, %c0_63] : memref<8x64x32xbf16, #tpu.memory_space<vmem>>, vector<1x64x32xbf16>
    %54 = vector.shape_cast %53 : vector<1x64x32xbf16> to vector<64x32xbf16>
    %cst_64 = arith.constant dense<0.000000e+00> : vector<256x32xf32>
    %55 = tpu.matmul %49, %54, %cst_64 {dimension_numbers = #tpu.dot_dimension_numbers<[1], [0], [0], [1], [0, 0, 1, 1], [], []>} : vector<256x64xbf16>, vector<64x32xbf16>, vector<256x32xf32> -> vector<256x32xf32>
    %c0_65 = arith.constant 0 : index
    %c0_66 = arith.constant 0 : index
    %56 = vector.load %arg6[%c0_65, %c0_66] : memref<256x32xf32, #tpu.memory_space<vmem>>, vector<256x32xf32>
    tpu.vector_store %arg6[%c0_65, %c0_66], %55 {strides = array<i32>} : memref<256x32xf32, #tpu.memory_space<vmem>>, vector<256x32xf32>,
    %c0_67 = arith.constant 0 : index
    %c0_68 = arith.constant 0 : index
    %57 = vector.load %arg6[%c0_67, %c0_68] : memref<256x32xf32, #tpu.memory_space<vmem>>, vector<256x32xf32>
    %c5 = arith.constant 5 : index
    %c0_69 = arith.constant 0 : index
    %c0_70 = arith.constant 0 : index
    %58 = vector.load %arg3[%c5, %c0_69, %c0_70] : memref<8x64x32xbf16, #tpu.memory_space<vmem>>, vector<1x64x32xbf16>
    %59 = vector.shape_cast %58 : vector<1x64x32xbf16> to vector<64x32xbf16>
    %cst_71 = arith.constant dense<0.000000e+00> : vector<256x32xf32>
    %60 = tpu.matmul %52, %59, %cst_71 {dimension_numbers = #tpu.dot_dimension_numbers<[1], [0], [0], [1], [0, 0, 1, 1], [], []>} : vector<256x64xbf16>, vector<64x32xbf16>, vector<256x32xf32> -> vector<256x32xf32>
    %61 = arith.addf %57, %60 : vector<256x32xf32>
    %c0_72 = arith.constant 0 : index
    %c0_73 = arith.constant 0 : index
    %62 = vector.load %arg6[%c0_72, %c0_73] : memref<256x32xf32, #tpu.memory_space<vmem>>, vector<256x32xf32>
    tpu.vector_store %arg6[%c0_72, %c0_73], %61 {strides = array<i32>} : memref<256x32xf32, #tpu.memory_space<vmem>>, vector<256x32xf32>,
    %c0_74 = arith.constant 0 : index
    %c0_75 = arith.constant 0 : index
    %63 = vector.load %arg6[%c0_74, %c0_75] : memref<256x32xf32, #tpu.memory_space<vmem>>, vector<256x32xf32>
    %64 = vector.broadcast %0 : vector<1x32xf32> to vector<256x32xf32>
    %65 = arith.addf %63, %64 : vector<256x32xf32>
    %66 = vector.shape_cast %65 : vector<256x32xf32> to vector<16x16x32xf32>
    %c0_76 = arith.constant 0 : index
    %c0_77 = arith.constant 0 : index
    %c1_78 = arith.constant 1 : index
    %c0_79 = arith.constant 0 : index
    %c0_80 = arith.constant 0 : index
    %67 = vector.load %arg5[%c0_76, %c0_77, %c1_78, %c0_79, %c0_80] : memref<1x16x2x16x64xf32, #tpu.memory_space<vmem>>, vector<1x16x1x16x32xf32>
    %68 = vector.shape_cast %67 : vector<1x16x1x16x32xf32> to vector<16x16x32xf32>
    %69 = vector.shape_cast %66 : vector<16x16x32xf32> to vector<1x16x1x16x32xf32>
    tpu.vector_store %arg5[%c0_76, %c0_77, %c1_78, %c0_79, %c0_80], %69 {strides = array<i32>} : memref<1x16x2x16x64xf32, #tpu.memory_space<vmem>>, vector<1x16x1x16x32xf32>,
    %c0_81 = arith.constant 0 : index
    %c1_82 = arith.constant 1 : index
    %c0_83 = arith.constant 0 : index
    %c32_84 = arith.constant 32 : index
    %70 = vector.load %arg2[%c0_81, %c1_82, %c0_83, %c32_84] : memref<1x18x16x96xbf16, #tpu.memory_space<vmem>>, vector<1x16x16x64xbf16>
    %71 = vector.shape_cast %70 : vector<1x16x16x64xbf16> to vector<16x16x64xbf16>
    %72 = vector.shape_cast %71 : vector<16x16x64xbf16> to vector<256x64xbf16>
    %c0_85 = arith.constant 0 : index
    %c2_86 = arith.constant 2 : index
    %c0_87 = arith.constant 0 : index
    %c32_88 = arith.constant 32 : index
    %73 = vector.load %arg2[%c0_85, %c2_86, %c0_87, %c32_88] : memref<1x18x16x96xbf16, #tpu.memory_space<vmem>>, vector<1x16x16x64xbf16>
    %74 = vector.shape_cast %73 : vector<1x16x16x64xbf16> to vector<16x16x64xbf16>
    %75 = vector.shape_cast %74 : vector<16x16x64xbf16> to vector<256x64xbf16>
    %c6 = arith.constant 6 : index
    %c0_89 = arith.constant 0 : index
    %c0_90 = arith.constant 0 : index
    %76 = vector.load %arg3[%c6, %c0_89, %c0_90] : memref<8x64x32xbf16, #tpu.memory_space<vmem>>, vector<1x64x32xbf16>
    %77 = vector.shape_cast %76 : vector<1x64x32xbf16> to vector<64x32xbf16>
    %cst_91 = arith.constant dense<0.000000e+00> : vector<256x32xf32>
    %78 = tpu.matmul %72, %77, %cst_91 {dimension_numbers = #tpu.dot_dimension_numbers<[1], [0], [0], [1], [0, 0, 1, 1], [], []>} : vector<256x64xbf16>, vector<64x32xbf16>, vector<256x32xf32> -> vector<256x32xf32>
    %c0_92 = arith.constant 0 : index
    %c0_93 = arith.constant 0 : index
    %79 = vector.load %arg6[%c0_92, %c0_93] : memref<256x32xf32, #tpu.memory_space<vmem>>, vector<256x32xf32>
    tpu.vector_store %arg6[%c0_92, %c0_93], %78 {strides = array<i32>} : memref<256x32xf32, #tpu.memory_space<vmem>>, vector<256x32xf32>,
    %c0_94 = arith.constant 0 : index
    %c0_95 = arith.constant 0 : index
    %80 = vector.load %arg6[%c0_94, %c0_95] : memref<256x32xf32, #tpu.memory_space<vmem>>, vector<256x32xf32>
    %c7 = arith.constant 7 : index
    %c0_96 = arith.constant 0 : index
    %c0_97 = arith.constant 0 : index
    %81 = vector.load %arg3[%c7, %c0_96, %c0_97] : memref<8x64x32xbf16, #tpu.memory_space<vmem>>, vector<1x64x32xbf16>
    %82 = vector.shape_cast %81 : vector<1x64x32xbf16> to vector<64x32xbf16>
    %cst_98 = arith.constant dense<0.000000e+00> : vector<256x32xf32>
    %83 = tpu.matmul %75, %82, %cst_98 {dimension_numbers = #tpu.dot_dimension_numbers<[1], [0], [0], [1], [0, 0, 1, 1], [], []>} : vector<256x64xbf16>, vector<64x32xbf16>, vector<256x32xf32> -> vector<256x32xf32>
    %84 = arith.addf %80, %83 : vector<256x32xf32>
    %c0_99 = arith.constant 0 : index
    %c0_100 = arith.constant 0 : index
    %85 = vector.load %arg6[%c0_99, %c0_100] : memref<256x32xf32, #tpu.memory_space<vmem>>, vector<256x32xf32>
    tpu.vector_store %arg6[%c0_99, %c0_100], %84 {strides = array<i32>} : memref<256x32xf32, #tpu.memory_space<vmem>>, vector<256x32xf32>,
    %c0_101 = arith.constant 0 : index
    %c0_102 = arith.constant 0 : index
    %86 = vector.load %arg6[%c0_101, %c0_102] : memref<256x32xf32, #tpu.memory_space<vmem>>, vector<256x32xf32>
    %87 = vector.broadcast %0 : vector<1x32xf32> to vector<256x32xf32>
    %88 = arith.addf %86, %87 : vector<256x32xf32>
    %89 = vector.shape_cast %88 : vector<256x32xf32> to vector<16x16x32xf32>
    %c0_103 = arith.constant 0 : index
    %c0_104 = arith.constant 0 : index
    %c1_105 = arith.constant 1 : index
    %c0_106 = arith.constant 0 : index
    %c32_107 = arith.constant 32 : index
    %90 = vector.load %arg5[%c0_103, %c0_104, %c1_105, %c0_106, %c32_107] : memref<1x16x2x16x64xf32, #tpu.memory_space<vmem>>, vector<1x16x1x16x32xf32>
    %91 = vector.shape_cast %90 : vector<1x16x1x16x32xf32> to vector<16x16x32xf32>
    %92 = vector.shape_cast %89 : vector<16x16x32xf32> to vector<1x16x1x16x32xf32>
    tpu.vector_store %arg5[%c0_103, %c0_104, %c1_105, %c0_106, %c32_107], %92 {strides = array<i32>} : memref<1x16x2x16x64xf32, #tpu.memory_space<vmem>>, vector<1x16x1x16x32xf32>,
    return
  }
  func.func @transform_0(%arg0: i32, %arg1: i32) -> (i32, i32, i32, i32) {
    %c0_i32 = arith.constant 0 : i32
    %c0_i32_0 = arith.constant 0 : i32
    %c0_i32_1 = arith.constant 0 : i32
    return %arg1, %c0_i32, %arg0, %c0_i32_0 : i32, i32, i32, i32
  }
  func.func @transform_1(%arg0: i32, %arg1: i32) -> (i32, i32, i32) {
    %c0_i32 = arith.constant 0 : i32
    %c0_i32_0 = arith.constant 0 : i32
    %c0_i32_1 = arith.constant 0 : i32
    %c0_i32_2 = arith.constant 0 : i32
    return %c0_i32, %c0_i32_0, %c0_i32_1 : i32, i32, i32
  }
  func.func @transform_2(%arg0: i32, %arg1: i32) -> (i32, i32) {
    %c0_i32 = arith.constant 0 : i32
    %c0_i32_0 = arith.constant 0 : i32
    %c0_i32_1 = arith.constant 0 : i32
    return %c0_i32, %c0_i32_0 : i32, i32
  }
  func.func @transform_3(%arg0: i32, %arg1: i32) -> (i32, i32, i32, i32, i32) {
    %c0_i32 = arith.constant 0 : i32
    %c0_i32_0 = arith.constant 0 : i32
    %c0_i32_1 = arith.constant 0 : i32
    %c0_i32_2 = arith.constant 0 : i32
    return %arg1, %c0_i32, %c0_i32_0, %arg0, %c0_i32_1 : i32, i32, i32, i32, i32
  }
}

</mosaic_0001>

<llo_original>
// kernel: tt_upsample2d_forward.1
$region0: #{tt_upsample2d_forward.1}
  #allocation0 [shape = 'u32[]', space=smem, size = 0x4, offset = 0x4, fixed_abs, tag = 'smem constant byte address 0x4 - core index']
  #allocation1 [shape = 'u32[144,128]{1,0:T(1,128)}', space=vmem, size = 0x12000, scoped, tag = 'internal scratch']
  #allocation2 [shape = 'f32[256,32]{1,0:T(8,128)}', space=vmem, size = 0x20000, scoped, tag = 'scratch operand']
  %s0 = inlined_call_operand.vmem [shape: bf16[2,18,16,96], index: 0, kind: input, shape index: {}]
  %s1 = inlined_call_operand.vmem [shape: bf16[8,64,32], index: 1, kind: input, shape index: {}]
  %s2 = inlined_call_operand.vmem [shape: f32[1,32], index: 2, kind: input, shape index: {}]
  %s3 = inlined_call_operand.vmem [shape: f32[2,16,2,16,64], index: 3, kind: output, shape index: {}]
  %s4 = sld [smem:[#allocation0]]
  $region45: #{tt_upsample2d_forward.1} parent=0
    _
  %s6 = ssub.s32 1, %s4
  %s7 = scalar_select 0, %s6, %s4
  loop: start=0, step=1, limit=4
  $region2: #{tt_upsample2d_forward.1} parent=0 // loop_pre_header
    _
  $region3: #{tt_upsample2d_forward.1} parent=0 // loop_header
    %s9 = sphi 0, %s13
    %p10 = scmp.ge.s32.totalorder %s9, 4
    %s16 = sphi 0, %s28
    %s17 = sphi 0, %s24
    %s18 = sphi 0, %s16
    %s19 = sphi 0, %s17
    %s20 = sphi 0, %s18
    %s21 = sphi 0, %s19
    %s33 = sphi 0, %s35
    %s36 = sphi 0, %s33
    %s37 = sphi 0, %s36
    %s53 = sphi 0, %s37
    %s57 = sphi 0, %s57
    %s59 = sphi 0, %s57
    %s60 = sphi 0, %s59
    %s74 = sphi 0, %s60
    %s78 = sphi 0, %s78
    %s80 = sphi 0, %s78
    %s81 = sphi 0, %s80
    %s95 = sphi 0, %s81
    %s103 = sphi 0, %s105
    %s106 = sphi 0, %s103
    %s107 = sphi 0, %s106
    %s123 = sphi 0, %s107
  $region4: #{tt_upsample2d_forward.1} parent=0 // loop_header_branch
    %12 = sbr.rel (%p10) target = $region8
  $region5: #{tt_upsample2d_forward.1} parent=0 // loop_body
    %s14 = ssub.s32 %s9, 1
    %s15 = ssub.s32 %s9, 2
    %s22 = sadd.s32 1, %s17
    %p23 = scmp.ge.s32.totalorder %s22, 2
    %s24 = scalar_select %p23, 0, %s22
    %s25 = sadd.s32 1, %s16
    %s26 = scalar_select %p23, %s25, %s16
    %p27 = scmp.ge.s32.totalorder %s26, 1
    %s28 = scalar_select %p27, 0, %s26
    %s29 = ssub.s32 %s17, %s24
    %s30 = ssub.s32 %s16, %s28
    %s31 = sor.u32 %s29, %s30
    %p32 = scmp.eq.s32.totalorder %s31, 0
    %s34 = sadd.s32 %s33, 1
    %s35 = scalar_select %p32, %s33, %s34
    %p38 = pneg %p32
    %p39 = scmp.eq.s32.totalorder %s9, 1
    %p40 = por %p38, %p39
    %p41 = scmp.ne.s32.totalorder %s33, %s36
    %p42 = scmp.eq.s32.totalorder %s9, 0
    %p43 = por %p41, %p42
    %p44 = scmp.ne.s32.totalorder %s33, %s36
    %p45 = scmp.eq.s32.totalorder %s14, 1
    %p46 = por %p44, %p45
    %p47 = scmp.ne.s32.totalorder %s36, %s37
    %p48 = scmp.eq.s32.totalorder %s14, 0
    %p49 = por %p47, %p48
    %p50 = scmp.ne.s32.totalorder %s36, %s37
    %p51 = scmp.eq.s32.totalorder %s15, 1
    %p52 = por %p50, %p51
    %p54 = scmp.ne.s32.totalorder %s37, %s53
    %p55 = scmp.eq.s32.totalorder %s15, 0
    %p56 = por %p54, %p55
    %s58 = sadd.s32 %s57, 1
    %p61 = scmp.eq.s32.totalorder %s9, 1
    %p62 = scmp.ne.s32.totalorder %s57, %s59
    %p63 = scmp.eq.s32.totalorder %s9, 0
    %p64 = por %p62, %p63
    %p65 = scmp.ne.s32.totalorder %s57, %s59
    %p66 = scmp.eq.s32.totalorder %s14, 1
    %p67 = por %p65, %p66
    %p68 = scmp.ne.s32.totalorder %s59, %s60
    %p69 = scmp.eq.s32.totalorder %s14, 0
    %p70 = por %p68, %p69
    %p71 = scmp.ne.s32.totalorder %s59, %s60
    %p72 = scmp.eq.s32.totalorder %s15, 1
    %p73 = por %p71, %p72
    %p75 = scmp.ne.s32.totalorder %s60, %s74
    %p76 = scmp.eq.s32.totalorder %s15, 0
    %p77 = por %p75, %p76
    %s79 = sadd.s32 %s78, 1
    %p82 = scmp.eq.s32.totalorder %s9, 1
    %p83 = scmp.ne.s32.totalorder %s78, %s80
    %p84 = scmp.eq.s32.totalorder %s9, 0
    %p85 = por %p83, %p84
    %p86 = scmp.ne.s32.totalorder %s78, %s80
    %p87 = scmp.eq.s32.totalorder %s14, 1
    %p88 = por %p86, %p87
    %p89 = scmp.ne.s32.totalorder %s80, %s81
    %p90 = scmp.eq.s32.totalorder %s14, 0
    %p91 = por %p89, %p90
    %p92 = scmp.ne.s32.totalorder %s80, %s81
    %p93 = scmp.eq.s32.totalorder %s15, 1
    %p94 = por %p92, %p93
    %p96 = scmp.ne.s32.totalorder %s81, %s95
    %p97 = scmp.eq.s32.totalorder %s15, 0
    %p98 = por %p96, %p97
    %s99 = ssub.s32 %s17, %s24
    %s100 = ssub.s32 %s16, %s28
    %s101 = sor.u32 %s99, %s100
    %p102 = scmp.eq.s32.totalorder %s101, 0
    %s104 = sadd.s32 %s103, 1
    %s105 = scalar_select %p102, %s103, %s104
    %p108 = pneg %p102
    %p109 = scmp.eq.s32.totalorder %s9, 1
    %p110 = por %p108, %p109
    %p111 = scmp.ne.s32.totalorder %s103, %s106
    %p112 = scmp.eq.s32.totalorder %s9, 0
    %p113 = por %p111, %p112
    %p114 = scmp.ne.s32.totalorder %s103, %s106
    %p115 = scmp.eq.s32.totalorder %s14, 1
    %p116 = por %p114, %p115
    %p117 = scmp.ne.s32.totalorder %s106, %s107
    %p118 = scmp.eq.s32.totalorder %s14, 0
    %p119 = por %p117, %p118
    %p120 = scmp.ne.s32.totalorder %s106, %s107
    %p121 = scmp.eq.s32.totalorder %s15, 1
    %p122 = por %p120, %p121
    %p124 = scmp.ne.s32.totalorder %s107, %s123
    %p125 = scmp.eq.s32.totalorder %s15, 0
    %p126 = por %p124, %p125
    %p127 = scmp.le.s32.totalorder 1, %s9
    %p128 = scmp.lt.s32.totalorder %s9, 3
    %p129 = pnand %p127, %p128
    %p130 = pneg %p129
    // Predicated region
    $region9: #{tt_upsample2d_forward.1} parent=5 // pred_check
      _
    $region10: #{tt_upsample2d_forward.1} parent=5 // pred_check_branch
      %132 = sbr.rel (%p129) target = $region12
    $region11: #{tt_upsample2d_forward.1} parent=5 // pred_region
      %s133 = ssub.s32 %s9, 1
      // Predicated region
      $region13: #{tt_upsample2d_forward.1} parent=11 // pred_check
        %p134 = pneg %p70
      $region14: #{tt_upsample2d_forward.1} parent=11 // pred_check_branch
        %136 = sbr.rel (%p134) target = $region16
      $region15: #{tt_upsample2d_forward.1} parent=11 // pred_region
        _
      $region16: #{tt_upsample2d_forward.1} parent=11 // pred_fallthru
        _
      // Predicated region
      $region17: #{tt_upsample2d_forward.1} parent=11 // pred_check
        %p137 = pneg %p91
      $region18: #{tt_upsample2d_forward.1} parent=11 // pred_check_branch
        %139 = sbr.rel (%p137) target = $region20
      $region19: #{tt_upsample2d_forward.1} parent=11 // pred_region
        _
      $region20: #{tt_upsample2d_forward.1} parent=11 // pred_fallthru
        _
    $region12: #{tt_upsample2d_forward.1} parent=5 // pred_fallthru
      _
    %p140 = scmp.lt.s32.totalorder %s9, 2
    // Predicated region
    $region21: #{tt_upsample2d_forward.1} parent=5 // pred_check
      %p141 = pneg %p140
    $region22: #{tt_upsample2d_forward.1} parent=5 // pred_check_branch
      %143 = sbr.rel (%p141) target = $region24
    $region23: #{tt_upsample2d_forward.1} parent=5 // pred_region
      // Predicated region
      $region25: #{tt_upsample2d_forward.1} parent=23 // pred_check
        %p144 = pneg %p43
      $region26: #{tt_upsample2d_forward.1} parent=23 // pred_check_branch
        %146 = sbr.rel (%p144) target = $region28
      $region27: #{tt_upsample2d_forward.1} parent=23 // pred_region
        %s147 = smul.u32 2, %s16
        %p148 = scmp.lt.s32.totalorder %s17, 1
        %s149 = scalar_select %p148, %s17, 1
        %p150 = scmp.lt.s32.totalorder %s147, 1
        %s151 = scalar_select %p150, %s147, 1
        %s152 = smul.addr %s149, 36
        %s153 = sadd.s32 %s151, %s152
        %s154 = smul.addr %s153, 4
        %s155 = scalar_lea.vmem %s0, %s154
        %s156 = smul.u32 2, %s16
      $region28: #{tt_upsample2d_forward.1} parent=23 // pred_fallthru
        _
    $region24: #{tt_upsample2d_forward.1} parent=5 // pred_fallthru
      _
    %p157 = scmp.le.s32.totalorder 1, %s9
    %p158 = scmp.lt.s32.totalorder %s9, 3
    %p159 = pnand %p157, %p158
    %p160 = pneg %p159
    // Predicated region
    $region29: #{tt_upsample2d_forward.1} parent=5 // pred_check
      _
    $region30: #{tt_upsample2d_forward.1} parent=5 // pred_check_branch
      %162 = sbr.rel (%p159) target = $region32
    $region31: #{tt_upsample2d_forward.1} parent=5 // pred_region
      %s163 = ssub.s32 %s9, 1
      %s164 = smul.u32 2, %s18
      %p165 = scmp.lt.s32.totalorder %s19, 1
      %s166 = scalar_select %p165, %s19, 1
      %p167 = scmp.lt.s32.totalorder %s164, 1
      %s168 = scalar_select %p167, %s164, 1
      %s169 = smul.addr %s166, 36
      %s170 = sadd.s32 %s168, %s169
      %s171 = smul.addr %s170, 4
      %s172 = scalar_lea.vmem %s0, %s171
      %p173 = pneg %p49
      %p174 = pneg %p46
      %p175 = pneg %p70
      %p176 = pneg %p67
      %p177 = pneg %p91
      %p178 = pneg %p88
      %p179 = pneg %p119
      %p180 = pneg %p116
      %s181 = smul.u32 2, %s18
      %p182 = scmp.lt.s32.totalorder %s19, 1
      %s183 = scalar_select %p182, %s19, 1
      %p184 = scmp.lt.s32.totalorder %s181, 1
      %s185 = scalar_select %p184, %s181, 1
      %s186 = smul.addr %s183, 64
      %s187 = sadd.s32 %s185, %s186
      %s188 = smul.addr %s187, 8
      %s189 = scalar_lea.vmem %s3, %s188
      %s190 = smul.u32 2, %s18
      %p191 = scmp.lt.s32.totalorder %s19, 1
      %s192 = scalar_select %p191, %s19, 1
      %p193 = scmp.lt.s32.totalorder %s190, 1
      %s194 = scalar_select %p193, %s190, 1
      %s195 = smul.addr %s192, 36
      %s196 = sadd.s32 %s194, %s195
      %s197 = smul.addr %s196, 4
      %s198 = scalar_lea.vmem %s0, %s197
      %s199 = smul.u32 2, %s18
      %s200 = smul.u32 2, %s18
      %p201 = scmp.lt.s32.totalorder %s19, 1
      %s202 = scalar_select %p201, %s19, 1
      %p203 = scmp.lt.s32.totalorder %s200, 1
      %s204 = scalar_select %p203, %s200, 1
      %s205 = smul.addr %s202, 64
      %s206 = sadd.s32 %s204, %s205
      %s207 = smul.addr %s206, 8
      %s208 = scalar_lea.vmem %s3, %s207
      %s209 = smul.u32 2, %s18
      %v211 = vld [vmem:[%s2] sm:$0x1]
      %v212 = vld [vmem:[%s198] sm:$0xf]
      %v213 = vld [vmem:[%s198 + $0x4] sm:$0xf]
      %v214 = vld [vmem:[%s198 + $0x8] sm:$0xf]
      %v215 = vld [vmem:[%s198 + $0xc] sm:$0xf]
      %v216 = vld [vmem:[%s198 + $0x10] sm:$0xf]
      %v217 = vld [vmem:[%s198 + $0x14] sm:$0xf]
      %v218 = vld [vmem:[%s198 + $0x18] sm:$0xf]
      %v219 = vld [vmem:[%s198 + $0x1c] sm:$0xf]
      %v220 = vld [vmem:[%s198 + $0x20] sm:$0xf]
      %v221 = vld [vmem:[%s198 + $0x24] sm:$0xf]
      %v222 = vld [vmem:[%s198 + $0x28] sm:$0xf]
      %v223 = vld [vmem:[%s198 + $0x2c] sm:$0xf]
      %v224 = vld [vmem:[%s198 + $0x30] sm:$0xf]
      %v225 = vld [vmem:[%s198 + $0x34] sm:$0xf]
      %v226 = vld [vmem:[%s198 + $0x38] sm:$0xf]
      %v227 = vld [vmem:[%s198 + $0x3c] sm:$0xf]
      %v228 = vld [vmem:[%s198 + $0x40] sm:$0xf]
      %v229 = vld [vmem:[%s198 + $0x44] sm:$0xf]
      %v230 = vld [vmem:[%s198 + $0x48] sm:$0xf]
      %v231 = vld [vmem:[%s198 + $0x4c] sm:$0xf]
      %v232 = vld [vmem:[%s198 + $0x50] sm:$0xf]
      %v233 = vld [vmem:[%s198 + $0x54] sm:$0xf]
      %v234 = vld [vmem:[%s198 + $0x58] sm:$0xf]
      %v235 = vld [vmem:[%s198 + $0x5c] sm:$0xf]
      %v236 = vld [vmem:[%s198 + $0x60] sm:$0xf]
      %v237 = vld [vmem:[%s198 + $0x64] sm:$0xf]
      %v238 = vld [vmem:[%s198 + $0x68] sm:$0xf]
      %v239 = vld [vmem:[%s198 + $0x6c] sm:$0xf]
      %v240 = vld [vmem:[%s198 + $0x70] sm:$0xf]
      %v241 = vld [vmem:[%s198 + $0x74] sm:$0xf]
      %v242 = vld [vmem:[%s198 + $0x78] sm:$0xf]
      %v243 = vld [vmem:[%s198 + $0x7c] sm:$0xf]
      %s244 = scalar_lea.vmem %s198, 8
      %v245 = vld [vmem:[%s244] sm:$0xf]
      %v246 = vld [vmem:[%s244 + $0x4] sm:$0xf]
      %v247 = vld [vmem:[%s244 + $0x8] sm:$0xf]
      %v248 = vld [vmem:[%s244 + $0xc] sm:$0xf]
      %v249 = vld [vmem:[%s244 + $0x10] sm:$0xf]
      %v250 = vld [vmem:[%s244 + $0x14] sm:$0xf]
      %v251 = vld [vmem:[%s244 + $0x18] sm:$0xf]
      %v252 = vld [vmem:[%s244 + $0x1c] sm:$0xf]
      %v253 = vld [vmem:[%s244 + $0x20] sm:$0xf]
      %v254 = vld [vmem:[%s244 + $0x24] sm:$0xf]
      %v255 = vld [vmem:[%s244 + $0x28] sm:$0xf]
      %v256 = vld [vmem:[%s244 + $0x2c] sm:$0xf]
      %v257 = vld [vmem:[%s244 + $0x30] sm:$0xf]
      %v258 = vld [vmem:[%s244 + $0x34] sm:$0xf]
      %v259 = vld [vmem:[%s244 + $0x38] sm:$0xf]
      %v260 = vld [vmem:[%s244 + $0x3c] sm:$0xf]
      %v261 = vld [vmem:[%s244 + $0x40] sm:$0xf]
      %v262 = vld [vmem:[%s244 + $0x44] sm:$0xf]
      %v263 = vld [vmem:[%s244 + $0x48] sm:$0xf]
      %v264 = vld [vmem:[%s244 + $0x4c] sm:$0xf]
      %v265 = vld [vmem:[%s244 + $0x50] sm:$0xf]
      %v266 = vld [vmem:[%s244 + $0x54] sm:$0xf]
      %v267 = vld [vmem:[%s244 + $0x58] sm:$0xf]
      %v268 = vld [vmem:[%s244 + $0x5c] sm:$0xf]
      %v269 = vld [vmem:[%s244 + $0x60] sm:$0xf]
      %v270 = vld [vmem:[%s244 + $0x64] sm:$0xf]
      %v271 = vld [vmem:[%s244 + $0x68] sm:$0xf]
      %v272 = vld [vmem:[%s244 + $0x6c] sm:$0xf]
      %v273 = vld [vmem:[%s244 + $0x70] sm:$0xf]
      %v274 = vld [vmem:[%s244 + $0x74] sm:$0xf]
      %v275 = vld [vmem:[%s244 + $0x78] sm:$0xf]
      %v276 = vld [vmem:[%s244 + $0x7c] sm:$0xf]
      %v277 = vld [vmem:[%s1] sm:$0xf]
      %v278 = vld [vmem:[%s1 + $0x4] sm:$0xf]
      %v279 = vld [vmem:[%s1 + $0x8] sm:$0xf]
      %v280 = vld [vmem:[%s1 + $0xc] sm:$0xf]
      %v281 = vld [vmem:[%s1 + $0x10] sm:$0xf]
      %v282 = vld [vmem:[%s1 + $0x14] sm:$0xf]
      %v283 = vld [vmem:[%s1 + $0x18] sm:$0xf]
      %v284 = vld [vmem:[%s1 + $0x1c] sm:$0xf]
      %v317 = vunpack.c.l.b16 %v212
      %v318 = vunpack.c.l.b16 %v213
      %v319 = vunpack.c.l.b16 %v214
      %v320 = vunpack.c.l.b16 %v215
      %v321 = vunpack.c.l.b16 %v216
      %v322 = vunpack.c.l.b16 %v217
      %v323 = vunpack.c.l.b16 %v218
      %v324 = vunpack.c.l.b16 %v219
      %v325 = vunpack.c.l.b16 %v220
      %v326 = vunpack.c.l.b16 %v221
      %v327 = vunpack.c.l.b16 %v222
      %v328 = vunpack.c.l.b16 %v223
      %v329 = vunpack.c.l.b16 %v224
      %v330 = vunpack.c.l.b16 %v225
      %v331 = vunpack.c.l.b16 %v226
      %v332 = vunpack.c.l.b16 %v227
      %v333 = vunpack.c.l.b16 %v228
      %v334 = vunpack.c.l.b16 %v229
      %v335 = vunpack.c.l.b16 %v230
      %v336 = vunpack.c.l.b16 %v231
      %v337 = vunpack.c.l.b16 %v232
      %v338 = vunpack.c.l.b16 %v233
      %v339 = vunpack.c.l.b16 %v234
      %v340 = vunpack.c.l.b16 %v235
      %v341 = vunpack.c.l.b16 %v236
      %v342 = vunpack.c.l.b16 %v237
      %v343 = vunpack.c.l.b16 %v238
      %v344 = vunpack.c.l.b16 %v239
      %v345 = vunpack.c.l.b16 %v240
      %v346 = vunpack.c.l.b16 %v241
      %v347 = vunpack.c.l.b16 %v242
      %v348 = vunpack.c.l.b16 %v243
      %v349 = vpack.c.b16 %v318, %v317
      %v350 = vpack.c.b16 %v320, %v319
      %v351 = vpack.c.b16 %v322, %v321
      %v352 = vpack.c.b16 %v324, %v323
      %v353 = vpack.c.b16 %v326, %v325
      %v354 = vpack.c.b16 %v328, %v327
      %v355 = vpack.c.b16 %v330, %v329
      %v356 = vpack.c.b16 %v332, %v331
      %v357 = vpack.c.b16 %v334, %v333
      %v358 = vpack.c.b16 %v336, %v335
      %v359 = vpack.c.b16 %v338, %v337
      %v360 = vpack.c.b16 %v340, %v339
      %v361 = vpack.c.b16 %v342, %v341
      %v362 = vpack.c.b16 %v344, %v343
      %v363 = vpack.c.b16 %v346, %v345
      %v364 = vpack.c.b16 %v348, %v347
      %v373 = vunpack.c.l.b16 %v277
      %v374 = vunpack.c.l.b16 %v278
      %v375 = vunpack.c.l.b16 %v279
      %v376 = vunpack.c.l.b16 %v280
      %v377 = vunpack.c.l.b16 %v281
      %v378 = vunpack.c.l.b16 %v282
      %v379 = vunpack.c.l.b16 %v283
      %v380 = vunpack.c.l.b16 %v284
      %v381 = vpack.c.b16 %v374, %v373
      %v382 = vpack.c.b16 %v376, %v375
      %v383 = vpack.c.b16 %v378, %v377
      %v384 = vpack.c.b16 %v380, %v379
      %vm389 = vcmask 523264
      %v391 = vsel %vm389, %v349, 0
      %v394 = vsel %vm389, %v350, 0
      %v397 = vsel %vm389, %v351, 0
      %v400 = vsel %vm389, %v352, 0
      %v403 = vsel %vm389, %v353, 0
      %v406 = vsel %vm389, %v354, 0
      %v409 = vsel %vm389, %v355, 0
      %v412 = vsel %vm389, %v356, 0
      %v415 = vsel %vm389, %v357, 0
      %v418 = vsel %vm389, %v358, 0
      %v421 = vsel %vm389, %v359, 0
      %v424 = vsel %vm389, %v360, 0
      %v427 = vsel %vm389, %v361, 0
      %v430 = vsel %vm389, %v362, 0
      %v433 = vsel %vm389, %v363, 0
      %v436 = vsel %vm389, %v364, 0
      %438 = vmatprep.subr.bf16.mxu0 0
      %439 = vmatpush1.bf16.msra.mxu0 %v381
      %440 = vmatprep.subr.bf16.mxu0 0
      %441 = vmatpush1.bf16.msra.mxu0 %v382
      %442 = vmatprep.subr.bf16.mxu0 0
      %443 = vmatpush1.bf16.msra.mxu0 %v383
      %444 = vmatprep.subr.bf16.mxu0 0
      %445 = vmatpush1.bf16.msra.mxu0 %v384
      %446 = vmatprep.subr.bf16.mxu0 0
      %447 = vmatpush1.bf16.msra.mxu0 0
      %448 = vmatprep.subr.bf16.mxu0 0
      %449 = vmatpush1.bf16.msra.mxu0 0
      %450 = vmatprep.subr.bf16.mxu0 0
      %451 = vmatpush1.bf16.msra.mxu0 0
      %452 = vmatprep.subr.bf16.mxu0 0
      %453 = vmatpush1.bf16.msra.mxu0 0
      %454 = vmatprep.subr.bf16.mxu0 0
      %455 = vmatpush1.bf16.msra.mxu0 0
      %456 = vmatprep.subr.bf16.mxu0 0
      %457 = vmatpush1.bf16.msra.mxu0 0
      %458 = vmatprep.subr.bf16.mxu0 0
      %459 = vmatpush1.bf16.msra.mxu0 0
      %460 = vmatprep.subr.bf16.mxu0 0
      %461 = vmatpush1.bf16.msra.mxu0 0
      %462 = vmatprep.subr.bf16.mxu0 0
      %463 = vmatpush1.bf16.msra.mxu0 0
      %464 = vmatprep.subr.bf16.mxu0 0
      %465 = vmatpush1.bf16.msra.mxu0 0
      %466 = vmatprep.subr.bf16.mxu0 0
      %467 = vmatpush1.bf16.msra.mxu0 0
      %468 = vmatprep.subr.bf16.mxu0 0
      %469 = vmatpush1.bf16.msra.mxu0 0
      %470 = vmatprep.mubr.bf16.mxu0 0
      %471 = vmatmul.mubr.bf16.gmra.mrb[0].mxu0 %v391
      %v472 = vpop.f32.mrb[0].mxu0
      %v473 = vadd.f32 0.0, %v472
      %v474 = vpop.f32.mrb[0].mxu0
      %v475 = vpop.f32.mrb[0].mxu0
      %v476 = vadd.f32 0.0, %v475
      %v477 = vpop.f32.mrb[0].mxu0
      %478 = vmatprep.mubr.bf16.mxu0 0
      %479 = vmatmul.mubr.bf16.gmra.mrb[0].mxu0 %v394
      %v480 = vpop.f32.mrb[0].mxu0
      %v481 = vadd.f32 0.0, %v480
      %v482 = vpop.f32.mrb[0].mxu0
      %v483 = vpop.f32.mrb[0].mxu0
      %v484 = vadd.f32 0.0, %v483
      %v485 = vpop.f32.mrb[0].mxu0
      %486 = vmatprep.mubr.bf16.mxu0 0
      %487 = vmatmul.mubr.bf16.gmra.mrb[0].mxu0 %v397
      %v488 = vpop.f32.mrb[0].mxu0
      %v489 = vadd.f32 0.0, %v488
      %v490 = vpop.f32.mrb[0].mxu0
      %v491 = vpop.f32.mrb[0].mxu0
      %v492 = vadd.f32 0.0, %v491
      %v493 = vpop.f32.mrb[0].mxu0
      %494 = vmatprep.mubr.bf16.mxu0 0
      %495 = vmatmul.mubr.bf16.gmra.mrb[0].mxu0 %v400
      %v496 = vpop.f32.mrb[0].mxu0
      %v497 = vadd.f32 0.0, %v496
      %v498 = vpop.f32.mrb[0].mxu0
      %v499 = vpop.f32.mrb[0].mxu0
      %v500 = vadd.f32 0.0, %v499
      %v501 = vpop.f32.mrb[0].mxu0
      %502 = vmatprep.mubr.bf16.mxu0 0
      %503 = vmatmul.mubr.bf16.gmra.mrb[0].mxu0 %v403
      %v504 = vpop.f32.mrb[0].mxu0
      %v505 = vadd.f32 0.0, %v504
      %v506 = vpop.f32.mrb[0].mxu0
      %v507 = vpop.f32.mrb[0].mxu0
      %v508 = vadd.f32 0.0, %v507
      %v509 = vpop.f32.mrb[0].mxu0
      %510 = vmatprep.mubr.bf16.mxu0 0
      %511 = vmatmul.mubr.bf16.gmra.mrb[0].mxu0 %v406
      %v512 = vpop.f32.mrb[0].mxu0
      %v513 = vadd.f32 0.0, %v512
      %v514 = vpop.f32.mrb[0].mxu0
      %v515 = vpop.f32.mrb[0].mxu0
      %v516 = vadd.f32 0.0, %v515
      %v517 = vpop.f32.mrb[0].mxu0
      %518 = vmatprep.mubr.bf16.mxu0 0
      %519 = vmatmul.mubr.bf16.gmra.mrb[0].mxu0 %v409
      %v520 = vpop.f32.mrb[0].mxu0
      %v521 = vadd.f32 0.0, %v520
      %v522 = vpop.f32.mrb[0].mxu0
      %v523 = vpop.f32.mrb[0].mxu0
      %v524 = vadd.f32 0.0, %v523
      %v525 = vpop.f32.mrb[0].mxu0
      %526 = vmatprep.mubr.bf16.mxu0 0
      %527 = vmatmul.mubr.bf16.gmra.mrb[0].mxu0 %v412
      %v528 = vpop.f32.mrb[0].mxu0
      %v529 = vadd.f32 0.0, %v528
      %v530 = vpop.f32.mrb[0].mxu0
      %v531 = vpop.f32.mrb[0].mxu0
      %v532 = vadd.f32 0.0, %v531
      %v533 = vpop.f32.mrb[0].mxu0
      %534 = vmatprep.mubr.bf16.mxu0 0
      %535 = vmatmul.mubr.bf16.gmra.mrb[0].mxu0 %v415
      %v536 = vpop.f32.mrb[0].mxu0
      %v537 = vadd.f32 0.0, %v536
      %v538 = vpop.f32.mrb[0].mxu0
      %v539 = vpop.f32.mrb[0].mxu0
      %v540 = vadd.f32 0.0, %v539
      %v541 = vpop.f32.mrb[0].mxu0
      %542 = vmatprep.mubr.bf16.mxu0 0
      %543 = vmatmul.mubr.bf16.gmra.mrb[0].mxu0 %v418
      %v544 = vpop.f32.mrb[0].mxu0
      %v545 = vadd.f32 0.0, %v544
      %v546 = vpop.f32.mrb[0].mxu0
      %v547 = vpop.f32.mrb[0].mxu0
      %v548 = vadd.f32 0.0, %v547
      %v549 = vpop.f32.mrb[0].mxu0
      %550 = vmatprep.mubr.bf16.mxu0 0
      %551 = vmatmul.mubr.bf16.gmra.mrb[0].mxu0 %v421
      %v552 = vpop.f32.mrb[0].mxu0
      %v553 = vadd.f32 0.0, %v552
      %v554 = vpop.f32.mrb[0].mxu0
      %v555 = vpop.f32.mrb[0].mxu0
      %v556 = vadd.f32 0.0, %v555
      %v557 = vpop.f32.mrb[0].mxu0
      %558 = vmatprep.mubr.bf16.mxu0 0
      %559 = vmatmul.mubr.bf16.gmra.mrb[0].mxu0 %v424
      %v560 = vpop.f32.mrb[0].mxu0
      %v561 = vadd.f32 0.0, %v560
      %v562 = vpop.f32.mrb[0].mxu0
      %v563 = vpop.f32.mrb[0].mxu0
      %v564 = vadd.f32 0.0, %v563
      %v565 = vpop.f32.mrb[0].mxu0
      %566 = vmatprep.mubr.bf16.mxu0 0
      %567 = vmatmul.mubr.bf16.gmra.mrb[0].mxu0 %v427
      %v568 = vpop.f32.mrb[0].mxu0
      %v569 = vadd.f32 0.0, %v568
      %v570 = vpop.f32.mrb[0].mxu0
      %v571 = vpop.f32.mrb[0].mxu0
      %v572 = vadd.f32 0.0, %v571
      %v573 = vpop.f32.mrb[0].mxu0
      %574 = vmatprep.mubr.bf16.mxu0 0
      %575 = vmatmul.mubr.bf16.gmra.mrb[0].mxu0 %v430
      %v576 = vpop.f32.mrb[0].mxu0
      %v577 = vadd.f32 0.0, %v576
      %v578 = vpop.f32.mrb[0].mxu0
      %v579 = vpop.f32.mrb[0].mxu0
      %v580 = vadd.f32 0.0, %v579
      %v581 = vpop.f32.mrb[0].mxu0
      %582 = vmatprep.mubr.bf16.mxu0 0
      %583 = vmatmul.mubr.bf16.gmra.mrb[0].mxu0 %v433
      %v584 = vpop.f32.mrb[0].mxu0
      %v585 = vadd.f32 0.0, %v584
      %v586 = vpop.f32.mrb[0].mxu0
      %v587 = vpop.f32.mrb[0].mxu0
      %v588 = vadd.f32 0.0, %v587
      %v589 = vpop.f32.mrb[0].mxu0
      %590 = vmatprep.mubr.bf16.mxu0 0
      %591 = vmatmul.mubr.bf16.gmra.mrb[0].mxu0 %v436
      %v592 = vpop.f32.mrb[0].mxu0
      %v593 = vadd.f32 0.0, %v592
      %v594 = vpop.f32.mrb[0].mxu0
      %v595 = vpop.f32.mrb[0].mxu0
      %v596 = vadd.f32 0.0, %v595
      %v597 = vpop.f32.mrb[0].mxu0
      %598 = vdwg.mxu0
      %vm599 = vcmask 261120
      %600 = vst.msk [vmem:[#allocation2] sm:$0xff] %vm599, %v473
      %601 = vst.msk [vmem:[#allocation2 + $0x8] sm:$0xff] %vm599, %v476
      %602 = vst.msk [vmem:[#allocation2 + $0x10] sm:$0xff] %vm599, %v481
      %603 = vst.msk [vmem:[#allocation2 + $0x18] sm:$0xff] %vm599, %v484
      %604 = vst.msk [vmem:[#allocation2 + $0x20] sm:$0xff] %vm599, %v489
      %605 = vst.msk [vmem:[#allocation2 + $0x28] sm:$0xff] %vm599, %v492
      %606 = vst.msk [vmem:[#allocation2 + $0x30] sm:$0xff] %vm599, %v497
      %607 = vst.msk [vmem:[#allocation2 + $0x38] sm:$0xff] %vm599, %v500
      %608 = vst.msk [vmem:[#allocation2 + $0x40] sm:$0xff] %vm599, %v505
      %609 = vst.msk [vmem:[#allocation2 + $0x48] sm:$0xff] %vm599, %v508
      %610 = vst.msk [vmem:[#allocation2 + $0x50] sm:$0xff] %vm599, %v513
      %611 = vst.msk [vmem:[#allocation2 + $0x58] sm:$0xff] %vm599, %v516
      %612 = vst.msk [vmem:[#allocation2 + $0x60] sm:$0xff] %vm599, %v521
      %613 = vst.msk [vmem:[#allocation2 + $0x68] sm:$0xff] %vm599, %v524
      %614 = vst.msk [vmem:[#allocation2 + $0x70] sm:$0xff] %vm599, %v529
      %615 = vst.msk [vmem:[#allocation2 + $0x78] sm:$0xff] %vm599, %v532
      %616 = vst.msk [vmem:[#allocation2 + $0x80] sm:$0xff] %vm599, %v537
      %617 = vst.msk [vmem:[#allocation2 + $0x88] sm:$0xff] %vm599, %v540
      %618 = vst.msk [vmem:[#allocation2 + $0x90] sm:$0xff] %vm599, %v545
      %619 = vst.msk [vmem:[#allocation2 + $0x98] sm:$0xff] %vm599, %v548
      %620 = vst.msk [vmem:[#allocation2 + $0xa0] sm:$0xff] %vm599, %v553
      %621 = vst.msk [vmem:[#allocation2 + $0xa8] sm:$0xff] %vm599, %v556
      %622 = vst.msk [vmem:[#allocation2 + $0xb0] sm:$0xff] %vm599, %v561
      %623 = vst.msk [vmem:[#allocation2 + $0xb8] sm:$0xff] %vm599, %v564
      %624 = vst.msk [vmem:[#allocation2 + $0xc0] sm:$0xff] %vm599, %v569
      %625 = vst.msk [vmem:[#allocation2 + $0xc8] sm:$0xff] %vm599, %v572
      %626 = vst.msk [vmem:[#allocation2 + $0xd0] sm:$0xff] %vm599, %v577
      %627 = vst.msk [vmem:[#allocation2 + $0xd8] sm:$0xff] %vm599, %v580
      %628 = vst.msk [vmem:[#allocation2 + $0xe0] sm:$0xff] %vm599, %v585
      %629 = vst.msk [vmem:[#allocation2 + $0xe8] sm:$0xff] %vm599, %v588
      %630 = vst.msk [vmem:[#allocation2 + $0xf0] sm:$0xff] %vm599, %v593
      %631 = vst.msk [vmem:[#allocation2 + $0xf8] sm:$0xff] %vm599, %v596
      %v632 = vld [vmem:[#allocation2] sm:$0xff]
      %v633 = vld [vmem:[#allocation2 + $0x8] sm:$0xff]
      %v634 = vld [vmem:[#allocation2 + $0x10] sm:$0xff]
      %v635 = vld [vmem:[#allocation2 + $0x18] sm:$0xff]
      %v636 = vld [vmem:[#allocation2 + $0x20] sm:$0xff]
      %v637 = vld [vmem:[#allocation2 + $0x28] sm:$0xff]
      %v638 = vld [vmem:[#allocation2 + $0x30] sm:$0xff]
      %v639 = vld [vmem:[#allocation2 + $0x38] sm:$0xff]
      %v640 = vld [vmem:[#allocation2 + $0x40] sm:$0xff]
      %v641 = vld [vmem:[#allocation2 + $0x48] sm:$0xff]
      %v642 = vld [vmem:[#allocation2 + $0x50] sm:$0xff]
      %v643 = vld [vmem:[#allocation2 + $0x58] sm:$0xff]
      %v644 = vld [vmem:[#allocation2 + $0x60] sm:$0xff]
      %v645 = vld [vmem:[#allocation2 + $0x68] sm:$0xff]
      %v646 = vld [vmem:[#allocation2 + $0x70] sm:$0xff]
      %v647 = vld [vmem:[#allocation2 + $0x78] sm:$0xff]
      %v648 = vld [vmem:[#allocation2 + $0x80] sm:$0xff]
      %v649 = vld [vmem:[#allocation2 + $0x88] sm:$0xff]
      %v650 = vld [vmem:[#allocation2 + $0x90] sm:$0xff]
      %v651 = vld [vmem:[#allocation2 + $0x98] sm:$0xff]
      %v652 = vld [vmem:[#allocation2 + $0xa0] sm:$0xff]
      %v653 = vld [vmem:[#allocation2 + $0xa8] sm:$0xff]
      %v654 = vld [vmem:[#allocation2 + $0xb0] sm:$0xff]
      %v655 = vld [vmem:[#allocation2 + $0xb8] sm:$0xff]
      %v656 = vld [vmem:[#allocation2 + $0xc0] sm:$0xff]
      %v657 = vld [vmem:[#allocation2 + $0xc8] sm:$0xff]
      %v658 = vld [vmem:[#allocation2 + $0xd0] sm:$0xff]
      %v659 = vld [vmem:[#allocation2 + $0xd8] sm:$0xff]
      %v660 = vld [vmem:[#allocation2 + $0xe0] sm:$0xff]
      %v661 = vld [vmem:[#allocation2 + $0xe8] sm:$0xff]
      %v662 = vld [vmem:[#allocation2 + $0xf0] sm:$0xff]
      %v663 = vld [vmem:[#allocation2 + $0xf8] sm:$0xff]
      %s664 = scalar_lea.vmem %s1, 32
      %v665 = vld [vmem:[%s664] sm:$0xf]
      %v666 = vld [vmem:[%s664 + $0x4] sm:$0xf]
      %v667 = vld [vmem:[%s664 + $0x8] sm:$0xf]
      %v668 = vld [vmem:[%s664 + $0xc] sm:$0xf]
      %v669 = vld [vmem:[%s664 + $0x10] sm:$0xf]
      %v670 = vld [vmem:[%s664 + $0x14] sm:$0xf]
      %v671 = vld [vmem:[%s664 + $0x18] sm:$0xf]
      %v672 = vld [vmem:[%s664 + $0x1c] sm:$0xf]
      %v705 = vunpack.c.l.b16 %v245
      %v706 = vunpack.c.l.b16 %v246
      %v707 = vunpack.c.l.b16 %v247
      %v708 = vunpack.c.l.b16 %v248
      %v709 = vunpack.c.l.b16 %v249
      %v710 = vunpack.c.l.b16 %v250
      %v711 = vunpack.c.l.b16 %v251
      %v712 = vunpack.c.l.b16 %v252
      %v713 = vunpack.c.l.b16 %v253
      %v714 = vunpack.c.l.b16 %v254
      %v715 = vunpack.c.l.b16 %v255
      %v716 = vunpack.c.l.b16 %v256
      %v717 = vunpack.c.l.b16 %v257
      %v718 = vunpack.c.l.b16 %v258
      %v719 = vunpack.c.l.b16 %v259
      %v720 = vunpack.c.l.b16 %v260
      %v721 = vunpack.c.l.b16 %v261
      %v722 = vunpack.c.l.b16 %v262
      %v723 = vunpack.c.l.b16 %v263
      %v724 = vunpack.c.l.b16 %v264
      %v725 = vunpack.c.l.b16 %v265
      %v726 = vunpack.c.l.b16 %v266
      %v727 = vunpack.c.l.b16 %v267
      %v728 = vunpack.c.l.b16 %v268
      %v729 = vunpack.c.l.b16 %v269
      %v730 = vunpack.c.l.b16 %v270
      %v731 = vunpack.c.l.b16 %v271
      %v732 = vunpack.c.l.b16 %v272
      %v733 = vunpack.c.l.b16 %v273
      %v734 = vunpack.c.l.b16 %v274
      %v735 = vunpack.c.l.b16 %v275
      %v736 = vunpack.c.l.b16 %v276
      %v737 = vpack.c.b16 %v706, %v705
      %v738 = vpack.c.b16 %v708, %v707
      %v739 = vpack.c.b16 %v710, %v709
      %v740 = vpack.c.b16 %v712, %v711
      %v741 = vpack.c.b16 %v714, %v713
      %v742 = vpack.c.b16 %v716, %v715
      %v743 = vpack.c.b16 %v718, %v717
      %v744 = vpack.c.b16 %v720, %v719
      %v745 = vpack.c.b16 %v722, %v721
      %v746 = vpack.c.b16 %v724, %v723
      %v747 = vpack.c.b16 %v726, %v725
      %v748 = vpack.c.b16 %v728, %v727
      %v749 = vpack.c.b16 %v730, %v729
      %v750 = vpack.c.b16 %v732, %v731
      %v751 = vpack.c.b16 %v734, %v733
      %v752 = vpack.c.b16 %v736, %v735
      %v761 = vunpack.c.l.b16 %v665
      %v762 = vunpack.c.l.b16 %v666
      %v763 = vunpack.c.l.b16 %v667
      %v764 = vunpack.c.l.b16 %v668
      %v765 = vunpack.c.l.b16 %v669
      %v766 = vunpack.c.l.b16 %v670
      %v767 = vunpack.c.l.b16 %v671
      %v768 = vunpack.c.l.b16 %v672
      %v769 = vpack.c.b16 %v762, %v761
      %v770 = vpack.c.b16 %v764, %v763
      %v771 = vpack.c.b16 %v766, %v765
      %v772 = vpack.c.b16 %v768, %v767
      %v778 = vsel %vm389, %v737, 0
      %v781 = vsel %vm389, %v738, 0
      %v784 = vsel %vm389, %v739, 0
      %v787 = vsel %vm389, %v740, 0
      %v790 = vsel %vm389, %v741, 0
      %v793 = vsel %vm389, %v742, 0
      %v796 = vsel %vm389, %v743, 0
      %v799 = vsel %vm389, %v744, 0
      %v802 = vsel %vm389, %v745, 0
      %v805 = vsel %vm389, %v746, 0
      %v808 = vsel %vm389, %v747, 0
      %v811 = vsel %vm389, %v748, 0
      %v814 = vsel %vm389, %v749, 0
      %v817 = vsel %vm389, %v750, 0
      %v820 = vsel %vm389, %v751, 0
      %v823 = vsel %vm389, %v752, 0
      %825 = vmatprep.subr.bf16.mxu0 0
      %826 = vmatpush1.bf16.msra.mxu0 %v769
      %827 = vmatprep.subr.bf16.mxu0 0
      %828 = vmatpush1.bf16.msra.mxu0 %v770
      %829 = vmatprep.subr.bf16.mxu0 0
      %830 = vmatpush1.bf16.msra.mxu0 %v771
      %831 = vmatprep.subr.bf16.mxu0 0
      %832 = vmatpush1.bf16.msra.mxu0 %v772
      %833 = vmatprep.subr.bf16.mxu0 0
      %834 = vmatpush1.bf16.msra.mxu0 0
      %835 = vmatprep.subr.bf16.mxu0 0
      %836 = vmatpush1.bf16.msra.mxu0 0
      %837 = vmatprep.subr.bf16.mxu0 0
      %838 = vmatpush1.bf16.msra.mxu0 0
      %839 = vmatprep.subr.bf16.mxu0 0
      %840 = vmatpush1.bf16.msra.mxu0 0
      %841 = vmatprep.subr.bf16.mxu0 0
      %842 = vmatpush1.bf16.msra.mxu0 0
      %843 = vmatprep.subr.bf16.mxu0 0
      %844 = vmatpush1.bf16.msra.mxu0 0
      %845 = vmatprep.subr.bf16.mxu0 0
      %846 = vmatpush1.bf16.msra.mxu0 0
      %847 = vmatprep.subr.bf16.mxu0 0
      %848 = vmatpush1.bf16.msra.mxu0 0
      %849 = vmatprep.subr.bf16.mxu0 0
      %850 = vmatpush1.bf16.msra.mxu0 0
      %851 = vmatprep.subr.bf16.mxu0 0
      %852 = vmatpush1.bf16.msra.mxu0 0
      %853 = vmatprep.subr.bf16.mxu0 0
      %854 = vmatpush1.bf16.msra.mxu0 0
      %855 = vmatprep.subr.bf16.mxu0 0
      %856 = vmatpush1.bf16.msra.mxu0 0
      %857 = vmatprep.mubr.bf16.mxu0 0
      %858 = vmatmul.mubr.bf16.gmra.mrb[0].mxu0 %v778
      %v859 = vpop.f32.mrb[0].mxu0
      %v860 = vadd.f32 0.0, %v859
      %v861 = vpop.f32.mrb[0].mxu0
      %v862 = vpop.f32.mrb[0].mxu0
      %v863 = vadd.f32 0.0, %v862
      %v864 = vpop.f32.mrb[0].mxu0
      %865 = vmatprep.mubr.bf16.mxu0 0
      %866 = vmatmul.mubr.bf16.gmra.mrb[0].mxu0 %v781
      %v867 = vpop.f32.mrb[0].mxu0
      %v868 = vadd.f32 0.0, %v867
      %v869 = vpop.f32.mrb[0].mxu0
      %v870 = vpop.f32.mrb[0].mxu0
      %v871 = vadd.f32 0.0, %v870
      %v872 = vpop.f32.mrb[0].mxu0
      %873 = vmatprep.mubr.bf16.mxu0 0
      %874 = vmatmul.mubr.bf16.gmra.mrb[0].mxu0 %v784
      %v875 = vpop.f32.mrb[0].mxu0
      %v876 = vadd.f32 0.0, %v875
      %v877 = vpop.f32.mrb[0].mxu0
      %v878 = vpop.f32.mrb[0].mxu0
      %v879 = vadd.f32 0.0, %v878
      %v880 = vpop.f32.mrb[0].mxu0
      %881 = vmatprep.mubr.bf16.mxu0 0
      %882 = vmatmul.mubr.bf16.gmra.mrb[0].mxu0 %v787
      %v883 = vpop.f32.mrb[0].mxu0
      %v884 = vadd.f32 0.0, %v883
      %v885 = vpop.f32.mrb[0].mxu0
      %v886 = vpop.f32.mrb[0].mxu0
      %v887 = vadd.f32 0.0, %v886
      %v888 = vpop.f32.mrb[0].mxu0
      %889 = vmatprep.mubr.bf16.mxu0 0
      %890 = vmatmul.mubr.bf16.gmra.mrb[0].mxu0 %v790
      %v891 = vpop.f32.mrb[0].mxu0
      %v892 = vadd.f32 0.0, %v891
      %v893 = vpop.f32.mrb[0].mxu0
      %v894 = vpop.f32.mrb[0].mxu0
      %v895 = vadd.f32 0.0, %v894
      %v896 = vpop.f32.mrb[0].mxu0
      %897 = vmatprep.mubr.bf16.mxu0 0
      %898 = vmatmul.mubr.bf16.gmra.mrb[0].mxu0 %v793
      %v899 = vpop.f32.mrb[0].mxu0
      %v900 = vadd.f32 0.0, %v899
      %v901 = vpop.f32.mrb[0].mxu0
      %v902 = vpop.f32.mrb[0].mxu0
      %v903 = vadd.f32 0.0, %v902
      %v904 = vpop.f32.mrb[0].mxu0
      %905 = vmatprep.mubr.bf16.mxu0 0
      %906 = vmatmul.mubr.bf16.gmra.mrb[0].mxu0 %v796
      %v907 = vpop.f32.mrb[0].mxu0
      %v908 = vadd.f32 0.0, %v907
      %v909 = vpop.f32.mrb[0].mxu0
      %v910 = vpop.f32.mrb[0].mxu0
      %v911 = vadd.f32 0.0, %v910
      %v912 = vpop.f32.mrb[0].mxu0
      %913 = vmatprep.mubr.bf16.mxu0 0
      %914 = vmatmul.mubr.bf16.gmra.mrb[0].mxu0 %v799
      %v915 = vpop.f32.mrb[0].mxu0
      %v916 = vadd.f32 0.0, %v915
      %v917 = vpop.f32.mrb[0].mxu0
      %v918 = vpop.f32.mrb[0].mxu0
      %v919 = vadd.f32 0.0, %v918
      %v920 = vpop.f32.mrb[0].mxu0
      %921 = vmatprep.mubr.bf16.mxu0 0
      %922 = vmatmul.mubr.bf16.gmra.mrb[0].mxu0 %v802
      %v923 = vpop.f32.mrb[0].mxu0
      %v924 = vadd.f32 0.0, %v923
      %v925 = vpop.f32.mrb[0].mxu0
      %v926 = vpop.f32.mrb[0].mxu0
      %v927 = vadd.f32 0.0, %v926
      %v928 = vpop.f32.mrb[0].mxu0
      %929 = vmatprep.mubr.bf16.mxu0 0
      %930 = vmatmul.mubr.bf16.gmra.mrb[0].mxu0 %v805
      %v931 = vpop.f32.mrb[0].mxu0
      %v932 = vadd.f32 0.0, %v931
      %v933 = vpop.f32.mrb[0].mxu0
      %v934 = vpop.f32.mrb[0].mxu0
      %v935 = vadd.f32 0.0, %v934
      %v936 = vpop.f32.mrb[0].mxu0
      %937 = vmatprep.mubr.bf16.mxu0 0
      %938 = vmatmul.mubr.bf16.gmra.mrb[0].mxu0 %v808
      %v939 = vpop.f32.mrb[0].mxu0
      %v940 = vadd.f32 0.0, %v939
      %v941 = vpop.f32.mrb[0].mxu0
      %v942 = vpop.f32.mrb[0].mxu0
      %v943 = vadd.f32 0.0, %v942
      %v944 = vpop.f32.mrb[0].mxu0
      %945 = vmatprep.mubr.bf16.mxu0 0
      %946 = vmatmul.mubr.bf16.gmra.mrb[0].mxu0 %v811
      %v947 = vpop.f32.mrb[0].mxu0
      %v948 = vadd.f32 0.0, %v947
      %v949 = vpop.f32.mrb[0].mxu0
      %v950 = vpop.f32.mrb[0].mxu0
      %v951 = vadd.f32 0.0, %v950
      %v952 = vpop.f32.mrb[0].mxu0
      %953 = vmatprep.mubr.bf16.mxu0 0
      %954 = vmatmul.mubr.bf16.gmra.mrb[0].mxu0 %v814
      %v955 = vpop.f32.mrb[0].mxu0
      %v956 = vadd.f32 0.0, %v955
      %v957 = vpop.f32.mrb[0].mxu0
      %v958 = vpop.f32.mrb[0].mxu0
      %v959 = vadd.f32 0.0, %v958
      %v960 = vpop.f32.mrb[0].mxu0
      %961 = vmatprep.mubr.bf16.mxu0 0
      %962 = vmatmul.mubr.bf16.gmra.mrb[0].mxu0 %v817
      %v963 = vpop.f32.mrb[0].mxu0
      %v964 = vadd.f32 0.0, %v963
      %v965 = vpop.f32.mrb[0].mxu0
      %v966 = vpop.f32.mrb[0].mxu0
      %v967 = vadd.f32 0.0, %v966
      %v968 = vpop.f32.mrb[0].mxu0
      %969 = vmatprep.mubr.bf16.mxu0 0
      %970 = vmatmul.mubr.bf16.gmra.mrb[0].mxu0 %v820
      %v971 = vpop.f32.mrb[0].mxu0
      %v972 = vadd.f32 0.0, %v971
      %v973 = vpop.f32.mrb[0].mxu0
      %v974 = vpop.f32.mrb[0].mxu0
      %v975 = vadd.f32 0.0, %v974
      %v976 = vpop.f32.mrb[0].mxu0
      %977 = vmatprep.mubr.bf16.mxu0 0
      %978 = vmatmul.mubr.bf16.gmra.mrb[0].mxu0 %v823
      %v979 = vpop.f32.mrb[0].mxu0
      %v980 = vadd.f32 0.0, %v979
      %v981 = vpop.f32.mrb[0].mxu0
      %v982 = vpop.f32.mrb[0].mxu0
      %v983 = vadd.f32 0.0, %v982
      %v984 = vpop.f32.mrb[0].mxu0
      %985 = vdwg.mxu0
      %v986 = vadd.f32 %v632, %v860
      %v987 = vadd.f32 %v633, %v863
      %v988 = vadd.f32 %v634, %v868
      %v989 = vadd.f32 %v635, %v871
      %v990 = vadd.f32 %v636, %v876
      %v991 = vadd.f32 %v637, %v879
      %v992 = vadd.f32 %v638, %v884
      %v993 = vadd.f32 %v639, %v887
      %v994 = vadd.f32 %v640, %v892
      %v995 = vadd.f32 %v641, %v895
      %v996 = vadd.f32 %v642, %v900
      %v997 = vadd.f32 %v643, %v903
      %v998 = vadd.f32 %v644, %v908
      %v999 = vadd.f32 %v645, %v911
      %v1000 = vadd.f32 %v646, %v916
      %v1001 = vadd.f32 %v647, %v919
      %v1002 = vadd.f32 %v648, %v924
      %v1003 = vadd.f32 %v649, %v927
      %v1004 = vadd.f32 %v650, %v932
      %v1005 = vadd.f32 %v651, %v935
      %v1006 = vadd.f32 %v652, %v940
      %v1007 = vadd.f32 %v653, %v943
      %v1008 = vadd.f32 %v654, %v948
      %v1009 = vadd.f32 %v655, %v951
      %v1010 = vadd.f32 %v656, %v956
      %v1011 = vadd.f32 %v657, %v959
      %v1012 = vadd.f32 %v658, %v964
      %v1013 = vadd.f32 %v659, %v967
      %v1014 = vadd.f32 %v660, %v972
      %v1015 = vadd.f32 %v661, %v975
      %v1016 = vadd.f32 %v662, %v980
      %v1017 = vadd.f32 %v663, %v983
      %1018 = vst.msk [vmem:[#allocation2] sm:$0xff] %vm599, %v986
      %1019 = vst.msk [vmem:[#allocation2 + $0x8] sm:$0xff] %vm599, %v987
      %1020 = vst.msk [vmem:[#allocation2 + $0x10] sm:$0xff] %vm599, %v988
      %1021 = vst.msk [vmem:[#allocation2 + $0x18] sm:$0xff] %vm599, %v989
      %1022 = vst.msk [vmem:[#allocation2 + $0x20] sm:$0xff] %vm599, %v990
      %1023 = vst.msk [vmem:[#allocation2 + $0x28] sm:$0xff] %vm599, %v991
      %1024 = vst.msk [vmem:[#allocation2 + $0x30] sm:$0xff] %vm599, %v992
      %1025 = vst.msk [vmem:[#allocation2 + $0x38] sm:$0xff] %vm599, %v993
      %1026 = vst.msk [vmem:[#allocation2 + $0x40] sm:$0xff] %vm599, %v994
      %1027 = vst.msk [vmem:[#allocation2 + $0x48] sm:$0xff] %vm599, %v995
      %1028 = vst.msk [vmem:[#allocation2 + $0x50] sm:$0xff] %vm599, %v996
      %1029 = vst.msk [vmem:[#allocation2 + $0x58] sm:$0xff] %vm599, %v997
      %1030 = vst.msk [vmem:[#allocation2 + $0x60] sm:$0xff] %vm599, %v998
      %1031 = vst.msk [vmem:[#allocation2 + $0x68] sm:$0xff] %vm599, %v999
      %1032 = vst.msk [vmem:[#allocation2 + $0x70] sm:$0xff] %vm599, %v1000
      %1033 = vst.msk [vmem:[#allocation2 + $0x78] sm:$0xff] %vm599, %v1001
      %1034 = vst.msk [vmem:[#allocation2 + $0x80] sm:$0xff] %vm599, %v1002
      %1035 = vst.msk [vmem:[#allocation2 + $0x88] sm:$0xff] %vm599, %v1003
      %1036 = vst.msk [vmem:[#allocation2 + $0x90] sm:$0xff] %vm599, %v1004
      %1037 = vst.msk [vmem:[#allocation2 + $0x98] sm:$0xff] %vm599, %v1005
      %1038 = vst.msk [vmem:[#allocation2 + $0xa0] sm:$0xff] %vm599, %v1006
      %1039 = vst.msk [vmem:[#allocation2 + $0xa8] sm:$0xff] %vm599, %v1007
      %1040 = vst.msk [vmem:[#allocation2 + $0xb0] sm:$0xff] %vm599, %v1008
      %1041 = vst.msk [vmem:[#allocation2 + $0xb8] sm:$0xff] %vm599, %v1009
      %1042 = vst.msk [vmem:[#allocation2 + $0xc0] sm:$0xff] %vm599, %v1010
      %1043 = vst.msk [vmem:[#allocation2 + $0xc8] sm:$0xff] %vm599, %v1011
      %1044 = vst.msk [vmem:[#allocation2 + $0xd0] sm:$0xff] %vm599, %v1012
      %1045 = vst.msk [vmem:[#allocation2 + $0xd8] sm:$0xff] %vm599, %v1013
      %1046 = vst.msk [vmem:[#allocation2 + $0xe0] sm:$0xff] %vm599, %v1014
      %1047 = vst.msk [vmem:[#allocation2 + $0xe8] sm:$0xff] %vm599, %v1015
      %1048 = vst.msk [vmem:[#allocation2 + $0xf0] sm:$0xff] %vm599, %v1016
      %1049 = vst.msk [vmem:[#allocation2 + $0xf8] sm:$0xff] %vm599, %v1017
      %v1050 = vld [vmem:[#allocation2] sm:$0xff]
      %v1051 = vld [vmem:[#allocation2 + $0x8] sm:$0xff]
      %v1052 = vld [vmem:[#allocation2 + $0x10] sm:$0xff]
      %v1053 = vld [vmem:[#allocation2 + $0x18] sm:$0xff]
      %v1054 = vld [vmem:[#allocation2 + $0x20] sm:$0xff]
      %v1055 = vld [vmem:[#allocation2 + $0x28] sm:$0xff]
      %v1056 = vld [vmem:[#allocation2 + $0x30] sm:$0xff]
      %v1057 = vld [vmem:[#allocation2 + $0x38] sm:$0xff]
      %v1058 = vld [vmem:[#allocation2 + $0x40] sm:$0xff]
      %v1059 = vld [vmem:[#allocation2 + $0x48] sm:$0xff]
      %v1060 = vld [vmem:[#allocation2 + $0x50] sm:$0xff]
      %v1061 = vld [vmem:[#allocation2 + $0x58] sm:$0xff]
      %v1062 = vld [vmem:[#allocation2 + $0x60] sm:$0xff]
      %v1063 = vld [vmem:[#allocation2 + $0x68] sm:$0xff]
      %v1064 = vld [vmem:[#allocation2 + $0x70] sm:$0xff]
      %v1065 = vld [vmem:[#allocation2 + $0x78] sm:$0xff]
      %v1066 = vld [vmem:[#allocation2 + $0x80] sm:$0xff]
      %v1067 = vld [vmem:[#allocation2 + $0x88] sm:$0xff]
      %v1068 = vld [vmem:[#allocation2 + $0x90] sm:$0xff]
      %v1069 = vld [vmem:[#allocation2 + $0x98] sm:$0xff]
      %v1070 = vld [vmem:[#allocation2 + $0xa0] sm:$0xff]
      %v1071 = vld [vmem:[#allocation2 + $0xa8] sm:$0xff]
      %v1072 = vld [vmem:[#allocation2 + $0xb0] sm:$0xff]
      %v1073 = vld [vmem:[#allocation2 + $0xb8] sm:$0xff]
      %v1074 = vld [vmem:[#allocation2 + $0xc0] sm:$0xff]
      %v1075 = vld [vmem:[#allocation2 + $0xc8] sm:$0xff]
      %v1076 = vld [vmem:[#allocation2 + $0xd0] sm:$0xff]
      %v1077 = vld [vmem:[#allocation2 + $0xd8] sm:$0xff]
      %v1078 = vld [vmem:[#allocation2 + $0xe0] sm:$0xff]
      %v1079 = vld [vmem:[#allocation2 + $0xe8] sm:$0xff]
      %v1080 = vld [vmem:[#allocation2 + $0xf0] sm:$0xff]
      %v1081 = vld [vmem:[#allocation2 + $0xf8] sm:$0xff]
      %v1083 = vlaneseq
      %v1084 = vshrl.u32 %v1083, 7
      %v1085 = vsub.s32 0, %v1084
      %v1086 = vrot.slane %v211, %v1085
      %v1088 = vadd.f32 %v1050, %v1086
      %v1089 = vadd.f32 %v1051, %v1086
      %v1090 = vadd.f32 %v1052, %v1086
      %v1091 = vadd.f32 %v1053, %v1086
      %v1092 = vadd.f32 %v1054, %v1086
      %v1093 = vadd.f32 %v1055, %v1086
      %v1094 = vadd.f32 %v1056, %v1086
      %v1095 = vadd.f32 %v1057, %v1086
      %v1096 = vadd.f32 %v1058, %v1086
      %v1097 = vadd.f32 %v1059, %v1086
      %v1098 = vadd.f32 %v1060, %v1086
      %v1099 = vadd.f32 %v1061, %v1086
      %v1100 = vadd.f32 %v1062, %v1086
      %v1101 = vadd.f32 %v1063, %v1086
      %v1102 = vadd.f32 %v1064, %v1086
      %v1103 = vadd.f32 %v1065, %v1086
      %v1104 = vadd.f32 %v1066, %v1086
      %v1105 = vadd.f32 %v1067, %v1086
      %v1106 = vadd.f32 %v1068, %v1086
      %v1107 = vadd.f32 %v1069, %v1086
      %v1108 = vadd.f32 %v1070, %v1086
      %v1109 = vadd.f32 %v1071, %v1086
      %v1110 = vadd.f32 %v1072, %v1086
      %v1111 = vadd.f32 %v1073, %v1086
      %v1112 = vadd.f32 %v1074, %v1086
      %v1113 = vadd.f32 %v1075, %v1086
      %v1114 = vadd.f32 %v1076, %v1086
      %v1115 = vadd.f32 %v1077, %v1086
      %v1116 = vadd.f32 %v1078, %v1086
      %v1117 = vadd.f32 %v1079, %v1086
      %v1118 = vadd.f32 %v1080, %v1086
      %v1119 = vadd.f32 %v1081, %v1086
      %1120 = vst.msk [vmem:[%s208] sm:$0xff] %vm599, %v1088
      %1121 = vst.msk [vmem:[%s208 + $0x8] sm:$0xff] %vm599, %v1089
      %1122 = vst.msk [vmem:[%s208 + $0x20] sm:$0xff] %vm599, %v1090
      %1123 = vst.msk [vmem:[%s208 + $0x28] sm:$0xff] %vm599, %v1091
      %1124 = vst.msk [vmem:[%s208 + $0x40] sm:$0xff] %vm599, %v1092
      %1125 = vst.msk [vmem:[%s208 + $0x48] sm:$0xff] %vm599, %v1093
      %1126 = vst.msk [vmem:[%s208 + $0x60] sm:$0xff] %vm599, %v1094
      %1127 = vst.msk [vmem:[%s208 + $0x68] sm:$0xff] %vm599, %v1095
      %1128 = vst.msk [vmem:[%s208 + $0x80] sm:$0xff] %vm599, %v1096
      %1129 = vst.msk [vmem:[%s208 + $0x88] sm:$0xff] %vm599, %v1097
      %1130 = vst.msk [vmem:[%s208 + $0xa0] sm:$0xff] %vm599, %v1098
      %1131 = vst.msk [vmem:[%s208 + $0xa8] sm:$0xff] %vm599, %v1099
      %1132 = vst.msk [vmem:[%s208 + $0xc0] sm:$0xff] %vm599, %v1100
      %1133 = vst.msk [vmem:[%s208 + $0xc8] sm:$0xff] %vm599, %v1101
      %1134 = vst.msk [vmem:[%s208 + $0xe0] sm:$0xff] %vm599, %v1102
      %1135 = vst.msk [vmem:[%s208 + $0xe8] sm:$0xff] %vm599, %v1103
      %1136 = vst.msk [vmem:[%s208 + $0x100] sm:$0xff] %vm599, %v1104
      %1137 = vst.msk [vmem:[%s208 + $0x108] sm:$0xff] %vm599, %v1105
      %1138 = vst.msk [vmem:[%s208 + $0x120] sm:$0xff] %vm599, %v1106
      %1139 = vst.msk [vmem:[%s208 + $0x128] sm:$0xff] %vm599, %v1107
      %1140 = vst.msk [vmem:[%s208 + $0x140] sm:$0xff] %vm599, %v1108
      %1141 = vst.msk [vmem:[%s208 + $0x148] sm:$0xff] %vm599, %v1109
      %1142 = vst.msk [vmem:[%s208 + $0x160] sm:$0xff] %vm599, %v1110
      %1143 = vst.msk [vmem:[%s208 + $0x168] sm:$0xff] %vm599, %v1111
      %1144 = vst.msk [vmem:[%s208 + $0x180] sm:$0xff] %vm599, %v1112
      %1145 = vst.msk [vmem:[%s208 + $0x188] sm:$0xff] %vm599, %v1113
      %1146 = vst.msk [vmem:[%s208 + $0x1a0] sm:$0xff] %vm599, %v1114
      %1147 = vst.msk [vmem:[%s208 + $0x1a8] sm:$0xff] %vm599, %v1115
      %1148 = vst.msk [vmem:[%s208 + $0x1c0] sm:$0xff] %vm599, %v1116
      %1149 = vst.msk [vmem:[%s208 + $0x1c8] sm:$0xff] %vm599, %v1117
      %1150 = vst.msk [vmem:[%s208 + $0x1e0] sm:$0xff] %vm599, %v1118
      %1151 = vst.msk [vmem:[%s208 + $0x1e8] sm:$0xff] %vm599, %v1119
      %v1152 = vld [vmem:[%s198] sm:$0xf]
      %v1153 = vld [vmem:[%s198 + $0x4] sm:$0xf]
      %v1154 = vld [vmem:[%s198 + $0x8] sm:$0xf]
      %v1155 = vld [vmem:[%s198 + $0xc] sm:$0xf]
      %v1156 = vld [vmem:[%s198 + $0x10] sm:$0xf]
      %v1157 = vld [vmem:[%s198 + $0x14] sm:$0xf]
      %v1158 = vld [vmem:[%s198 + $0x18] sm:$0xf]
      %v1159 = vld [vmem:[%s198 + $0x1c] sm:$0xf]
      %v1160 = vld [vmem:[%s198 + $0x20] sm:$0xf]
      %v1161 = vld [vmem:[%s198 + $0x24] sm:$0xf]
      %v1162 = vld [vmem:[%s198 + $0x28] sm:$0xf]
      %v1163 = vld [vmem:[%s198 + $0x2c] sm:$0xf]
      %v1164 = vld [vmem:[%s198 + $0x30] sm:$0xf]
      %v1165 = vld [vmem:[%s198 + $0x34] sm:$0xf]
      %v1166 = vld [vmem:[%s198 + $0x38] sm:$0xf]
      %v1167 = vld [vmem:[%s198 + $0x3c] sm:$0xf]
      %v1168 = vld [vmem:[%s198 + $0x40] sm:$0xf]
      %v1169 = vld [vmem:[%s198 + $0x44] sm:$0xf]
      %v1170 = vld [vmem:[%s198 + $0x48] sm:$0xf]
      %v1171 = vld [vmem:[%s198 + $0x4c] sm:$0xf]
      %v1172 = vld [vmem:[%s198 + $0x50] sm:$0xf]
      %v1173 = vld [vmem:[%s198 + $0x54] sm:$0xf]
      %v1174 = vld [vmem:[%s198 + $0x58] sm:$0xf]
      %v1175 = vld [vmem:[%s198 + $0x5c] sm:$0xf]
      %v1176 = vld [vmem:[%s198 + $0x60] sm:$0xf]
      %v1177 = vld [vmem:[%s198 + $0x64] sm:$0xf]
      %v1178 = vld [vmem:[%s198 + $0x68] sm:$0xf]
      %v1179 = vld [vmem:[%s198 + $0x6c] sm:$0xf]
      %v1180 = vld [vmem:[%s198 + $0x70] sm:$0xf]
      %v1181 = vld [vmem:[%s198 + $0x74] sm:$0xf]
      %v1182 = vld [vmem:[%s198 + $0x78] sm:$0xf]
      %v1183 = vld [vmem:[%s198 + $0x7c] sm:$0xf]
      %v1184 = vld [vmem:[%s244] sm:$0xf]
      %v1185 = vld [vmem:[%s244 + $0x4] sm:$0xf]
      %v1186 = vld [vmem:[%s244 + $0x8] sm:$0xf]
      %v1187 = vld [vmem:[%s244 + $0xc] sm:$0xf]
      %v1188 = vld [vmem:[%s244 + $0x10] sm:$0xf]
      %v1189 = vld [vmem:[%s244 + $0x14] sm:$0xf]
      %v1190 = vld [vmem:[%s244 + $0x18] sm:$0xf]
      %v1191 = vld [vmem:[%s244 + $0x1c] sm:$0xf]
      %v1192 = vld [vmem:[%s244 + $0x20] sm:$0xf]
      %v1193 = vld [vmem:[%s244 + $0x24] sm:$0xf]
      %v1194 = vld [vmem:[%s244 + $0x28] sm:$0xf]
      %v1195 = vld [vmem:[%s244 + $0x2c] sm:$0xf]
      %v1196 = vld [vmem:[%s244 + $0x30] sm:$0xf]
      %v1197 = vld [vmem:[%s244 + $0x34] sm:$0xf]
      %v1198 = vld [vmem:[%s244 + $0x38] sm:$0xf]
      %v1199 = vld [vmem:[%s244 + $0x3c] sm:$0xf]
      %v1200 = vld [vmem:[%s244 + $0x40] sm:$0xf]
      %v1201 = vld [vmem:[%s244 + $0x44] sm:$0xf]
      %v1202 = vld [vmem:[%s244 + $0x48] sm:$0xf]
      %v1203 = vld [vmem:[%s244 + $0x4c] sm:$0xf]
      %v1204 = vld [vmem:[%s244 + $0x50] sm:$0xf]
      %v1205 = vld [vmem:[%s244 + $0x54] sm:$0xf]
      %v1206 = vld [vmem:[%s244 + $0x58] sm:$0xf]
      %v1207 = vld [vmem:[%s244 + $0x5c] sm:$0xf]
      %v1208 = vld [vmem:[%s244 + $0x60] sm:$0xf]
      %v1209 = vld [vmem:[%s244 + $0x64] sm:$0xf]
      %v1210 = vld [vmem:[%s244 + $0x68] sm:$0xf]
      %v1211 = vld [vmem:[%s244 + $0x6c] sm:$0xf]
      %v1212 = vld [vmem:[%s244 + $0x70] sm:$0xf]
      %v1213 = vld [vmem:[%s244 + $0x74] sm:$0xf]
      %v1214 = vld [vmem:[%s244 + $0x78] sm:$0xf]
      %v1215 = vld [vmem:[%s244 + $0x7c] sm:$0xf]
      %s1216 = scalar_lea.vmem %s1, 64
      %v1217 = vld [vmem:[%s1216] sm:$0xf]
      %v1218 = vld [vmem:[%s1216 + $0x4] sm:$0xf]
      %v1219 = vld [vmem:[%s1216 + $0x8] sm:$0xf]
      %v1220 = vld [vmem:[%s1216 + $0xc] sm:$0xf]
      %v1221 = vld [vmem:[%s1216 + $0x10] sm:$0xf]
      %v1222 = vld [vmem:[%s1216 + $0x14] sm:$0xf]
      %v1223 = vld [vmem:[%s1216 + $0x18] sm:$0xf]
      %v1224 = vld [vmem:[%s1216 + $0x1c] sm:$0xf]
      %v1257 = vunpack.c.l.b16 %v1152
      %v1258 = vunpack.c.l.b16 %v1153
      %v1259 = vunpack.c.l.b16 %v1154
      %v1260 = vunpack.c.l.b16 %v1155
      %v1261 = vunpack.c.l.b16 %v1156
      %v1262 = vunpack.c.l.b16 %v1157
      %v1263 = vunpack.c.l.b16 %v1158
      %v1264 = vunpack.c.l.b16 %v1159
      %v1265 = vunpack.c.l.b16 %v1160
      %v1266 = vunpack.c.l.b16 %v1161
      %v1267 = vunpack.c.l.b16 %v1162
      %v1268 = vunpack.c.l.b16 %v1163
      %v1269 = vunpack.c.l.b16 %v1164
      %v1270 = vunpack.c.l.b16 %v1165
      %v1271 = vunpack.c.l.b16 %v1166
      %v1272 = vunpack.c.l.b16 %v1167
      %v1273 = vunpack.c.l.b16 %v1168
      %v1274 = vunpack.c.l.b16 %v1169
      %v1275 = vunpack.c.l.b16 %v1170
      %v1276 = vunpack.c.l.b16 %v1171
      %v1277 = vunpack.c.l.b16 %v1172
      %v1278 = vunpack.c.l.b16 %v1173
      %v1279 = vunpack.c.l.b16 %v1174
      %v1280 = vunpack.c.l.b16 %v1175
      %v1281 = vunpack.c.l.b16 %v1176
      %v1282 = vunpack.c.l.b16 %v1177
      %v1283 = vunpack.c.l.b16 %v1178
      %v1284 = vunpack.c.l.b16 %v1179
      %v1285 = vunpack.c.l.b16 %v1180
      %v1286 = vunpack.c.l.b16 %v1181
      %v1287 = vunpack.c.l.b16 %v1182
      %v1288 = vunpack.c.l.b16 %v1183
      %v1289 = vpack.c.b16 %v1258, %v1257
      %v1290 = vpack.c.b16 %v1260, %v1259
      %v1291 = vpack.c.b16 %v1262, %v1261
      %v1292 = vpack.c.b16 %v1264, %v1263
      %v1293 = vpack.c.b16 %v1266, %v1265
      %v1294 = vpack.c.b16 %v1268, %v1267
      %v1295 = vpack.c.b16 %v1270, %v1269
      %v1296 = vpack.c.b16 %v1272, %v1271
      %v1297 = vpack.c.b16 %v1274, %v1273
      %v1298 = vpack.c.b16 %v1276, %v1275
      %v1299 = vpack.c.b16 %v1278, %v1277
      %v1300 = vpack.c.b16 %v1280, %v1279
      %v1301 = vpack.c.b16 %v1282, %v1281
      %v1302 = vpack.c.b16 %v1284, %v1283
      %v1303 = vpack.c.b16 %v1286, %v1285
      %v1304 = vpack.c.b16 %v1288, %v1287
      %1305 = vrot.lane.b32.xlu0 %v1289, 96
      %v1306 = vpop.permute.xlu0 %1305
      %1307 = vrot.lane.b32.xlu0 %v1290, 96
      %v1308 = vpop.permute.xlu0 %1307
      %1309 = vrot.lane.b32.xlu0 %v1291, 96
      %v1310 = vpop.permute.xlu0 %1309
      %1311 = vrot.lane.b32.xlu0 %v1292, 96
      %v1312 = vpop.permute.xlu0 %1311
      %1313 = vrot.lane.b32.xlu0 %v1293, 96
      %v1314 = vpop.permute.xlu0 %1313
      %1315 = vrot.lane.b32.xlu0 %v1294, 96
      %v1316 = vpop.permute.xlu0 %1315
      %1317 = vrot.lane.b32.xlu0 %v1295, 96
      %v1318 = vpop.permute.xlu0 %1317
      %1319 = vrot.lane.b32.xlu0 %v1296, 96
      %v1320 = vpop.permute.xlu0 %1319
      %1321 = vrot.lane.b32.xlu0 %v1297, 96
      %v1322 = vpop.permute.xlu0 %1321
      %1323 = vrot.lane.b32.xlu0 %v1298, 96
      %v1324 = vpop.permute.xlu0 %1323
      %1325 = vrot.lane.b32.xlu0 %v1299, 96
      %v1326 = vpop.permute.xlu0 %1325
      %1327 = vrot.lane.b32.xlu0 %v1300, 96
      %v1328 = vpop.permute.xlu0 %1327
      %1329 = vrot.lane.b32.xlu0 %v1301, 96
      %v1330 = vpop.permute.xlu0 %1329
      %1331 = vrot.lane.b32.xlu0 %v1302, 96
      %v1332 = vpop.permute.xlu0 %1331
      %1333 = vrot.lane.b32.xlu0 %v1303, 96
      %v1334 = vpop.permute.xlu0 %1333
      %1335 = vrot.lane.b32.xlu0 %v1304, 96
      %v1336 = vpop.permute.xlu0 %1335
      %v1345 = vunpack.c.l.b16 %v1217
      %v1346 = vunpack.c.l.b16 %v1218
      %v1347 = vunpack.c.l.b16 %v1219
      %v1348 = vunpack.c.l.b16 %v1220
      %v1349 = vunpack.c.l.b16 %v1221
      %v1350 = vunpack.c.l.b16 %v1222
      %v1351 = vunpack.c.l.b16 %v1223
      %v1352 = vunpack.c.l.b16 %v1224
      %v1353 = vpack.c.b16 %v1346, %v1345
      %v1354 = vpack.c.b16 %v1348, %v1347
      %v1355 = vpack.c.b16 %v1350, %v1349
      %v1356 = vpack.c.b16 %v1352, %v1351
      %v1362 = vsel %vm389, %v1306, 0
      %v1365 = vsel %vm389, %v1308, 0
      %v1368 = vsel %vm389, %v1310, 0
      %v1371 = vsel %vm389, %v1312, 0
      %v1374 = vsel %vm389, %v1314, 0
      %v1377 = vsel %vm389, %v1316, 0
      %v1380 = vsel %vm389, %v1318, 0
      %v1383 = vsel %vm389, %v1320, 0
      %v1386 = vsel %vm389, %v1322, 0
      %v1389 = vsel %vm389, %v1324, 0
      %v1392 = vsel %vm389, %v1326, 0
      %v1395 = vsel %vm389, %v1328, 0
      %v1398 = vsel %vm389, %v1330, 0
      %v1401 = vsel %vm389, %v1332, 0
      %v1404 = vsel %vm389, %v1334, 0
      %v1407 = vsel %vm389, %v1336, 0
      %1409 = vmatprep.subr.bf16.mxu0 0
      %1410 = vmatpush1.bf16.msra.mxu0 %v1353
      %1411 = vmatprep.subr.bf16.mxu0 0
      %1412 = vmatpush1.bf16.msra.mxu0 %v1354
      %1413 = vmatprep.subr.bf16.mxu0 0
      %1414 = vmatpush1.bf16.msra.mxu0 %v1355
      %1415 = vmatprep.subr.bf16.mxu0 0
      %1416 = vmatpush1.bf16.msra.mxu0 %v1356
      %1417 = vmatprep.subr.bf16.mxu0 0
      %1418 = vmatpush1.bf16.msra.mxu0 0
      %1419 = vmatprep.subr.bf16.mxu0 0
      %1420 = vmatpush1.bf16.msra.mxu0 0
      %1421 = vmatprep.subr.bf16.mxu0 0
      %1422 = vmatpush1.bf16.msra.mxu0 0
      %1423 = vmatprep.subr.bf16.mxu0 0
      %1424 = vmatpush1.bf16.msra.mxu0 0
      %1425 = vmatprep.subr.bf16.mxu0 0
      %1426 = vmatpush1.bf16.msra.mxu0 0
      %1427 = vmatprep.subr.bf16.mxu0 0
      %1428 = vmatpush1.bf16.msra.mxu0 0
      %1429 = vmatprep.subr.bf16.mxu0 0
      %1430 = vmatpush1.bf16.msra.mxu0 0
      %1431 = vmatprep.subr.bf16.mxu0 0
      %1432 = vmatpush1.bf16.msra.mxu0 0
      %1433 = vmatprep.subr.bf16.mxu0 0
      %1434 = vmatpush1.bf16.msra.mxu0 0
      %1435 = vmatprep.subr.bf16.mxu0 0
      %1436 = vmatpush1.bf16.msra.mxu0 0
      %1437 = vmatprep.subr.bf16.mxu0 0
      %1438 = vmatpush1.bf16.msra.mxu0 0
      %1439 = vmatprep.subr.bf16.mxu0 0
      %1440 = vmatpush1.bf16.msra.mxu0 0
      %1441 = vmatprep.mubr.bf16.mxu0 0
      %1442 = vmatmul.mubr.bf16.gmra.mrb[0].mxu0 %v1362
      %v1443 = vpop.f32.mrb[0].mxu0
      %v1444 = vadd.f32 0.0, %v1443
      %v1445 = vpop.f32.mrb[0].mxu0
      %v1446 = vpop.f32.mrb[0].mxu0
      %v1447 = vadd.f32 0.0, %v1446
      %v1448 = vpop.f32.mrb[0].mxu0
      %1449 = vmatprep.mubr.bf16.mxu0 0
      %1450 = vmatmul.mubr.bf16.gmra.mrb[0].mxu0 %v1365
      %v1451 = vpop.f32.mrb[0].mxu0
      %v1452 = vadd.f32 0.0, %v1451
      %v1453 = vpop.f32.mrb[0].mxu0
      %v1454 = vpop.f32.mrb[0].mxu0
      %v1455 = vadd.f32 0.0, %v1454
      %v1456 = vpop.f32.mrb[0].mxu0
      %1457 = vmatprep.mubr.bf16.mxu0 0
      %1458 = vmatmul.mubr.bf16.gmra.mrb[0].mxu0 %v1368
      %v1459 = vpop.f32.mrb[0].mxu0
      %v1460 = vadd.f32 0.0, %v1459
      %v1461 = vpop.f32.mrb[0].mxu0
      %v1462 = vpop.f32.mrb[0].mxu0
      %v1463 = vadd.f32 0.0, %v1462
      %v1464 = vpop.f32.mrb[0].mxu0
      %1465 = vmatprep.mubr.bf16.mxu0 0
      %1466 = vmatmul.mubr.bf16.gmra.mrb[0].mxu0 %v1371
      %v1467 = vpop.f32.mrb[0].mxu0
      %v1468 = vadd.f32 0.0, %v1467
      %v1469 = vpop.f32.mrb[0].mxu0
      %v1470 = vpop.f32.mrb[0].mxu0
      %v1471 = vadd.f32 0.0, %v1470
      %v1472 = vpop.f32.mrb[0].mxu0
      %1473 = vmatprep.mubr.bf16.mxu0 0
      %1474 = vmatmul.mubr.bf16.gmra.mrb[0].mxu0 %v1374
      %v1475 = vpop.f32.mrb[0].mxu0
      %v1476 = vadd.f32 0.0, %v1475
      %v1477 = vpop.f32.mrb[0].mxu0
      %v1478 = vpop.f32.mrb[0].mxu0
      %v1479 = vadd.f32 0.0, %v1478
      %v1480 = vpop.f32.mrb[0].mxu0
      %1481 = vmatprep.mubr.bf16.mxu0 0
      %1482 = vmatmul.mubr.bf16.gmra.mrb[0].mxu0 %v1377
      %v1483 = vpop.f32.mrb[0].mxu0
      %v1484 = vadd.f32 0.0, %v1483
      %v1485 = vpop.f32.mrb[0].mxu0
      %v1486 = vpop.f32.mrb[0].mxu0
      %v1487 = vadd.f32 0.0, %v1486
      %v1488 = vpop.f32.mrb[0].mxu0
      %1489 = vmatprep.mubr.bf16.mxu0 0
      %1490 = vmatmul.mubr.bf16.gmra.mrb[0].mxu0 %v1380
      %v1491 = vpop.f32.mrb[0].mxu0
      %v1492 = vadd.f32 0.0, %v1491
      %v1493 = vpop.f32.mrb[0].mxu0
      %v1494 = vpop.f32.mrb[0].mxu0
      %v1495 = vadd.f32 0.0, %v1494
      %v1496 = vpop.f32.mrb[0].mxu0
      %1497 = vmatprep.mubr.bf16.mxu0 0
      %1498 = vmatmul.mubr.bf16.gmra.mrb[0].mxu0 %v1383
      %v1499 = vpop.f32.mrb[0].mxu0
      %v1500 = vadd.f32 0.0, %v1499
      %v1501 = vpop.f32.mrb[0].mxu0
      %v1502 = vpop.f32.mrb[0].mxu0
      %v1503 = vadd.f32 0.0, %v1502
      %v1504 = vpop.f32.mrb[0].mxu0
      %1505 = vmatprep.mubr.bf16.mxu0 0
      %1506 = vmatmul.mubr.bf16.gmra.mrb[0].mxu0 %v1386
      %v1507 = vpop.f32.mrb[0].mxu0
      %v1508 = vadd.f32 0.0, %v1507
      %v1509 = vpop.f32.mrb[0].mxu0
      %v1510 = vpop.f32.mrb[0].mxu0
      %v1511 = vadd.f32 0.0, %v1510
      %v1512 = vpop.f32.mrb[0].mxu0
      %1513 = vmatprep.mubr.bf16.mxu0 0
      %1514 = vmatmul.mubr.bf16.gmra.mrb[0].mxu0 %v1389
      %v1515 = vpop.f32.mrb[0].mxu0
      %v1516 = vadd.f32 0.0, %v1515
      %v1517 = vpop.f32.mrb[0].mxu0
      %v1518 = vpop.f32.mrb[0].mxu0
      %v1519 = vadd.f32 0.0, %v1518
      %v1520 = vpop.f32.mrb[0].mxu0
      %1521 = vmatprep.mubr.bf16.mxu0 0
      %1522 = vmatmul.mubr.bf16.gmra.mrb[0].mxu0 %v1392
      %v1523 = vpop.f32.mrb[0].mxu0
      %v1524 = vadd.f32 0.0, %v1523
      %v1525 = vpop.f32.mrb[0].mxu0
      %v1526 = vpop.f32.mrb[0].mxu0
      %v1527 = vadd.f32 0.0, %v1526
      %v1528 = vpop.f32.mrb[0].mxu0
      %1529 = vmatprep.mubr.bf16.mxu0 0
      %1530 = vmatmul.mubr.bf16.gmra.mrb[0].mxu0 %v1395
      %v1531 = vpop.f32.mrb[0].mxu0
      %v1532 = vadd.f32 0.0, %v1531
      %v1533 = vpop.f32.mrb[0].mxu0
      %v1534 = vpop.f32.mrb[0].mxu0
      %v1535 = vadd.f32 0.0, %v1534
      %v1536 = vpop.f32.mrb[0].mxu0
      %1537 = vmatprep.mubr.bf16.mxu0 0
      %1538 = vmatmul.mubr.bf16.gmra.mrb[0].mxu0 %v1398
      %v1539 = vpop.f32.mrb[0].mxu0
      %v1540 = vadd.f32 0.0, %v1539
      %v1541 = vpop.f32.mrb[0].mxu0
      %v1542 = vpop.f32.mrb[0].mxu0
      %v1543 = vadd.f32 0.0, %v1542
      %v1544 = vpop.f32.mrb[0].mxu0
      %1545 = vmatprep.mubr.bf16.mxu0 0
      %1546 = vmatmul.mubr.bf16.gmra.mrb[0].mxu0 %v1401
      %v1547 = vpop.f32.mrb[0].mxu0
      %v1548 = vadd.f32 0.0, %v1547
      %v1549 = vpop.f32.mrb[0].mxu0
      %v1550 = vpop.f32.mrb[0].mxu0
      %v1551 = vadd.f32 0.0, %v1550
      %v1552 = vpop.f32.mrb[0].mxu0
      %1553 = vmatprep.mubr.bf16.mxu0 0
      %1554 = vmatmul.mubr.bf16.gmra.mrb[0].mxu0 %v1404
      %v1555 = vpop.f32.mrb[0].mxu0
      %v1556 = vadd.f32 0.0, %v1555
      %v1557 = vpop.f32.mrb[0].mxu0
      %v1558 = vpop.f32.mrb[0].mxu0
      %v1559 = vadd.f32 0.0, %v1558
      %v1560 = vpop.f32.mrb[0].mxu0
      %1561 = vmatprep.mubr.bf16.mxu0 0
      %1562 = vmatmul.mubr.bf16.gmra.mrb[0].mxu0 %v1407
      %v1563 = vpop.f32.mrb[0].mxu0
      %v1564 = vadd.f32 0.0, %v1563
      %v1565 = vpop.f32.mrb[0].mxu0
      %v1566 = vpop.f32.mrb[0].mxu0
      %v1567 = vadd.f32 0.0, %v1566
      %v1568 = vpop.f32.mrb[0].mxu0
      %1569 = vdwg.mxu0
      %1570 = vst.msk [vmem:[#allocation2] sm:$0xff] %vm599, %v1444
      %1571 = vst.msk [vmem:[#allocation2 + $0x8] sm:$0xff] %vm599, %v1447
      %1572 = vst.msk [vmem:[#allocation2 + $0x10] sm:$0xff] %vm599, %v1452
      %1573 = vst.msk [vmem:[#allocation2 + $0x18] sm:$0xff] %vm599, %v1455
      %1574 = vst.msk [vmem:[#allocation2 + $0x20] sm:$0xff] %vm599, %v1460
      %1575 = vst.msk [vmem:[#allocation2 + $0x28] sm:$0xff] %vm599, %v1463
      %1576 = vst.msk [vmem:[#allocation2 + $0x30] sm:$0xff] %vm599, %v1468
      %1577 = vst.msk [vmem:[#allocation2 + $0x38] sm:$0xff] %vm599, %v1471
      %1578 = vst.msk [vmem:[#allocation2 + $0x40] sm:$0xff] %vm599, %v1476
      %1579 = vst.msk [vmem:[#allocation2 + $0x48] sm:$0xff] %vm599, %v1479
      %1580 = vst.msk [vmem:[#allocation2 + $0x50] sm:$0xff] %vm599, %v1484
      %1581 = vst.msk [vmem:[#allocation2 + $0x58] sm:$0xff] %vm599, %v1487
      %1582 = vst.msk [vmem:[#allocation2 + $0x60] sm:$0xff] %vm599, %v1492
      %1583 = vst.msk [vmem:[#allocation2 + $0x68] sm:$0xff] %vm599, %v1495
      %1584 = vst.msk [vmem:[#allocation2 + $0x70] sm:$0xff] %vm599, %v1500
      %1585 = vst.msk [vmem:[#allocation2 + $0x78] sm:$0xff] %vm599, %v1503
      %1586 = vst.msk [vmem:[#allocation2 + $0x80] sm:$0xff] %vm599, %v1508
      %1587 = vst.msk [vmem:[#allocation2 + $0x88] sm:$0xff] %vm599, %v1511
      %1588 = vst.msk [vmem:[#allocation2 + $0x90] sm:$0xff] %vm599, %v1516
      %1589 = vst.msk [vmem:[#allocation2 + $0x98] sm:$0xff] %vm599, %v1519
      %1590 = vst.msk [vmem:[#allocation2 + $0xa0] sm:$0xff] %vm599, %v1524
      %1591 = vst.msk [vmem:[#allocation2 + $0xa8] sm:$0xff] %vm599, %v1527
      %1592 = vst.msk [vmem:[#allocation2 + $0xb0] sm:$0xff] %vm599, %v1532
      %1593 = vst.msk [vmem:[#allocation2 + $0xb8] sm:$0xff] %vm599, %v1535
      %1594 = vst.msk [vmem:[#allocation2 + $0xc0] sm:$0xff] %vm599, %v1540
      %1595 = vst.msk [vmem:[#allocation2 + $0xc8] sm:$0xff] %vm599, %v1543
      %1596 = vst.msk [vmem:[#allocation2 + $0xd0] sm:$0xff] %vm599, %v1548
      %1597 = vst.msk [vmem:[#allocation2 + $0xd8] sm:$0xff] %vm599, %v1551
      %1598 = vst.msk [vmem:[#allocation2 + $0xe0] sm:$0xff] %vm599, %v1556
      %1599 = vst.msk [vmem:[#allocation2 + $0xe8] sm:$0xff] %vm599, %v1559
      %1600 = vst.msk [vmem:[#allocation2 + $0xf0] sm:$0xff] %vm599, %v1564
      %1601 = vst.msk [vmem:[#allocation2 + $0xf8] sm:$0xff] %vm599, %v1567
      %v1602 = vld [vmem:[#allocation2] sm:$0xff]
      %v1603 = vld [vmem:[#allocation2 + $0x8] sm:$0xff]
      %v1604 = vld [vmem:[#allocation2 + $0x10] sm:$0xff]
      %v1605 = vld [vmem:[#allocation2 + $0x18] sm:$0xff]
      %v1606 = vld [vmem:[#allocation2 + $0x20] sm:$0xff]
      %v1607 = vld [vmem:[#allocation2 + $0x28] sm:$0xff]
      %v1608 = vld [vmem:[#allocation2 + $0x30] sm:$0xff]
      %v1609 = vld [vmem:[#allocation2 + $0x38] sm:$0xff]
      %v1610 = vld [vmem:[#allocation2 + $0x40] sm:$0xff]
      %v1611 = vld [vmem:[#allocation2 + $0x48] sm:$0xff]
      %v1612 = vld [vmem:[#allocation2 + $0x50] sm:$0xff]
      %v1613 = vld [vmem:[#allocation2 + $0x58] sm:$0xff]
      %v1614 = vld [vmem:[#allocation2 + $0x60] sm:$0xff]
      %v1615 = vld [vmem:[#allocation2 + $0x68] sm:$0xff]
      %v1616 = vld [vmem:[#allocation2 + $0x70] sm:$0xff]
      %v1617 = vld [vmem:[#allocation2 + $0x78] sm:$0xff]
      %v1618 = vld [vmem:[#allocation2 + $0x80] sm:$0xff]
      %v1619 = vld [vmem:[#allocation2 + $0x88] sm:$0xff]
      %v1620 = vld [vmem:[#allocation2 + $0x90] sm:$0xff]
      %v1621 = vld [vmem:[#allocation2 + $0x98] sm:$0xff]
      %v1622 = vld [vmem:[#allocation2 + $0xa0] sm:$0xff]
      %v1623 = vld [vmem:[#allocation2 + $0xa8] sm:$0xff]
      %v1624 = vld [vmem:[#allocation2 + $0xb0] sm:$0xff]
      %v1625 = vld [vmem:[#allocation2 + $0xb8] sm:$0xff]
      %v1626 = vld [vmem:[#allocation2 + $0xc0] sm:$0xff]
      %v1627 = vld [vmem:[#allocation2 + $0xc8] sm:$0xff]
      %v1628 = vld [vmem:[#allocation2 + $0xd0] sm:$0xff]
      %v1629 = vld [vmem:[#allocation2 + $0xd8] sm:$0xff]
      %v1630 = vld [vmem:[#allocation2 + $0xe0] sm:$0xff]
      %v1631 = vld [vmem:[#allocation2 + $0xe8] sm:$0xff]
      %v1632 = vld [vmem:[#allocation2 + $0xf0] sm:$0xff]
      %v1633 = vld [vmem:[#allocation2 + $0xf8] sm:$0xff]
      %s1634 = scalar_lea.vmem %s1, 96
      %v1635 = vld [vmem:[%s1634] sm:$0xf]
      %v1636 = vld [vmem:[%s1634 + $0x4] sm:$0xf]
      %v1637 = vld [vmem:[%s1634 + $0x8] sm:$0xf]
      %v1638 = vld [vmem:[%s1634 + $0xc] sm:$0xf]
      %v1639 = vld [vmem:[%s1634 + $0x10] sm:$0xf]
      %v1640 = vld [vmem:[%s1634 + $0x14] sm:$0xf]
      %v1641 = vld [vmem:[%s1634 + $0x18] sm:$0xf]
      %v1642 = vld [vmem:[%s1634 + $0x1c] sm:$0xf]
      %v1675 = vunpack.c.l.b16 %v1184
      %v1676 = vunpack.c.l.b16 %v1185
      %v1677 = vunpack.c.l.b16 %v1186
      %v1678 = vunpack.c.l.b16 %v1187
      %v1679 = vunpack.c.l.b16 %v1188
      %v1680 = vunpack.c.l.b16 %v1189
      %v1681 = vunpack.c.l.b16 %v1190
      %v1682 = vunpack.c.l.b16 %v1191
      %v1683 = vunpack.c.l.b16 %v1192
      %v1684 = vunpack.c.l.b16 %v1193
      %v1685 = vunpack.c.l.b16 %v1194
      %v1686 = vunpack.c.l.b16 %v1195
      %v1687 = vunpack.c.l.b16 %v1196
      %v1688 = vunpack.c.l.b16 %v1197
      %v1689 = vunpack.c.l.b16 %v1198
      %v1690 = vunpack.c.l.b16 %v1199
      %v1691 = vunpack.c.l.b16 %v1200
      %v1692 = vunpack.c.l.b16 %v1201
      %v1693 = vunpack.c.l.b16 %v1202
      %v1694 = vunpack.c.l.b16 %v1203
      %v1695 = vunpack.c.l.b16 %v1204
      %v1696 = vunpack.c.l.b16 %v1205
      %v1697 = vunpack.c.l.b16 %v1206
      %v1698 = vunpack.c.l.b16 %v1207
      %v1699 = vunpack.c.l.b16 %v1208
      %v1700 = vunpack.c.l.b16 %v1209
      %v1701 = vunpack.c.l.b16 %v1210
      %v1702 = vunpack.c.l.b16 %v1211
      %v1703 = vunpack.c.l.b16 %v1212
      %v1704 = vunpack.c.l.b16 %v1213
      %v1705 = vunpack.c.l.b16 %v1214
      %v1706 = vunpack.c.l.b16 %v1215
      %v1707 = vpack.c.b16 %v1676, %v1675
      %v1708 = vpack.c.b16 %v1678, %v1677
      %v1709 = vpack.c.b16 %v1680, %v1679
      %v1710 = vpack.c.b16 %v1682, %v1681
      %v1711 = vpack.c.b16 %v1684, %v1683
      %v1712 = vpack.c.b16 %v1686, %v1685
      %v1713 = vpack.c.b16 %v1688, %v1687
      %v1714 = vpack.c.b16 %v1690, %v1689
      %v1715 = vpack.c.b16 %v1692, %v1691
      %v1716 = vpack.c.b16 %v1694, %v1693
      %v1717 = vpack.c.b16 %v1696, %v1695
      %v1718 = vpack.c.b16 %v1698, %v1697
      %v1719 = vpack.c.b16 %v1700, %v1699
      %v1720 = vpack.c.b16 %v1702, %v1701
      %v1721 = vpack.c.b16 %v1704, %v1703
      %v1722 = vpack.c.b16 %v1706, %v1705
      %1723 = vrot.lane.b32.xlu0 %v1707, 96
      %v1724 = vpop.permute.xlu0 %1723
      %1725 = vrot.lane.b32.xlu0 %v1708, 96
      %v1726 = vpop.permute.xlu0 %1725
      %1727 = vrot.lane.b32.xlu0 %v1709, 96
      %v1728 = vpop.permute.xlu0 %1727
      %1729 = vrot.lane.b32.xlu0 %v1710, 96
      %v1730 = vpop.permute.xlu0 %1729
      %1731 = vrot.lane.b32.xlu0 %v1711, 96
      %v1732 = vpop.permute.xlu0 %1731
      %1733 = vrot.lane.b32.xlu0 %v1712, 96
      %v1734 = vpop.permute.xlu0 %1733
      %1735 = vrot.lane.b32.xlu0 %v1713, 96
      %v1736 = vpop.permute.xlu0 %1735
      %1737 = vrot.lane.b32.xlu0 %v1714, 96
      %v1738 = vpop.permute.xlu0 %1737
      %1739 = vrot.lane.b32.xlu0 %v1715, 96
      %v1740 = vpop.permute.xlu0 %1739
      %1741 = vrot.lane.b32.xlu0 %v1716, 96
      %v1742 = vpop.permute.xlu0 %1741
      %1743 = vrot.lane.b32.xlu0 %v1717, 96
      %v1744 = vpop.permute.xlu0 %1743
      %1745 = vrot.lane.b32.xlu0 %v1718, 96
      %v1746 = vpop.permute.xlu0 %1745
      %1747 = vrot.lane.b32.xlu0 %v1719, 96
      %v1748 = vpop.permute.xlu0 %1747
      %1749 = vrot.lane.b32.xlu0 %v1720, 96
      %v1750 = vpop.permute.xlu0 %1749
      %1751 = vrot.lane.b32.xlu0 %v1721, 96
      %v1752 = vpop.permute.xlu0 %1751
      %1753 = vrot.lane.b32.xlu0 %v1722, 96
      %v1754 = vpop.permute.xlu0 %1753
      %v1763 = vunpack.c.l.b16 %v1635
      %v1764 = vunpack.c.l.b16 %v1636
      %v1765 = vunpack.c.l.b16 %v1637
      %v1766 = vunpack.c.l.b16 %v1638
      %v1767 = vunpack.c.l.b16 %v1639
      %v1768 = vunpack.c.l.b16 %v1640
      %v1769 = vunpack.c.l.b16 %v1641
      %v1770 = vunpack.c.l.b16 %v1642
      %v1771 = vpack.c.b16 %v1764, %v1763
      %v1772 = vpack.c.b16 %v1766, %v1765
      %v1773 = vpack.c.b16 %v1768, %v1767
      %v1774 = vpack.c.b16 %v1770, %v1769
      %v1780 = vsel %vm389, %v1724, 0
      %v1783 = vsel %vm389, %v1726, 0
      %v1786 = vsel %vm389, %v1728, 0
      %v1789 = vsel %vm389, %v1730, 0
      %v1792 = vsel %vm389, %v1732, 0
      %v1795 = vsel %vm389, %v1734, 0
      %v1798 = vsel %vm389, %v1736, 0
      %v1801 = vsel %vm389, %v1738, 0
      %v1804 = vsel %vm389, %v1740, 0
      %v1807 = vsel %vm389, %v1742, 0
      %v1810 = vsel %vm389, %v1744, 0
      %v1813 = vsel %vm389, %v1746, 0
      %v1816 = vsel %vm389, %v1748, 0
      %v1819 = vsel %vm389, %v1750, 0
      %v1822 = vsel %vm389, %v1752, 0
      %v1825 = vsel %vm389, %v1754, 0
      %1827 = vmatprep.subr.bf16.mxu0 0
      %1828 = vmatpush1.bf16.msra.mxu0 %v1771
      %1829 = vmatprep.subr.bf16.mxu0 0
      %1830 = vmatpush1.bf16.msra.mxu0 %v1772
      %1831 = vmatprep.subr.bf16.mxu0 0
      %1832 = vmatpush1.bf16.msra.mxu0 %v1773
      %1833 = vmatprep.subr.bf16.mxu0 0
      %1834 = vmatpush1.bf16.msra.mxu0 %v1774
      %1835 = vmatprep.subr.bf16.mxu0 0
      %1836 = vmatpush1.bf16.msra.mxu0 0
      %1837 = vmatprep.subr.bf16.mxu0 0
      %1838 = vmatpush1.bf16.msra.mxu0 0
      %1839 = vmatprep.subr.bf16.mxu0 0
      %1840 = vmatpush1.bf16.msra.mxu0 0
      %1841 = vmatprep.subr.bf16.mxu0 0
      %1842 = vmatpush1.bf16.msra.mxu0 0
      %1843 = vmatprep.subr.bf16.mxu0 0
      %1844 = vmatpush1.bf16.msra.mxu0 0
      %1845 = vmatprep.subr.bf16.mxu0 0
      %1846 = vmatpush1.bf16.msra.mxu0 0
      %1847 = vmatprep.subr.bf16.mxu0 0
      %1848 = vmatpush1.bf16.msra.mxu0 0
      %1849 = vmatprep.subr.bf16.mxu0 0
      %1850 = vmatpush1.bf16.msra.mxu0 0
      %1851 = vmatprep.subr.bf16.mxu0 0
      %1852 = vmatpush1.bf16.msra.mxu0 0
      %1853 = vmatprep.subr.bf16.mxu0 0
      %1854 = vmatpush1.bf16.msra.mxu0 0
      %1855 = vmatprep.subr.bf16.mxu0 0
      %1856 = vmatpush1.bf16.msra.mxu0 0
      %1857 = vmatprep.subr.bf16.mxu0 0
      %1858 = vmatpush1.bf16.msra.mxu0 0
      %1859 = vmatprep.mubr.bf16.mxu0 0
      %1860 = vmatmul.mubr.bf16.gmra.mrb[0].mxu0 %v1780
      %v1861 = vpop.f32.mrb[0].mxu0
      %v1862 = vadd.f32 0.0, %v1861
      %v1863 = vpop.f32.mrb[0].mxu0
      %v1864 = vpop.f32.mrb[0].mxu0
      %v1865 = vadd.f32 0.0, %v1864
      %v1866 = vpop.f32.mrb[0].mxu0
      %1867 = vmatprep.mubr.bf16.mxu0 0
      %1868 = vmatmul.mubr.bf16.gmra.mrb[0].mxu0 %v1783
      %v1869 = vpop.f32.mrb[0].mxu0
      %v1870 = vadd.f32 0.0, %v1869
      %v1871 = vpop.f32.mrb[0].mxu0
      %v1872 = vpop.f32.mrb[0].mxu0
      %v1873 = vadd.f32 0.0, %v1872
      %v1874 = vpop.f32.mrb[0].mxu0
      %1875 = vmatprep.mubr.bf16.mxu0 0
      %1876 = vmatmul.mubr.bf16.gmra.mrb[0].mxu0 %v1786
      %v1877 = vpop.f32.mrb[0].mxu0
      %v1878 = vadd.f32 0.0, %v1877
      %v1879 = vpop.f32.mrb[0].mxu0
      %v1880 = vpop.f32.mrb[0].mxu0
      %v1881 = vadd.f32 0.0, %v1880
      %v1882 = vpop.f32.mrb[0].mxu0
      %1883 = vmatprep.mubr.bf16.mxu0 0
      %1884 = vmatmul.mubr.bf16.gmra.mrb[0].mxu0 %v1789
      %v1885 = vpop.f32.mrb[0].mxu0
      %v1886 = vadd.f32 0.0, %v1885
      %v1887 = vpop.f32.mrb[0].mxu0
      %v1888 = vpop.f32.mrb[0].mxu0
      %v1889 = vadd.f32 0.0, %v1888
      %v1890 = vpop.f32.mrb[0].mxu0
      %1891 = vmatprep.mubr.bf16.mxu0 0
      %1892 = vmatmul.mubr.bf16.gmra.mrb[0].mxu0 %v1792
      %v1893 = vpop.f32.mrb[0].mxu0
      %v1894 = vadd.f32 0.0, %v1893
      %v1895 = vpop.f32.mrb[0].mxu0
      %v1896 = vpop.f32.mrb[0].mxu0
      %v1897 = vadd.f32 0.0, %v1896
      %v1898 = vpop.f32.mrb[0].mxu0
      %1899 = vmatprep.mubr.bf16.mxu0 0
      %1900 = vmatmul.mubr.bf16.gmra.mrb[0].mxu0 %v1795
      %v1901 = vpop.f32.mrb[0].mxu0
      %v1902 = vadd.f32 0.0, %v1901
      %v1903 = vpop.f32.mrb[0].mxu0
      %v1904 = vpop.f32.mrb[0].mxu0
      %v1905 = vadd.f32 0.0, %v1904
      %v1906 = vpop.f32.mrb[0].mxu0
      %1907 = vmatprep.mubr.bf16.mxu0 0
      %1908 = vmatmul.mubr.bf16.gmra.mrb[0].mxu0 %v1798
      %v1909 = vpop.f32.mrb[0].mxu0
      %v1910 = vadd.f32 0.0, %v1909
      %v1911 = vpop.f32.mrb[0].mxu0
      %v1912 = vpop.f32.mrb[0].mxu0
      %v1913 = vadd.f32 0.0, %v1912
      %v1914 = vpop.f32.mrb[0].mxu0
      %1915 = vmatprep.mubr.bf16.mxu0 0
      %1916 = vmatmul.mubr.bf16.gmra.mrb[0].mxu0 %v1801
      %v1917 = vpop.f32.mrb[0].mxu0
      %v1918 = vadd.f32 0.0, %v1917
      %v1919 = vpop.f32.mrb[0].mxu0
      %v1920 = vpop.f32.mrb[0].mxu0
      %v1921 = vadd.f32 0.0, %v1920
      %v1922 = vpop.f32.mrb[0].mxu0
      %1923 = vmatprep.mubr.bf16.mxu0 0
      %1924 = vmatmul.mubr.bf16.gmra.mrb[0].mxu0 %v1804
      %v1925 = vpop.f32.mrb[0].mxu0
      %v1926 = vadd.f32 0.0, %v1925
      %v1927 = vpop.f32.mrb[0].mxu0
      %v1928 = vpop.f32.mrb[0].mxu0
      %v1929 = vadd.f32 0.0, %v1928
      %v1930 = vpop.f32.mrb[0].mxu0
      %1931 = vmatprep.mubr.bf16.mxu0 0
      %1932 = vmatmul.mubr.bf16.gmra.mrb[0].mxu0 %v1807
      %v1933 = vpop.f32.mrb[0].mxu0
      %v1934 = vadd.f32 0.0, %v1933
      %v1935 = vpop.f32.mrb[0].mxu0
      %v1936 = vpop.f32.mrb[0].mxu0
      %v1937 = vadd.f32 0.0, %v1936
      %v1938 = vpop.f32.mrb[0].mxu0
      %1939 = vmatprep.mubr.bf16.mxu0 0
      %1940 = vmatmul.mubr.bf16.gmra.mrb[0].mxu0 %v1810
      %v1941 = vpop.f32.mrb[0].mxu0
      %v1942 = vadd.f32 0.0, %v1941
      %v1943 = vpop.f32.mrb[0].mxu0
      %v1944 = vpop.f32.mrb[0].mxu0
      %v1945 = vadd.f32 0.0, %v1944
      %v1946 = vpop.f32.mrb[0].mxu0
      %1947 = vmatprep.mubr.bf16.mxu0 0
      %1948 = vmatmul.mubr.bf16.gmra.mrb[0].mxu0 %v1813
      %v1949 = vpop.f32.mrb[0].mxu0
      %v1950 = vadd.f32 0.0, %v1949
      %v1951 = vpop.f32.mrb[0].mxu0
      %v1952 = vpop.f32.mrb[0].mxu0
      %v1953 = vadd.f32 0.0, %v1952
      %v1954 = vpop.f32.mrb[0].mxu0
      %1955 = vmatprep.mubr.bf16.mxu0 0
      %1956 = vmatmul.mubr.bf16.gmra.mrb[0].mxu0 %v1816
      %v1957 = vpop.f32.mrb[0].mxu0
      %v1958 = vadd.f32 0.0, %v1957
      %v1959 = vpop.f32.mrb[0].mxu0
      %v1960 = vpop.f32.mrb[0].mxu0
      %v1961 = vadd.f32 0.0, %v1960
      %v1962 = vpop.f32.mrb[0].mxu0
      %1963 = vmatprep.mubr.bf16.mxu0 0
      %1964 = vmatmul.mubr.bf16.gmra.mrb[0].mxu0 %v1819
      %v1965 = vpop.f32.mrb[0].mxu0
      %v1966 = vadd.f32 0.0, %v1965
      %v1967 = vpop.f32.mrb[0].mxu0
      %v1968 = vpop.f32.mrb[0].mxu0
      %v1969 = vadd.f32 0.0, %v1968
      %v1970 = vpop.f32.mrb[0].mxu0
      %1971 = vmatprep.mubr.bf16.mxu0 0
      %1972 = vmatmul.mubr.bf16.gmra.mrb[0].mxu0 %v1822
      %v1973 = vpop.f32.mrb[0].mxu0
      %v1974 = vadd.f32 0.0, %v1973
      %v1975 = vpop.f32.mrb[0].mxu0
      %v1976 = vpop.f32.mrb[0].mxu0
      %v1977 = vadd.f32 0.0, %v1976
      %v1978 = vpop.f32.mrb[0].mxu0
      %1979 = vmatprep.mubr.bf16.mxu0 0
      %1980 = vmatmul.mubr.bf16.gmra.mrb[0].mxu0 %v1825
      %v1981 = vpop.f32.mrb[0].mxu0
      %v1982 = vadd.f32 0.0, %v1981
      %v1983 = vpop.f32.mrb[0].mxu0
      %v1984 = vpop.f32.mrb[0].mxu0
      %v1985 = vadd.f32 0.0, %v1984
      %v1986 = vpop.f32.mrb[0].mxu0
      %1987 = vdwg.mxu0
      %v1988 = vadd.f32 %v1602, %v1862
      %v1989 = vadd.f32 %v1603, %v1865
      %v1990 = vadd.f32 %v1604, %v1870
      %v1991 = vadd.f32 %v1605, %v1873
      %v1992 = vadd.f32 %v1606, %v1878
      %v1993 = vadd.f32 %v1607, %v1881
      %v1994 = vadd.f32 %v1608, %v1886
      %v1995 = vadd.f32 %v1609, %v1889
      %v1996 = vadd.f32 %v1610, %v1894
      %v1997 = vadd.f32 %v1611, %v1897
      %v1998 = vadd.f32 %v1612, %v1902
      %v1999 = vadd.f32 %v1613, %v1905
      %v2000 = vadd.f32 %v1614, %v1910
      %v2001 = vadd.f32 %v1615, %v1913
      %v2002 = vadd.f32 %v1616, %v1918
      %v2003 = vadd.f32 %v1617, %v1921
      %v2004 = vadd.f32 %v1618, %v1926
      %v2005 = vadd.f32 %v1619, %v1929
      %v2006 = vadd.f32 %v1620, %v1934
      %v2007 = vadd.f32 %v1621, %v1937
      %v2008 = vadd.f32 %v1622, %v1942
      %v2009 = vadd.f32 %v1623, %v1945
      %v2010 = vadd.f32 %v1624, %v1950
      %v2011 = vadd.f32 %v1625, %v1953
      %v2012 = vadd.f32 %v1626, %v1958
      %v2013 = vadd.f32 %v1627, %v1961
      %v2014 = vadd.f32 %v1628, %v1966
      %v2015 = vadd.f32 %v1629, %v1969
      %v2016 = vadd.f32 %v1630, %v1974
      %v2017 = vadd.f32 %v1631, %v1977
      %v2018 = vadd.f32 %v1632, %v1982
      %v2019 = vadd.f32 %v1633, %v1985
      %2020 = vst.msk [vmem:[#allocation2] sm:$0xff] %vm599, %v1988
      %2021 = vst.msk [vmem:[#allocation2 + $0x8] sm:$0xff] %vm599, %v1989
      %2022 = vst.msk [vmem:[#allocation2 + $0x10] sm:$0xff] %vm599, %v1990
      %2023 = vst.msk [vmem:[#allocation2 + $0x18] sm:$0xff] %vm599, %v1991
      %2024 = vst.msk [vmem:[#allocation2 + $0x20] sm:$0xff] %vm599, %v1992
      %2025 = vst.msk [vmem:[#allocation2 + $0x28] sm:$0xff] %vm599, %v1993
      %2026 = vst.msk [vmem:[#allocation2 + $0x30] sm:$0xff] %vm599, %v1994
      %2027 = vst.msk [vmem:[#allocation2 + $0x38] sm:$0xff] %vm599, %v1995
      %2028 = vst.msk [vmem:[#allocation2 + $0x40] sm:$0xff] %vm599, %v1996
      %2029 = vst.msk [vmem:[#allocation2 + $0x48] sm:$0xff] %vm599, %v1997
      %2030 = vst.msk [vmem:[#allocation2 + $0x50] sm:$0xff] %vm599, %v1998
      %2031 = vst.msk [vmem:[#allocation2 + $0x58] sm:$0xff] %vm599, %v1999
      %2032 = vst.msk [vmem:[#allocation2 + $0x60] sm:$0xff] %vm599, %v2000
      %2033 = vst.msk [vmem:[#allocation2 + $0x68] sm:$0xff] %vm599, %v2001
      %2034 = vst.msk [vmem:[#allocation2 + $0x70] sm:$0xff] %vm599, %v2002
      %2035 = vst.msk [vmem:[#allocation2 + $0x78] sm:$0xff] %vm599, %v2003
      %2036 = vst.msk [vmem:[#allocation2 + $0x80] sm:$0xff] %vm599, %v2004
      %2037 = vst.msk [vmem:[#allocation2 + $0x88] sm:$0xff] %vm599, %v2005
      %2038 = vst.msk [vmem:[#allocation2 + $0x90] sm:$0xff] %vm599, %v2006
      %2039 = vst.msk [vmem:[#allocation2 + $0x98] sm:$0xff] %vm599, %v2007
      %2040 = vst.msk [vmem:[#allocation2 + $0xa0] sm:$0xff] %vm599, %v2008
      %2041 = vst.msk [vmem:[#allocation2 + $0xa8] sm:$0xff] %vm599, %v2009
      %2042 = vst.msk [vmem:[#allocation2 + $0xb0] sm:$0xff] %vm599, %v2010
      %2043 = vst.msk [vmem:[#allocation2 + $0xb8] sm:$0xff] %vm599, %v2011
      %2044 = vst.msk [vmem:[#allocation2 + $0xc0] sm:$0xff] %vm599, %v2012
      %2045 = vst.msk [vmem:[#allocation2 + $0xc8] sm:$0xff] %vm599, %v2013
      %2046 = vst.msk [vmem:[#allocation2 + $0xd0] sm:$0xff] %vm599, %v2014
      %2047 = vst.msk [vmem:[#allocation2 + $0xd8] sm:$0xff] %vm599, %v2015
      %2048 = vst.msk [vmem:[#allocation2 + $0xe0] sm:$0xff] %vm599, %v2016
      %2049 = vst.msk [vmem:[#allocation2 + $0xe8] sm:$0xff] %vm599, %v2017
      %2050 = vst.msk [vmem:[#allocation2 + $0xf0] sm:$0xff] %vm599, %v2018
      %2051 = vst.msk [vmem:[#allocation2 + $0xf8] sm:$0xff] %vm599, %v2019
      %v2052 = vld [vmem:[#allocation2] sm:$0xff]
      %v2053 = vld [vmem:[#allocation2 + $0x8] sm:$0xff]
      %v2054 = vld [vmem:[#allocation2 + $0x10] sm:$0xff]
      %v2055 = vld [vmem:[#allocation2 + $0x18] sm:$0xff]
      %v2056 = vld [vmem:[#allocation2 + $0x20] sm:$0xff]
      %v2057 = vld [vmem:[#allocation2 + $0x28] sm:$0xff]
      %v2058 = vld [vmem:[#allocation2 + $0x30] sm:$0xff]
      %v2059 = vld [vmem:[#allocation2 + $0x38] sm:$0xff]
      %v2060 = vld [vmem:[#allocation2 + $0x40] sm:$0xff]
      %v2061 = vld [vmem:[#allocation2 + $0x48] sm:$0xff]
      %v2062 = vld [vmem:[#allocation2 + $0x50] sm:$0xff]
      %v2063 = vld [vmem:[#allocation2 + $0x58] sm:$0xff]
      %v2064 = vld [vmem:[#allocation2 + $0x60] sm:$0xff]
      %v2065 = vld [vmem:[#allocation2 + $0x68] sm:$0xff]
      %v2066 = vld [vmem:[#allocation2 + $0x70] sm:$0xff]
      %v2067 = vld [vmem:[#allocation2 + $0x78] sm:$0xff]
      %v2068 = vld [vmem:[#allocation2 + $0x80] sm:$0xff]
      %v2069 = vld [vmem:[#allocation2 + $0x88] sm:$0xff]
      %v2070 = vld [vmem:[#allocation2 + $0x90] sm:$0xff]
      %v2071 = vld [vmem:[#allocation2 + $0x98] sm:$0xff]
      %v2072 = vld [vmem:[#allocation2 + $0xa0] sm:$0xff]
      %v2073 = vld [vmem:[#allocation2 + $0xa8] sm:$0xff]
      %v2074 = vld [vmem:[#allocation2 + $0xb0] sm:$0xff]
      %v2075 = vld [vmem:[#allocation2 + $0xb8] sm:$0xff]
      %v2076 = vld [vmem:[#allocation2 + $0xc0] sm:$0xff]
      %v2077 = vld [vmem:[#allocation2 + $0xc8] sm:$0xff]
      %v2078 = vld [vmem:[#allocation2 + $0xd0] sm:$0xff]
      %v2079 = vld [vmem:[#allocation2 + $0xd8] sm:$0xff]
      %v2080 = vld [vmem:[#allocation2 + $0xe0] sm:$0xff]
      %v2081 = vld [vmem:[#allocation2 + $0xe8] sm:$0xff]
      %v2082 = vld [vmem:[#allocation2 + $0xf0] sm:$0xff]
      %v2083 = vld [vmem:[#allocation2 + $0xf8] sm:$0xff]
      %v2084 = vadd.f32 %v2052, %v1086
      %v2085 = vadd.f32 %v2053, %v1086
      %v2086 = vadd.f32 %v2054, %v1086
      %v2087 = vadd.f32 %v2055, %v1086
      %v2088 = vadd.f32 %v2056, %v1086
      %v2089 = vadd.f32 %v2057, %v1086
      %v2090 = vadd.f32 %v2058, %v1086
      %v2091 = vadd.f32 %v2059, %v1086
      %v2092 = vadd.f32 %v2060, %v1086
      %v2093 = vadd.f32 %v2061, %v1086
      %v2094 = vadd.f32 %v2062, %v1086
      %v2095 = vadd.f32 %v2063, %v1086
      %v2096 = vadd.f32 %v2064, %v1086
      %v2097 = vadd.f32 %v2065, %v1086
      %v2098 = vadd.f32 %v2066, %v1086
      %v2099 = vadd.f32 %v2067, %v1086
      %v2100 = vadd.f32 %v2068, %v1086
      %v2101 = vadd.f32 %v2069, %v1086
      %v2102 = vadd.f32 %v2070, %v1086
      %v2103 = vadd.f32 %v2071, %v1086
      %v2104 = vadd.f32 %v2072, %v1086
      %v2105 = vadd.f32 %v2073, %v1086
      %v2106 = vadd.f32 %v2074, %v1086
      %v2107 = vadd.f32 %v2075, %v1086
      %v2108 = vadd.f32 %v2076, %v1086
      %v2109 = vadd.f32 %v2077, %v1086
      %v2110 = vadd.f32 %v2078, %v1086
      %v2111 = vadd.f32 %v2079, %v1086
      %v2112 = vadd.f32 %v2080, %v1086
      %v2113 = vadd.f32 %v2081, %v1086
      %v2114 = vadd.f32 %v2082, %v1086
      %v2115 = vadd.f32 %v2083, %v1086
      %2148 = vrot.lane.b32.xlu0 %v2084, 32
      %v2149 = vpop.permute.xlu0 %2148
      %2150 = vrot.lane.b32.xlu0 %v2085, 32
      %v2151 = vpop.permute.xlu0 %2150
      %2152 = vrot.lane.b32.xlu0 %v2086, 32
      %v2153 = vpop.permute.xlu0 %2152
      %2154 = vrot.lane.b32.xlu0 %v2087, 32
      %v2155 = vpop.permute.xlu0 %2154
      %2156 = vrot.lane.b32.xlu0 %v2088, 32
      %v2157 = vpop.permute.xlu0 %2156
      %2158 = vrot.lane.b32.xlu0 %v2089, 32
      %v2159 = vpop.permute.xlu0 %2158
      %2160 = vrot.lane.b32.xlu0 %v2090, 32
      %v2161 = vpop.permute.xlu0 %2160
      %2162 = vrot.lane.b32.xlu0 %v2091, 32
      %v2163 = vpop.permute.xlu0 %2162
      %2164 = vrot.lane.b32.xlu0 %v2092, 32
      %v2165 = vpop.permute.xlu0 %2164
      %2166 = vrot.lane.b32.xlu0 %v2093, 32
      %v2167 = vpop.permute.xlu0 %2166
      %2168 = vrot.lane.b32.xlu0 %v2094, 32
      %v2169 = vpop.permute.xlu0 %2168
      %2170 = vrot.lane.b32.xlu0 %v2095, 32
      %v2171 = vpop.permute.xlu0 %2170
      %2172 = vrot.lane.b32.xlu0 %v2096, 32
      %v2173 = vpop.permute.xlu0 %2172
      %2174 = vrot.lane.b32.xlu0 %v2097, 32
      %v2175 = vpop.permute.xlu0 %2174
      %2176 = vrot.lane.b32.xlu0 %v2098, 32
      %v2177 = vpop.permute.xlu0 %2176
      %2178 = vrot.lane.b32.xlu0 %v2099, 32
      %v2179 = vpop.permute.xlu0 %2178
      %2180 = vrot.lane.b32.xlu0 %v2100, 32
      %v2181 = vpop.permute.xlu0 %2180
      %2182 = vrot.lane.b32.xlu0 %v2101, 32
      %v2183 = vpop.permute.xlu0 %2182
      %2184 = vrot.lane.b32.xlu0 %v2102, 32
      %v2185 = vpop.permute.xlu0 %2184
      %2186 = vrot.lane.b32.xlu0 %v2103, 32
      %v2187 = vpop.permute.xlu0 %2186
      %2188 = vrot.lane.b32.xlu0 %v2104, 32
      %v2189 = vpop.permute.xlu0 %2188
      %2190 = vrot.lane.b32.xlu0 %v2105, 32
      %v2191 = vpop.permute.xlu0 %2190
      %2192 = vrot.lane.b32.xlu0 %v2106, 32
      %v2193 = vpop.permute.xlu0 %2192
      %2194 = vrot.lane.b32.xlu0 %v2107, 32
      %v2195 = vpop.permute.xlu0 %2194
      %2196 = vrot.lane.b32.xlu0 %v2108, 32
      %v2197 = vpop.permute.xlu0 %2196
      %2198 = vrot.lane.b32.xlu0 %v2109, 32
      %v2199 = vpop.permute.xlu0 %2198
      %2200 = vrot.lane.b32.xlu0 %v2110, 32
      %v2201 = vpop.permute.xlu0 %2200
      %2202 = vrot.lane.b32.xlu0 %v2111, 32
      %v2203 = vpop.permute.xlu0 %2202
      %2204 = vrot.lane.b32.xlu0 %v2112, 32
      %v2205 = vpop.permute.xlu0 %2204
      %2206 = vrot.lane.b32.xlu0 %v2113, 32
      %v2207 = vpop.permute.xlu0 %2206
      %2208 = vrot.lane.b32.xlu0 %v2114, 32
      %v2209 = vpop.permute.xlu0 %2208
      %2210 = vrot.lane.b32.xlu0 %v2115, 32
      %v2211 = vpop.permute.xlu0 %2210
      %vm2244 = vcmask 523520
      %2245 = vst.msk [vmem:[%s208] sm:$0xff] %vm2244, %v2149
      %2246 = vst.msk [vmem:[%s208 + $0x8] sm:$0xff] %vm2244, %v2151
      %2247 = vst.msk [vmem:[%s208 + $0x20] sm:$0xff] %vm2244, %v2153
      %2248 = vst.msk [vmem:[%s208 + $0x28] sm:$0xff] %vm2244, %v2155
      %2249 = vst.msk [vmem:[%s208 + $0x40] sm:$0xff] %vm2244, %v2157
      %2250 = vst.msk [vmem:[%s208 + $0x48] sm:$0xff] %vm2244, %v2159
      %2251 = vst.msk [vmem:[%s208 + $0x60] sm:$0xff] %vm2244, %v2161
      %2252 = vst.msk [vmem:[%s208 + $0x68] sm:$0xff] %vm2244, %v2163
      %2253 = vst.msk [vmem:[%s208 + $0x80] sm:$0xff] %vm2244, %v2165
      %2254 = vst.msk [vmem:[%s208 + $0x88] sm:$0xff] %vm2244, %v2167
      %2255 = vst.msk [vmem:[%s208 + $0xa0] sm:$0xff] %vm2244, %v2169
      %2256 = vst.msk [vmem:[%s208 + $0xa8] sm:$0xff] %vm2244, %v2171
      %2257 = vst.msk [vmem:[%s208 + $0xc0] sm:$0xff] %vm2244, %v2173
      %2258 = vst.msk [vmem:[%s208 + $0xc8] sm:$0xff] %vm2244, %v2175
      %2259 = vst.msk [vmem:[%s208 + $0xe0] sm:$0xff] %vm2244, %v2177
      %2260 = vst.msk [vmem:[%s208 + $0xe8] sm:$0xff] %vm2244, %v2179
      %2261 = vst.msk [vmem:[%s208 + $0x100] sm:$0xff] %vm2244, %v2181
      %2262 = vst.msk [vmem:[%s208 + $0x108] sm:$0xff] %vm2244, %v2183
      %2263 = vst.msk [vmem:[%s208 + $0x120] sm:$0xff] %vm2244, %v2185
      %2264 = vst.msk [vmem:[%s208 + $0x128] sm:$0xff] %vm2244, %v2187
      %2265 = vst.msk [vmem:[%s208 + $0x140] sm:$0xff] %vm2244, %v2189
      %2266 = vst.msk [vmem:[%s208 + $0x148] sm:$0xff] %vm2244, %v2191
      %2267 = vst.msk [vmem:[%s208 + $0x160] sm:$0xff] %vm2244, %v2193
      %2268 = vst.msk [vmem:[%s208 + $0x168] sm:$0xff] %vm2244, %v2195
      %2269 = vst.msk [vmem:[%s208 + $0x180] sm:$0xff] %vm2244, %v2197
      %2270 = vst.msk [vmem:[%s208 + $0x188] sm:$0xff] %vm2244, %v2199
      %2271 = vst.msk [vmem:[%s208 + $0x1a0] sm:$0xff] %vm2244, %v2201
      %2272 = vst.msk [vmem:[%s208 + $0x1a8] sm:$0xff] %vm2244, %v2203
      %2273 = vst.msk [vmem:[%s208 + $0x1c0] sm:$0xff] %vm2244, %v2205
      %2274 = vst.msk [vmem:[%s208 + $0x1c8] sm:$0xff] %vm2244, %v2207
      %2275 = vst.msk [vmem:[%s208 + $0x1e0] sm:$0xff] %vm2244, %v2209
      %2276 = vst.msk [vmem:[%s208 + $0x1e8] sm:$0xff] %vm2244, %v2211
      %v2277 = vld [vmem:[%s244] sm:$0xf]
      %v2278 = vld [vmem:[%s244 + $0x4] sm:$0xf]
      %v2279 = vld [vmem:[%s244 + $0x8] sm:$0xf]
      %v2280 = vld [vmem:[%s244 + $0xc] sm:$0xf]
      %v2281 = vld [vmem:[%s244 + $0x10] sm:$0xf]
      %v2282 = vld [vmem:[%s244 + $0x14] sm:$0xf]
      %v2283 = vld [vmem:[%s244 + $0x18] sm:$0xf]
      %v2284 = vld [vmem:[%s244 + $0x1c] sm:$0xf]
      %v2285 = vld [vmem:[%s244 + $0x20] sm:$0xf]
      %v2286 = vld [vmem:[%s244 + $0x24] sm:$0xf]
      %v2287 = vld [vmem:[%s244 + $0x28] sm:$0xf]
      %v2288 = vld [vmem:[%s244 + $0x2c] sm:$0xf]
      %v2289 = vld [vmem:[%s244 + $0x30] sm:$0xf]
      %v2290 = vld [vmem:[%s244 + $0x34] sm:$0xf]
      %v2291 = vld [vmem:[%s244 + $0x38] sm:$0xf]
      %v2292 = vld [vmem:[%s244 + $0x3c] sm:$0xf]
      %v2293 = vld [vmem:[%s244 + $0x40] sm:$0xf]
      %v2294 = vld [vmem:[%s244 + $0x44] sm:$0xf]
      %v2295 = vld [vmem:[%s244 + $0x48] sm:$0xf]
      %v2296 = vld [vmem:[%s244 + $0x4c] sm:$0xf]
      %v2297 = vld [vmem:[%s244 + $0x50] sm:$0xf]
      %v2298 = vld [vmem:[%s244 + $0x54] sm:$0xf]
      %v2299 = vld [vmem:[%s244 + $0x58] sm:$0xf]
      %v2300 = vld [vmem:[%s244 + $0x5c] sm:$0xf]
      %v2301 = vld [vmem:[%s244 + $0x60] sm:$0xf]
      %v2302 = vld [vmem:[%s244 + $0x64] sm:$0xf]
      %v2303 = vld [vmem:[%s244 + $0x68] sm:$0xf]
      %v2304 = vld [vmem:[%s244 + $0x6c] sm:$0xf]
      %v2305 = vld [vmem:[%s244 + $0x70] sm:$0xf]
      %v2306 = vld [vmem:[%s244 + $0x74] sm:$0xf]
      %v2307 = vld [vmem:[%s244 + $0x78] sm:$0xf]
      %v2308 = vld [vmem:[%s244 + $0x7c] sm:$0xf]
      %s2309 = scalar_lea.vmem %s198, 16
      %v2310 = vld [vmem:[%s2309] sm:$0xf]
      %v2311 = vld [vmem:[%s2309 + $0x4] sm:$0xf]
      %v2312 = vld [vmem:[%s2309 + $0x8] sm:$0xf]
      %v2313 = vld [vmem:[%s2309 + $0xc] sm:$0xf]
      %v2314 = vld [vmem:[%s2309 + $0x10] sm:$0xf]
      %v2315 = vld [vmem:[%s2309 + $0x14] sm:$0xf]
      %v2316 = vld [vmem:[%s2309 + $0x18] sm:$0xf]
      %v2317 = vld [vmem:[%s2309 + $0x1c] sm:$0xf]
      %v2318 = vld [vmem:[%s2309 + $0x20] sm:$0xf]
      %v2319 = vld [vmem:[%s2309 + $0x24] sm:$0xf]
      %v2320 = vld [vmem:[%s2309 + $0x28] sm:$0xf]
      %v2321 = vld [vmem:[%s2309 + $0x2c] sm:$0xf]
      %v2322 = vld [vmem:[%s2309 + $0x30] sm:$0xf]
      %v2323 = vld [vmem:[%s2309 + $0x34] sm:$0xf]
      %v2324 = vld [vmem:[%s2309 + $0x38] sm:$0xf]
      %v2325 = vld [vmem:[%s2309 + $0x3c] sm:$0xf]
      %v2326 = vld [vmem:[%s2309 + $0x40] sm:$0xf]
      %v2327 = vld [vmem:[%s2309 + $0x44] sm:$0xf]
      %v2328 = vld [vmem:[%s2309 + $0x48] sm:$0xf]
      %v2329 = vld [vmem:[%s2309 + $0x4c] sm:$0xf]
      %v2330 = vld [vmem:[%s2309 + $0x50] sm:$0xf]
      %v2331 = vld [vmem:[%s2309 + $0x54] sm:$0xf]
      %v2332 = vld [vmem:[%s2309 + $0x58] sm:$0xf]
      %v2333 = vld [vmem:[%s2309 + $0x5c] sm:$0xf]
      %v2334 = vld [vmem:[%s2309 + $0x60] sm:$0xf]
      %v2335 = vld [vmem:[%s2309 + $0x64] sm:$0xf]
      %v2336 = vld [vmem:[%s2309 + $0x68] sm:$0xf]
      %v2337 = vld [vmem:[%s2309 + $0x6c] sm:$0xf]
      %v2338 = vld [vmem:[%s2309 + $0x70] sm:$0xf]
      %v2339 = vld [vmem:[%s2309 + $0x74] sm:$0xf]
      %v2340 = vld [vmem:[%s2309 + $0x78] sm:$0xf]
      %v2341 = vld [vmem:[%s2309 + $0x7c] sm:$0xf]
      %s2342 = scalar_lea.vmem %s1, 128
      %v2343 = vld [vmem:[%s2342] sm:$0xf]
      %v2344 = vld [vmem:[%s2342 + $0x4] sm:$0xf]
      %v2345 = vld [vmem:[%s2342 + $0x8] sm:$0xf]
      %v2346 = vld [vmem:[%s2342 + $0xc] sm:$0xf]
      %v2347 = vld [vmem:[%s2342 + $0x10] sm:$0xf]
      %v2348 = vld [vmem:[%s2342 + $0x14] sm:$0xf]
      %v2349 = vld [vmem:[%s2342 + $0x18] sm:$0xf]
      %v2350 = vld [vmem:[%s2342 + $0x1c] sm:$0xf]
      %v2383 = vunpack.c.l.b16 %v2277
      %v2384 = vunpack.c.l.b16 %v2278
      %v2385 = vunpack.c.l.b16 %v2279
      %v2386 = vunpack.c.l.b16 %v2280
      %v2387 = vunpack.c.l.b16 %v2281
      %v2388 = vunpack.c.l.b16 %v2282
      %v2389 = vunpack.c.l.b16 %v2283
      %v2390 = vunpack.c.l.b16 %v2284
      %v2391 = vunpack.c.l.b16 %v2285
      %v2392 = vunpack.c.l.b16 %v2286
      %v2393 = vunpack.c.l.b16 %v2287
      %v2394 = vunpack.c.l.b16 %v2288
      %v2395 = vunpack.c.l.b16 %v2289
      %v2396 = vunpack.c.l.b16 %v2290
      %v2397 = vunpack.c.l.b16 %v2291
      %v2398 = vunpack.c.l.b16 %v2292
      %v2399 = vunpack.c.l.b16 %v2293
      %v2400 = vunpack.c.l.b16 %v2294
      %v2401 = vunpack.c.l.b16 %v2295
      %v2402 = vunpack.c.l.b16 %v2296
      %v2403 = vunpack.c.l.b16 %v2297
      %v2404 = vunpack.c.l.b16 %v2298
      %v2405 = vunpack.c.l.b16 %v2299
      %v2406 = vunpack.c.l.b16 %v2300
      %v2407 = vunpack.c.l.b16 %v2301
      %v2408 = vunpack.c.l.b16 %v2302
      %v2409 = vunpack.c.l.b16 %v2303
      %v2410 = vunpack.c.l.b16 %v2304
      %v2411 = vunpack.c.l.b16 %v2305
      %v2412 = vunpack.c.l.b16 %v2306
      %v2413 = vunpack.c.l.b16 %v2307
      %v2414 = vunpack.c.l.b16 %v2308
      %v2415 = vpack.c.b16 %v2384, %v2383
      %v2416 = vpack.c.b16 %v2386, %v2385
      %v2417 = vpack.c.b16 %v2388, %v2387
      %v2418 = vpack.c.b16 %v2390, %v2389
      %v2419 = vpack.c.b16 %v2392, %v2391
      %v2420 = vpack.c.b16 %v2394, %v2393
      %v2421 = vpack.c.b16 %v2396, %v2395
      %v2422 = vpack.c.b16 %v2398, %v2397
      %v2423 = vpack.c.b16 %v2400, %v2399
      %v2424 = vpack.c.b16 %v2402, %v2401
      %v2425 = vpack.c.b16 %v2404, %v2403
      %v2426 = vpack.c.b16 %v2406, %v2405
      %v2427 = vpack.c.b16 %v2408, %v2407
      %v2428 = vpack.c.b16 %v2410, %v2409
      %v2429 = vpack.c.b16 %v2412, %v2411
      %v2430 = vpack.c.b16 %v2414, %v2413
      %v2439 = vunpack.c.l.b16 %v2343
      %v2440 = vunpack.c.l.b16 %v2344
      %v2441 = vunpack.c.l.b16 %v2345
      %v2442 = vunpack.c.l.b16 %v2346
      %v2443 = vunpack.c.l.b16 %v2347
      %v2444 = vunpack.c.l.b16 %v2348
      %v2445 = vunpack.c.l.b16 %v2349
      %v2446 = vunpack.c.l.b16 %v2350
      %v2447 = vpack.c.b16 %v2440, %v2439
      %v2448 = vpack.c.b16 %v2442, %v2441
      %v2449 = vpack.c.b16 %v2444, %v2443
      %v2450 = vpack.c.b16 %v2446, %v2445
      %v2456 = vsel %vm389, %v2415, 0
      %v2459 = vsel %vm389, %v2416, 0
      %v2462 = vsel %vm389, %v2417, 0
      %v2465 = vsel %vm389, %v2418, 0
      %v2468 = vsel %vm389, %v2419, 0
      %v2471 = vsel %vm389, %v2420, 0
      %v2474 = vsel %vm389, %v2421, 0
      %v2477 = vsel %vm389, %v2422, 0
      %v2480 = vsel %vm389, %v2423, 0
      %v2483 = vsel %vm389, %v2424, 0
      %v2486 = vsel %vm389, %v2425, 0
      %v2489 = vsel %vm389, %v2426, 0
      %v2492 = vsel %vm389, %v2427, 0
      %v2495 = vsel %vm389, %v2428, 0
      %v2498 = vsel %vm389, %v2429, 0
      %v2501 = vsel %vm389, %v2430, 0
      %2503 = vmatprep.subr.bf16.mxu0 0
      %2504 = vmatpush1.bf16.msra.mxu0 %v2447
      %2505 = vmatprep.subr.bf16.mxu0 0
      %2506 = vmatpush1.bf16.msra.mxu0 %v2448
      %2507 = vmatprep.subr.bf16.mxu0 0
      %2508 = vmatpush1.bf16.msra.mxu0 %v2449
      %2509 = vmatprep.subr.bf16.mxu0 0
      %2510 = vmatpush1.bf16.msra.mxu0 %v2450
      %2511 = vmatprep.subr.bf16.mxu0 0
      %2512 = vmatpush1.bf16.msra.mxu0 0
      %2513 = vmatprep.subr.bf16.mxu0 0
      %2514 = vmatpush1.bf16.msra.mxu0 0
      %2515 = vmatprep.subr.bf16.mxu0 0
      %2516 = vmatpush1.bf16.msra.mxu0 0
      %2517 = vmatprep.subr.bf16.mxu0 0
      %2518 = vmatpush1.bf16.msra.mxu0 0
      %2519 = vmatprep.subr.bf16.mxu0 0
      %2520 = vmatpush1.bf16.msra.mxu0 0
      %2521 = vmatprep.subr.bf16.mxu0 0
      %2522 = vmatpush1.bf16.msra.mxu0 0
      %2523 = vmatprep.subr.bf16.mxu0 0
      %2524 = vmatpush1.bf16.msra.mxu0 0
      %2525 = vmatprep.subr.bf16.mxu0 0
      %2526 = vmatpush1.bf16.msra.mxu0 0
      %2527 = vmatprep.subr.bf16.mxu0 0
      %2528 = vmatpush1.bf16.msra.mxu0 0
      %2529 = vmatprep.subr.bf16.mxu0 0
      %2530 = vmatpush1.bf16.msra.mxu0 0
      %2531 = vmatprep.subr.bf16.mxu0 0
      %2532 = vmatpush1.bf16.msra.mxu0 0
      %2533 = vmatprep.subr.bf16.mxu0 0
      %2534 = vmatpush1.bf16.msra.mxu0 0
      %2535 = vmatprep.mubr.bf16.mxu0 0
      %2536 = vmatmul.mubr.bf16.gmra.mrb[0].mxu0 %v2456
      %v2537 = vpop.f32.mrb[0].mxu0
      %v2538 = vadd.f32 0.0, %v2537
      %v2539 = vpop.f32.mrb[0].mxu0
      %v2540 = vpop.f32.mrb[0].mxu0
      %v2541 = vadd.f32 0.0, %v2540
      %v2542 = vpop.f32.mrb[0].mxu0
      %2543 = vmatprep.mubr.bf16.mxu0 0
      %2544 = vmatmul.mubr.bf16.gmra.mrb[0].mxu0 %v2459
      %v2545 = vpop.f32.mrb[0].mxu0
      %v2546 = vadd.f32 0.0, %v2545
      %v2547 = vpop.f32.mrb[0].mxu0
      %v2548 = vpop.f32.mrb[0].mxu0
      %v2549 = vadd.f32 0.0, %v2548
      %v2550 = vpop.f32.mrb[0].mxu0
      %2551 = vmatprep.mubr.bf16.mxu0 0
      %2552 = vmatmul.mubr.bf16.gmra.mrb[0].mxu0 %v2462
      %v2553 = vpop.f32.mrb[0].mxu0
      %v2554 = vadd.f32 0.0, %v2553
      %v2555 = vpop.f32.mrb[0].mxu0
      %v2556 = vpop.f32.mrb[0].mxu0
      %v2557 = vadd.f32 0.0, %v2556
      %v2558 = vpop.f32.mrb[0].mxu0
      %2559 = vmatprep.mubr.bf16.mxu0 0
      %2560 = vmatmul.mubr.bf16.gmra.mrb[0].mxu0 %v2465
      %v2561 = vpop.f32.mrb[0].mxu0
      %v2562 = vadd.f32 0.0, %v2561
      %v2563 = vpop.f32.mrb[0].mxu0
      %v2564 = vpop.f32.mrb[0].mxu0
      %v2565 = vadd.f32 0.0, %v2564
      %v2566 = vpop.f32.mrb[0].mxu0
      %2567 = vmatprep.mubr.bf16.mxu0 0
      %2568 = vmatmul.mubr.bf16.gmra.mrb[0].mxu0 %v2468
      %v2569 = vpop.f32.mrb[0].mxu0
      %v2570 = vadd.f32 0.0, %v2569
      %v2571 = vpop.f32.mrb[0].mxu0
      %v2572 = vpop.f32.mrb[0].mxu0
      %v2573 = vadd.f32 0.0, %v2572
      %v2574 = vpop.f32.mrb[0].mxu0
      %2575 = vmatprep.mubr.bf16.mxu0 0
      %2576 = vmatmul.mubr.bf16.gmra.mrb[0].mxu0 %v2471
      %v2577 = vpop.f32.mrb[0].mxu0
      %v2578 = vadd.f32 0.0, %v2577
      %v2579 = vpop.f32.mrb[0].mxu0
      %v2580 = vpop.f32.mrb[0].mxu0
      %v2581 = vadd.f32 0.0, %v2580
      %v2582 = vpop.f32.mrb[0].mxu0
      %2583 = vmatprep.mubr.bf16.mxu0 0
      %2584 = vmatmul.mubr.bf16.gmra.mrb[0].mxu0 %v2474
      %v2585 = vpop.f32.mrb[0].mxu0
      %v2586 = vadd.f32 0.0, %v2585
      %v2587 = vpop.f32.mrb[0].mxu0
      %v2588 = vpop.f32.mrb[0].mxu0
      %v2589 = vadd.f32 0.0, %v2588
      %v2590 = vpop.f32.mrb[0].mxu0
      %2591 = vmatprep.mubr.bf16.mxu0 0
      %2592 = vmatmul.mubr.bf16.gmra.mrb[0].mxu0 %v2477
      %v2593 = vpop.f32.mrb[0].mxu0
      %v2594 = vadd.f32 0.0, %v2593
      %v2595 = vpop.f32.mrb[0].mxu0
      %v2596 = vpop.f32.mrb[0].mxu0
      %v2597 = vadd.f32 0.0, %v2596
      %v2598 = vpop.f32.mrb[0].mxu0
      %2599 = vmatprep.mubr.bf16.mxu0 0
      %2600 = vmatmul.mubr.bf16.gmra.mrb[0].mxu0 %v2480
      %v2601 = vpop.f32.mrb[0].mxu0
      %v2602 = vadd.f32 0.0, %v2601
      %v2603 = vpop.f32.mrb[0].mxu0
      %v2604 = vpop.f32.mrb[0].mxu0
      %v2605 = vadd.f32 0.0, %v2604
      %v2606 = vpop.f32.mrb[0].mxu0
      %2607 = vmatprep.mubr.bf16.mxu0 0
      %2608 = vmatmul.mubr.bf16.gmra.mrb[0].mxu0 %v2483
      %v2609 = vpop.f32.mrb[0].mxu0
      %v2610 = vadd.f32 0.0, %v2609
      %v2611 = vpop.f32.mrb[0].mxu0
      %v2612 = vpop.f32.mrb[0].mxu0
      %v2613 = vadd.f32 0.0, %v2612
      %v2614 = vpop.f32.mrb[0].mxu0
      %2615 = vmatprep.mubr.bf16.mxu0 0
      %2616 = vmatmul.mubr.bf16.gmra.mrb[0].mxu0 %v2486
      %v2617 = vpop.f32.mrb[0].mxu0
      %v2618 = vadd.f32 0.0, %v2617
      %v2619 = vpop.f32.mrb[0].mxu0
      %v2620 = vpop.f32.mrb[0].mxu0
      %v2621 = vadd.f32 0.0, %v2620
      %v2622 = vpop.f32.mrb[0].mxu0
      %2623 = vmatprep.mubr.bf16.mxu0 0
      %2624 = vmatmul.mubr.bf16.gmra.mrb[0].mxu0 %v2489
      %v2625 = vpop.f32.mrb[0].mxu0
      %v2626 = vadd.f32 0.0, %v2625
      %v2627 = vpop.f32.mrb[0].mxu0
      %v2628 = vpop.f32.mrb[0].mxu0
      %v2629 = vadd.f32 0.0, %v2628
      %v2630 = vpop.f32.mrb[0].mxu0
      %2631 = vmatprep.mubr.bf16.mxu0 0
      %2632 = vmatmul.mubr.bf16.gmra.mrb[0].mxu0 %v2492
      %v2633 = vpop.f32.mrb[0].mxu0
      %v2634 = vadd.f32 0.0, %v2633
      %v2635 = vpop.f32.mrb[0].mxu0
      %v2636 = vpop.f32.mrb[0].mxu0
      %v2637 = vadd.f32 0.0, %v2636
      %v2638 = vpop.f32.mrb[0].mxu0
      %2639 = vmatprep.mubr.bf16.mxu0 0
      %2640 = vmatmul.mubr.bf16.gmra.mrb[0].mxu0 %v2495
      %v2641 = vpop.f32.mrb[0].mxu0
      %v2642 = vadd.f32 0.0, %v2641
      %v2643 = vpop.f32.mrb[0].mxu0
      %v2644 = vpop.f32.mrb[0].mxu0
      %v2645 = vadd.f32 0.0, %v2644
      %v2646 = vpop.f32.mrb[0].mxu0
      %2647 = vmatprep.mubr.bf16.mxu0 0
      %2648 = vmatmul.mubr.bf16.gmra.mrb[0].mxu0 %v2498
      %v2649 = vpop.f32.mrb[0].mxu0
      %v2650 = vadd.f32 0.0, %v2649
      %v2651 = vpop.f32.mrb[0].mxu0
      %v2652 = vpop.f32.mrb[0].mxu0
      %v2653 = vadd.f32 0.0, %v2652
      %v2654 = vpop.f32.mrb[0].mxu0
      %2655 = vmatprep.mubr.bf16.mxu0 0
      %2656 = vmatmul.mubr.bf16.gmra.mrb[0].mxu0 %v2501
      %v2657 = vpop.f32.mrb[0].mxu0
      %v2658 = vadd.f32 0.0, %v2657
      %v2659 = vpop.f32.mrb[0].mxu0
      %v2660 = vpop.f32.mrb[0].mxu0
      %v2661 = vadd.f32 0.0, %v2660
      %v2662 = vpop.f32.mrb[0].mxu0
      %2663 = vdwg.mxu0
      %2664 = vst.msk [vmem:[#allocation2] sm:$0xff] %vm599, %v2538
      %2665 = vst.msk [vmem:[#allocation2 + $0x8] sm:$0xff] %vm599, %v2541
      %2666 = vst.msk [vmem:[#allocation2 + $0x10] sm:$0xff] %vm599, %v2546
      %2667 = vst.msk [vmem:[#allocation2 + $0x18] sm:$0xff] %vm599, %v2549
      %2668 = vst.msk [vmem:[#allocation2 + $0x20] sm:$0xff] %vm599, %v2554
      %2669 = vst.msk [vmem:[#allocation2 + $0x28] sm:$0xff] %vm599, %v2557
      %2670 = vst.msk [vmem:[#allocation2 + $0x30] sm:$0xff] %vm599, %v2562
      %2671 = vst.msk [vmem:[#allocation2 + $0x38] sm:$0xff] %vm599, %v2565
      %2672 = vst.msk [vmem:[#allocation2 + $0x40] sm:$0xff] %vm599, %v2570
      %2673 = vst.msk [vmem:[#allocation2 + $0x48] sm:$0xff] %vm599, %v2573
      %2674 = vst.msk [vmem:[#allocation2 + $0x50] sm:$0xff] %vm599, %v2578
      %2675 = vst.msk [vmem:[#allocation2 + $0x58] sm:$0xff] %vm599, %v2581
      %2676 = vst.msk [vmem:[#allocation2 + $0x60] sm:$0xff] %vm599, %v2586
      %2677 = vst.msk [vmem:[#allocation2 + $0x68] sm:$0xff] %vm599, %v2589
      %2678 = vst.msk [vmem:[#allocation2 + $0x70] sm:$0xff] %vm599, %v2594
      %2679 = vst.msk [vmem:[#allocation2 + $0x78] sm:$0xff] %vm599, %v2597
      %2680 = vst.msk [vmem:[#allocation2 + $0x80] sm:$0xff] %vm599, %v2602
      %2681 = vst.msk [vmem:[#allocation2 + $0x88] sm:$0xff] %vm599, %v2605
      %2682 = vst.msk [vmem:[#allocation2 + $0x90] sm:$0xff] %vm599, %v2610
      %2683 = vst.msk [vmem:[#allocation2 + $0x98] sm:$0xff] %vm599, %v2613
      %2684 = vst.msk [vmem:[#allocation2 + $0xa0] sm:$0xff] %vm599, %v2618
      %2685 = vst.msk [vmem:[#allocation2 + $0xa8] sm:$0xff] %vm599, %v2621
      %2686 = vst.msk [vmem:[#allocation2 + $0xb0] sm:$0xff] %vm599, %v2626
      %2687 = vst.msk [vmem:[#allocation2 + $0xb8] sm:$0xff] %vm599, %v2629
      %2688 = vst.msk [vmem:[#allocation2 + $0xc0] sm:$0xff] %vm599, %v2634
      %2689 = vst.msk [vmem:[#allocation2 + $0xc8] sm:$0xff] %vm599, %v2637
      %2690 = vst.msk [vmem:[#allocation2 + $0xd0] sm:$0xff] %vm599, %v2642
      %2691 = vst.msk [vmem:[#allocation2 + $0xd8] sm:$0xff] %vm599, %v2645
      %2692 = vst.msk [vmem:[#allocation2 + $0xe0] sm:$0xff] %vm599, %v2650
      %2693 = vst.msk [vmem:[#allocation2 + $0xe8] sm:$0xff] %vm599, %v2653
      %2694 = vst.msk [vmem:[#allocation2 + $0xf0] sm:$0xff] %vm599, %v2658
      %2695 = vst.msk [vmem:[#allocation2 + $0xf8] sm:$0xff] %vm599, %v2661
      %v2696 = vld [vmem:[#allocation2] sm:$0xff]
      %v2697 = vld [vmem:[#allocation2 + $0x8] sm:$0xff]
      %v2698 = vld [vmem:[#allocation2 + $0x10] sm:$0xff]
      %v2699 = vld [vmem:[#allocation2 + $0x18] sm:$0xff]
      %v2700 = vld [vmem:[#allocation2 + $0x20] sm:$0xff]
      %v2701 = vld [vmem:[#allocation2 + $0x28] sm:$0xff]
      %v2702 = vld [vmem:[#allocation2 + $0x30] sm:$0xff]
      %v2703 = vld [vmem:[#allocation2 + $0x38] sm:$0xff]
      %v2704 = vld [vmem:[#allocation2 + $0x40] sm:$0xff]
      %v2705 = vld [vmem:[#allocation2 + $0x48] sm:$0xff]
      %v2706 = vld [vmem:[#allocation2 + $0x50] sm:$0xff]
      %v2707 = vld [vmem:[#allocation2 + $0x58] sm:$0xff]
      %v2708 = vld [vmem:[#allocation2 + $0x60] sm:$0xff]
      %v2709 = vld [vmem:[#allocation2 + $0x68] sm:$0xff]
      %v2710 = vld [vmem:[#allocation2 + $0x70] sm:$0xff]
      %v2711 = vld [vmem:[#allocation2 + $0x78] sm:$0xff]
      %v2712 = vld [vmem:[#allocation2 + $0x80] sm:$0xff]
      %v2713 = vld [vmem:[#allocation2 + $0x88] sm:$0xff]
      %v2714 = vld [vmem:[#allocation2 + $0x90] sm:$0xff]
      %v2715 = vld [vmem:[#allocation2 + $0x98] sm:$0xff]
      %v2716 = vld [vmem:[#allocation2 + $0xa0] sm:$0xff]
      %v2717 = vld [vmem:[#allocation2 + $0xa8] sm:$0xff]
      %v2718 = vld [vmem:[#allocation2 + $0xb0] sm:$0xff]
      %v2719 = vld [vmem:[#allocation2 + $0xb8] sm:$0xff]
      %v2720 = vld [vmem:[#allocation2 + $0xc0] sm:$0xff]
      %v2721 = vld [vmem:[#allocation2 + $0xc8] sm:$0xff]
      %v2722 = vld [vmem:[#allocation2 + $0xd0] sm:$0xff]
      %v2723 = vld [vmem:[#allocation2 + $0xd8] sm:$0xff]
      %v2724 = vld [vmem:[#allocation2 + $0xe0] sm:$0xff]
      %v2725 = vld [vmem:[#allocation2 + $0xe8] sm:$0xff]
      %v2726 = vld [vmem:[#allocation2 + $0xf0] sm:$0xff]
      %v2727 = vld [vmem:[#allocation2 + $0xf8] sm:$0xff]
      %s2728 = scalar_lea.vmem %s1, 160
      %v2729 = vld [vmem:[%s2728] sm:$0xf]
      %v2730 = vld [vmem:[%s2728 + $0x4] sm:$0xf]
      %v2731 = vld [vmem:[%s2728 + $0x8] sm:$0xf]
      %v2732 = vld [vmem:[%s2728 + $0xc] sm:$0xf]
      %v2733 = vld [vmem:[%s2728 + $0x10] sm:$0xf]
      %v2734 = vld [vmem:[%s2728 + $0x14] sm:$0xf]
      %v2735 = vld [vmem:[%s2728 + $0x18] sm:$0xf]
      %v2736 = vld [vmem:[%s2728 + $0x1c] sm:$0xf]
      %v2769 = vunpack.c.l.b16 %v2310
      %v2770 = vunpack.c.l.b16 %v2311
      %v2771 = vunpack.c.l.b16 %v2312
      %v2772 = vunpack.c.l.b16 %v2313
      %v2773 = vunpack.c.l.b16 %v2314
      %v2774 = vunpack.c.l.b16 %v2315
      %v2775 = vunpack.c.l.b16 %v2316
      %v2776 = vunpack.c.l.b16 %v2317
      %v2777 = vunpack.c.l.b16 %v2318
      %v2778 = vunpack.c.l.b16 %v2319
      %v2779 = vunpack.c.l.b16 %v2320
      %v2780 = vunpack.c.l.b16 %v2321
      %v2781 = vunpack.c.l.b16 %v2322
      %v2782 = vunpack.c.l.b16 %v2323
      %v2783 = vunpack.c.l.b16 %v2324
      %v2784 = vunpack.c.l.b16 %v2325
      %v2785 = vunpack.c.l.b16 %v2326
      %v2786 = vunpack.c.l.b16 %v2327
      %v2787 = vunpack.c.l.b16 %v2328
      %v2788 = vunpack.c.l.b16 %v2329
      %v2789 = vunpack.c.l.b16 %v2330
      %v2790 = vunpack.c.l.b16 %v2331
      %v2791 = vunpack.c.l.b16 %v2332
      %v2792 = vunpack.c.l.b16 %v2333
      %v2793 = vunpack.c.l.b16 %v2334
      %v2794 = vunpack.c.l.b16 %v2335
      %v2795 = vunpack.c.l.b16 %v2336
      %v2796 = vunpack.c.l.b16 %v2337
      %v2797 = vunpack.c.l.b16 %v2338
      %v2798 = vunpack.c.l.b16 %v2339
      %v2799 = vunpack.c.l.b16 %v2340
      %v2800 = vunpack.c.l.b16 %v2341
      %v2801 = vpack.c.b16 %v2770, %v2769
      %v2802 = vpack.c.b16 %v2772, %v2771
      %v2803 = vpack.c.b16 %v2774, %v2773
      %v2804 = vpack.c.b16 %v2776, %v2775
      %v2805 = vpack.c.b16 %v2778, %v2777
      %v2806 = vpack.c.b16 %v2780, %v2779
      %v2807 = vpack.c.b16 %v2782, %v2781
      %v2808 = vpack.c.b16 %v2784, %v2783
      %v2809 = vpack.c.b16 %v2786, %v2785
      %v2810 = vpack.c.b16 %v2788, %v2787
      %v2811 = vpack.c.b16 %v2790, %v2789
      %v2812 = vpack.c.b16 %v2792, %v2791
      %v2813 = vpack.c.b16 %v2794, %v2793
      %v2814 = vpack.c.b16 %v2796, %v2795
      %v2815 = vpack.c.b16 %v2798, %v2797
      %v2816 = vpack.c.b16 %v2800, %v2799
      %v2825 = vunpack.c.l.b16 %v2729
      %v2826 = vunpack.c.l.b16 %v2730
      %v2827 = vunpack.c.l.b16 %v2731
      %v2828 = vunpack.c.l.b16 %v2732
      %v2829 = vunpack.c.l.b16 %v2733
      %v2830 = vunpack.c.l.b16 %v2734
      %v2831 = vunpack.c.l.b16 %v2735
      %v2832 = vunpack.c.l.b16 %v2736
      %v2833 = vpack.c.b16 %v2826, %v2825
      %v2834 = vpack.c.b16 %v2828, %v2827
      %v2835 = vpack.c.b16 %v2830, %v2829
      %v2836 = vpack.c.b16 %v2832, %v2831
      %v2842 = vsel %vm389, %v2801, 0
      %v2845 = vsel %vm389, %v2802, 0
      %v2848 = vsel %vm389, %v2803, 0
      %v2851 = vsel %vm389, %v2804, 0
      %v2854 = vsel %vm389, %v2805, 0
      %v2857 = vsel %vm389, %v2806, 0
      %v2860 = vsel %vm389, %v2807, 0
      %v2863 = vsel %vm389, %v2808, 0
      %v2866 = vsel %vm389, %v2809, 0
      %v2869 = vsel %vm389, %v2810, 0
      %v2872 = vsel %vm389, %v2811, 0
      %v2875 = vsel %vm389, %v2812, 0
      %v2878 = vsel %vm389, %v2813, 0
      %v2881 = vsel %vm389, %v2814, 0
      %v2884 = vsel %vm389, %v2815, 0
      %v2887 = vsel %vm389, %v2816, 0
      %2889 = vmatprep.subr.bf16.mxu0 0
      %2890 = vmatpush1.bf16.msra.mxu0 %v2833
      %2891 = vmatprep.subr.bf16.mxu0 0
      %2892 = vmatpush1.bf16.msra.mxu0 %v2834
      %2893 = vmatprep.subr.bf16.mxu0 0
      %2894 = vmatpush1.bf16.msra.mxu0 %v2835
      %2895 = vmatprep.subr.bf16.mxu0 0
      %2896 = vmatpush1.bf16.msra.mxu0 %v2836
      %2897 = vmatprep.subr.bf16.mxu0 0
      %2898 = vmatpush1.bf16.msra.mxu0 0
      %2899 = vmatprep.subr.bf16.mxu0 0
      %2900 = vmatpush1.bf16.msra.mxu0 0
      %2901 = vmatprep.subr.bf16.mxu0 0
      %2902 = vmatpush1.bf16.msra.mxu0 0
      %2903 = vmatprep.subr.bf16.mxu0 0
      %2904 = vmatpush1.bf16.msra.mxu0 0
      %2905 = vmatprep.subr.bf16.mxu0 0
      %2906 = vmatpush1.bf16.msra.mxu0 0
      %2907 = vmatprep.subr.bf16.mxu0 0
      %2908 = vmatpush1.bf16.msra.mxu0 0
      %2909 = vmatprep.subr.bf16.mxu0 0
      %2910 = vmatpush1.bf16.msra.mxu0 0
      %2911 = vmatprep.subr.bf16.mxu0 0
      %2912 = vmatpush1.bf16.msra.mxu0 0
      %2913 = vmatprep.subr.bf16.mxu0 0
      %2914 = vmatpush1.bf16.msra.mxu0 0
      %2915 = vmatprep.subr.bf16.mxu0 0
      %2916 = vmatpush1.bf16.msra.mxu0 0
      %2917 = vmatprep.subr.bf16.mxu0 0
      %2918 = vmatpush1.bf16.msra.mxu0 0
      %2919 = vmatprep.subr.bf16.mxu0 0
      %2920 = vmatpush1.bf16.msra.mxu0 0
      %2921 = vmatprep.mubr.bf16.mxu0 0
      %2922 = vmatmul.mubr.bf16.gmra.mrb[0].mxu0 %v2842
      %v2923 = vpop.f32.mrb[0].mxu0
      %v2924 = vadd.f32 0.0, %v2923
      %v2925 = vpop.f32.mrb[0].mxu0
      %v2926 = vpop.f32.mrb[0].mxu0
      %v2927 = vadd.f32 0.0, %v2926
      %v2928 = vpop.f32.mrb[0].mxu0
      %2929 = vmatprep.mubr.bf16.mxu0 0
      %2930 = vmatmul.mubr.bf16.gmra.mrb[0].mxu0 %v2845
      %v2931 = vpop.f32.mrb[0].mxu0
      %v2932 = vadd.f32 0.0, %v2931
      %v2933 = vpop.f32.mrb[0].mxu0
      %v2934 = vpop.f32.mrb[0].mxu0
      %v2935 = vadd.f32 0.0, %v2934
      %v2936 = vpop.f32.mrb[0].mxu0
      %2937 = vmatprep.mubr.bf16.mxu0 0
      %2938 = vmatmul.mubr.bf16.gmra.mrb[0].mxu0 %v2848
      %v2939 = vpop.f32.mrb[0].mxu0
      %v2940 = vadd.f32 0.0, %v2939
      %v2941 = vpop.f32.mrb[0].mxu0
      %v2942 = vpop.f32.mrb[0].mxu0
      %v2943 = vadd.f32 0.0, %v2942
      %v2944 = vpop.f32.mrb[0].mxu0
      %2945 = vmatprep.mubr.bf16.mxu0 0
      %2946 = vmatmul.mubr.bf16.gmra.mrb[0].mxu0 %v2851
      %v2947 = vpop.f32.mrb[0].mxu0
      %v2948 = vadd.f32 0.0, %v2947
      %v2949 = vpop.f32.mrb[0].mxu0
      %v2950 = vpop.f32.mrb[0].mxu0
      %v2951 = vadd.f32 0.0, %v2950
      %v2952 = vpop.f32.mrb[0].mxu0
      %2953 = vmatprep.mubr.bf16.mxu0 0
      %2954 = vmatmul.mubr.bf16.gmra.mrb[0].mxu0 %v2854
      %v2955 = vpop.f32.mrb[0].mxu0
      %v2956 = vadd.f32 0.0, %v2955
      %v2957 = vpop.f32.mrb[0].mxu0
      %v2958 = vpop.f32.mrb[0].mxu0
      %v2959 = vadd.f32 0.0, %v2958
      %v2960 = vpop.f32.mrb[0].mxu0
      %2961 = vmatprep.mubr.bf16.mxu0 0
      %2962 = vmatmul.mubr.bf16.gmra.mrb[0].mxu0 %v2857
      %v2963 = vpop.f32.mrb[0].mxu0
      %v2964 = vadd.f32 0.0, %v2963
      %v2965 = vpop.f32.mrb[0].mxu0
      %v2966 = vpop.f32.mrb[0].mxu0
      %v2967 = vadd.f32 0.0, %v2966
      %v2968 = vpop.f32.mrb[0].mxu0
      %2969 = vmatprep.mubr.bf16.mxu0 0
      %2970 = vmatmul.mubr.bf16.gmra.mrb[0].mxu0 %v2860
      %v2971 = vpop.f32.mrb[0].mxu0
      %v2972 = vadd.f32 0.0, %v2971
      %v2973 = vpop.f32.mrb[0].mxu0
      %v2974 = vpop.f32.mrb[0].mxu0
      %v2975 = vadd.f32 0.0, %v2974
      %v2976 = vpop.f32.mrb[0].mxu0
      %2977 = vmatprep.mubr.bf16.mxu0 0
      %2978 = vmatmul.mubr.bf16.gmra.mrb[0].mxu0 %v2863
      %v2979 = vpop.f32.mrb[0].mxu0
      %v2980 = vadd.f32 0.0, %v2979
      %v2981 = vpop.f32.mrb[0].mxu0
      %v2982 = vpop.f32.mrb[0].mxu0
      %v2983 = vadd.f32 0.0, %v2982
      %v2984 = vpop.f32.mrb[0].mxu0
      %2985 = vmatprep.mubr.bf16.mxu0 0
      %2986 = vmatmul.mubr.bf16.gmra.mrb[0].mxu0 %v2866
      %v2987 = vpop.f32.mrb[0].mxu0
      %v2988 = vadd.f32 0.0, %v2987
      %v2989 = vpop.f32.mrb[0].mxu0
      %v2990 = vpop.f32.mrb[0].mxu0
      %v2991 = vadd.f32 0.0, %v2990
      %v2992 = vpop.f32.mrb[0].mxu0
      %2993 = vmatprep.mubr.bf16.mxu0 0
      %2994 = vmatmul.mubr.bf16.gmra.mrb[0].mxu0 %v2869
      %v2995 = vpop.f32.mrb[0].mxu0
      %v2996 = vadd.f32 0.0, %v2995
      %v2997 = vpop.f32.mrb[0].mxu0
      %v2998 = vpop.f32.mrb[0].mxu0
      %v2999 = vadd.f32 0.0, %v2998
      %v3000 = vpop.f32.mrb[0].mxu0
      %3001 = vmatprep.mubr.bf16.mxu0 0
      %3002 = vmatmul.mubr.bf16.gmra.mrb[0].mxu0 %v2872
      %v3003 = vpop.f32.mrb[0].mxu0
      %v3004 = vadd.f32 0.0, %v3003
      %v3005 = vpop.f32.mrb[0].mxu0
      %v3006 = vpop.f32.mrb[0].mxu0
      %v3007 = vadd.f32 0.0, %v3006
      %v3008 = vpop.f32.mrb[0].mxu0
      %3009 = vmatprep.mubr.bf16.mxu0 0
      %3010 = vmatmul.mubr.bf16.gmra.mrb[0].mxu0 %v2875
      %v3011 = vpop.f32.mrb[0].mxu0
      %v3012 = vadd.f32 0.0, %v3011
      %v3013 = vpop.f32.mrb[0].mxu0
      %v3014 = vpop.f32.mrb[0].mxu0
      %v3015 = vadd.f32 0.0, %v3014
      %v3016 = vpop.f32.mrb[0].mxu0
      %3017 = vmatprep.mubr.bf16.mxu0 0
      %3018 = vmatmul.mubr.bf16.gmra.mrb[0].mxu0 %v2878
      %v3019 = vpop.f32.mrb[0].mxu0
      %v3020 = vadd.f32 0.0, %v3019
      %v3021 = vpop.f32.mrb[0].mxu0
      %v3022 = vpop.f32.mrb[0].mxu0
      %v3023 = vadd.f32 0.0, %v3022
      %v3024 = vpop.f32.mrb[0].mxu0
      %3025 = vmatprep.mubr.bf16.mxu0 0
      %3026 = vmatmul.mubr.bf16.gmra.mrb[0].mxu0 %v2881
      %v3027 = vpop.f32.mrb[0].mxu0
      %v3028 = vadd.f32 0.0, %v3027
      %v3029 = vpop.f32.mrb[0].mxu0
      %v3030 = vpop.f32.mrb[0].mxu0
      %v3031 = vadd.f32 0.0, %v3030
      %v3032 = vpop.f32.mrb[0].mxu0
      %3033 = vmatprep.mubr.bf16.mxu0 0
      %3034 = vmatmul.mubr.bf16.gmra.mrb[0].mxu0 %v2884
      %v3035 = vpop.f32.mrb[0].mxu0
      %v3036 = vadd.f32 0.0, %v3035
      %v3037 = vpop.f32.mrb[0].mxu0
      %v3038 = vpop.f32.mrb[0].mxu0
      %v3039 = vadd.f32 0.0, %v3038
      %v3040 = vpop.f32.mrb[0].mxu0
      %3041 = vmatprep.mubr.bf16.mxu0 0
      %3042 = vmatmul.mubr.bf16.gmra.mrb[0].mxu0 %v2887
      %v3043 = vpop.f32.mrb[0].mxu0
      %v3044 = vadd.f32 0.0, %v3043
      %v3045 = vpop.f32.mrb[0].mxu0
      %v3046 = vpop.f32.mrb[0].mxu0
      %v3047 = vadd.f32 0.0, %v3046
      %v3048 = vpop.f32.mrb[0].mxu0
      %3049 = vdwg.mxu0
      %v3050 = vadd.f32 %v2696, %v2924
      %v3051 = vadd.f32 %v2697, %v2927
      %v3052 = vadd.f32 %v2698, %v2932
      %v3053 = vadd.f32 %v2699, %v2935
      %v3054 = vadd.f32 %v2700, %v2940
      %v3055 = vadd.f32 %v2701, %v2943
      %v3056 = vadd.f32 %v2702, %v2948
      %v3057 = vadd.f32 %v2703, %v2951
      %v3058 = vadd.f32 %v2704, %v2956
      %v3059 = vadd.f32 %v2705, %v2959
      %v3060 = vadd.f32 %v2706, %v2964
      %v3061 = vadd.f32 %v2707, %v2967
      %v3062 = vadd.f32 %v2708, %v2972
      %v3063 = vadd.f32 %v2709, %v2975
      %v3064 = vadd.f32 %v2710, %v2980
      %v3065 = vadd.f32 %v2711, %v2983
      %v3066 = vadd.f32 %v2712, %v2988
      %v3067 = vadd.f32 %v2713, %v2991
      %v3068 = vadd.f32 %v2714, %v2996
      %v3069 = vadd.f32 %v2715, %v2999
      %v3070 = vadd.f32 %v2716, %v3004
      %v3071 = vadd.f32 %v2717, %v3007
      %v3072 = vadd.f32 %v2718, %v3012
      %v3073 = vadd.f32 %v2719, %v3015
      %v3074 = vadd.f32 %v2720, %v3020
      %v3075 = vadd.f32 %v2721, %v3023
      %v3076 = vadd.f32 %v2722, %v3028
      %v3077 = vadd.f32 %v2723, %v3031
      %v3078 = vadd.f32 %v2724, %v3036
      %v3079 = vadd.f32 %v2725, %v3039
      %v3080 = vadd.f32 %v2726, %v3044
      %v3081 = vadd.f32 %v2727, %v3047
      %3082 = vst.msk [vmem:[#allocation2] sm:$0xff] %vm599, %v3050
      %3083 = vst.msk [vmem:[#allocation2 + $0x8] sm:$0xff] %vm599, %v3051
      %3084 = vst.msk [vmem:[#allocation2 + $0x10] sm:$0xff] %vm599, %v3052
      %3085 = vst.msk [vmem:[#allocation2 + $0x18] sm:$0xff] %vm599, %v3053
      %3086 = vst.msk [vmem:[#allocation2 + $0x20] sm:$0xff] %vm599, %v3054
      %3087 = vst.msk [vmem:[#allocation2 + $0x28] sm:$0xff] %vm599, %v3055
      %3088 = vst.msk [vmem:[#allocation2 + $0x30] sm:$0xff] %vm599, %v3056
      %3089 = vst.msk [vmem:[#allocation2 + $0x38] sm:$0xff] %vm599, %v3057
      %3090 = vst.msk [vmem:[#allocation2 + $0x40] sm:$0xff] %vm599, %v3058
      %3091 = vst.msk [vmem:[#allocation2 + $0x48] sm:$0xff] %vm599, %v3059
      %3092 = vst.msk [vmem:[#allocation2 + $0x50] sm:$0xff] %vm599, %v3060
      %3093 = vst.msk [vmem:[#allocation2 + $0x58] sm:$0xff] %vm599, %v3061
      %3094 = vst.msk [vmem:[#allocation2 + $0x60] sm:$0xff] %vm599, %v3062
      %3095 = vst.msk [vmem:[#allocation2 + $0x68] sm:$0xff] %vm599, %v3063
      %3096 = vst.msk [vmem:[#allocation2 + $0x70] sm:$0xff] %vm599, %v3064
      %3097 = vst.msk [vmem:[#allocation2 + $0x78] sm:$0xff] %vm599, %v3065
      %3098 = vst.msk [vmem:[#allocation2 + $0x80] sm:$0xff] %vm599, %v3066
      %3099 = vst.msk [vmem:[#allocation2 + $0x88] sm:$0xff] %vm599, %v3067
      %3100 = vst.msk [vmem:[#allocation2 + $0x90] sm:$0xff] %vm599, %v3068
      %3101 = vst.msk [vmem:[#allocation2 + $0x98] sm:$0xff] %vm599, %v3069
      %3102 = vst.msk [vmem:[#allocation2 + $0xa0] sm:$0xff] %vm599, %v3070
      %3103 = vst.msk [vmem:[#allocation2 + $0xa8] sm:$0xff] %vm599, %v3071
      %3104 = vst.msk [vmem:[#allocation2 + $0xb0] sm:$0xff] %vm599, %v3072
      %3105 = vst.msk [vmem:[#allocation2 + $0xb8] sm:$0xff] %vm599, %v3073
      %3106 = vst.msk [vmem:[#allocation2 + $0xc0] sm:$0xff] %vm599, %v3074
      %3107 = vst.msk [vmem:[#allocation2 + $0xc8] sm:$0xff] %vm599, %v3075
      %3108 = vst.msk [vmem:[#allocation2 + $0xd0] sm:$0xff] %vm599, %v3076
      %3109 = vst.msk [vmem:[#allocation2 + $0xd8] sm:$0xff] %vm599, %v3077
      %3110 = vst.msk [vmem:[#allocation2 + $0xe0] sm:$0xff] %vm599, %v3078
      %3111 = vst.msk [vmem:[#allocation2 + $0xe8] sm:$0xff] %vm599, %v3079
      %3112 = vst.msk [vmem:[#allocation2 + $0xf0] sm:$0xff] %vm599, %v3080
      %3113 = vst.msk [vmem:[#allocation2 + $0xf8] sm:$0xff] %vm599, %v3081
      %v3114 = vld [vmem:[#allocation2] sm:$0xff]
      %v3115 = vld [vmem:[#allocation2 + $0x8] sm:$0xff]
      %v3116 = vld [vmem:[#allocation2 + $0x10] sm:$0xff]
      %v3117 = vld [vmem:[#allocation2 + $0x18] sm:$0xff]
      %v3118 = vld [vmem:[#allocation2 + $0x20] sm:$0xff]
      %v3119 = vld [vmem:[#allocation2 + $0x28] sm:$0xff]
      %v3120 = vld [vmem:[#allocation2 + $0x30] sm:$0xff]
      %v3121 = vld [vmem:[#allocation2 + $0x38] sm:$0xff]
      %v3122 = vld [vmem:[#allocation2 + $0x40] sm:$0xff]
      %v3123 = vld [vmem:[#allocation2 + $0x48] sm:$0xff]
      %v3124 = vld [vmem:[#allocation2 + $0x50] sm:$0xff]
      %v3125 = vld [vmem:[#allocation2 + $0x58] sm:$0xff]
      %v3126 = vld [vmem:[#allocation2 + $0x60] sm:$0xff]
      %v3127 = vld [vmem:[#allocation2 + $0x68] sm:$0xff]
      %v3128 = vld [vmem:[#allocation2 + $0x70] sm:$0xff]
      %v3129 = vld [vmem:[#allocation2 + $0x78] sm:$0xff]
      %v3130 = vld [vmem:[#allocation2 + $0x80] sm:$0xff]
      %v3131 = vld [vmem:[#allocation2 + $0x88] sm:$0xff]
      %v3132 = vld [vmem:[#allocation2 + $0x90] sm:$0xff]
      %v3133 = vld [vmem:[#allocation2 + $0x98] sm:$0xff]
      %v3134 = vld [vmem:[#allocation2 + $0xa0] sm:$0xff]
      %v3135 = vld [vmem:[#allocation2 + $0xa8] sm:$0xff]
      %v3136 = vld [vmem:[#allocation2 + $0xb0] sm:$0xff]
      %v3137 = vld [vmem:[#allocation2 + $0xb8] sm:$0xff]
      %v3138 = vld [vmem:[#allocation2 + $0xc0] sm:$0xff]
      %v3139 = vld [vmem:[#allocation2 + $0xc8] sm:$0xff]
      %v3140 = vld [vmem:[#allocation2 + $0xd0] sm:$0xff]
      %v3141 = vld [vmem:[#allocation2 + $0xd8] sm:$0xff]
      %v3142 = vld [vmem:[#allocation2 + $0xe0] sm:$0xff]
      %v3143 = vld [vmem:[#allocation2 + $0xe8] sm:$0xff]
      %v3144 = vld [vmem:[#allocation2 + $0xf0] sm:$0xff]
      %v3145 = vld [vmem:[#allocation2 + $0xf8] sm:$0xff]
      %v3146 = vadd.f32 %v3114, %v1086
      %v3147 = vadd.f32 %v3115, %v1086
      %v3148 = vadd.f32 %v3116, %v1086
      %v3149 = vadd.f32 %v3117, %v1086
      %v3150 = vadd.f32 %v3118, %v1086
      %v3151 = vadd.f32 %v3119, %v1086
      %v3152 = vadd.f32 %v3120, %v1086
      %v3153 = vadd.f32 %v3121, %v1086
      %v3154 = vadd.f32 %v3122, %v1086
      %v3155 = vadd.f32 %v3123, %v1086
      %v3156 = vadd.f32 %v3124, %v1086
      %v3157 = vadd.f32 %v3125, %v1086
      %v3158 = vadd.f32 %v3126, %v1086
      %v3159 = vadd.f32 %v3127, %v1086
      %v3160 = vadd.f32 %v3128, %v1086
      %v3161 = vadd.f32 %v3129, %v1086
      %v3162 = vadd.f32 %v3130, %v1086
      %v3163 = vadd.f32 %v3131, %v1086
      %v3164 = vadd.f32 %v3132, %v1086
      %v3165 = vadd.f32 %v3133, %v1086
      %v3166 = vadd.f32 %v3134, %v1086
      %v3167 = vadd.f32 %v3135, %v1086
      %v3168 = vadd.f32 %v3136, %v1086
      %v3169 = vadd.f32 %v3137, %v1086
      %v3170 = vadd.f32 %v3138, %v1086
      %v3171 = vadd.f32 %v3139, %v1086
      %v3172 = vadd.f32 %v3140, %v1086
      %v3173 = vadd.f32 %v3141, %v1086
      %v3174 = vadd.f32 %v3142, %v1086
      %v3175 = vadd.f32 %v3143, %v1086
      %v3176 = vadd.f32 %v3144, %v1086
      %v3177 = vadd.f32 %v3145, %v1086
      %s3178 = scalar_lea.vmem %s208, 16
      %3179 = vst.msk [vmem:[%s3178] sm:$0xff] %vm599, %v3146
      %3180 = vst.msk [vmem:[%s3178 + $0x8] sm:$0xff] %vm599, %v3147
      %3181 = vst.msk [vmem:[%s3178 + $0x20] sm:$0xff] %vm599, %v3148
      %3182 = vst.msk [vmem:[%s3178 + $0x28] sm:$0xff] %vm599, %v3149
      %3183 = vst.msk [vmem:[%s3178 + $0x40] sm:$0xff] %vm599, %v3150
      %3184 = vst.msk [vmem:[%s3178 + $0x48] sm:$0xff] %vm599, %v3151
      %3185 = vst.msk [vmem:[%s3178 + $0x60] sm:$0xff] %vm599, %v3152
      %3186 = vst.msk [vmem:[%s3178 + $0x68] sm:$0xff] %vm599, %v3153
      %3187 = vst.msk [vmem:[%s3178 + $0x80] sm:$0xff] %vm599, %v3154
      %3188 = vst.msk [vmem:[%s3178 + $0x88] sm:$0xff] %vm599, %v3155
      %3189 = vst.msk [vmem:[%s3178 + $0xa0] sm:$0xff] %vm599, %v3156
      %3190 = vst.msk [vmem:[%s3178 + $0xa8] sm:$0xff] %vm599, %v3157
      %3191 = vst.msk [vmem:[%s3178 + $0xc0] sm:$0xff] %vm599, %v3158
      %3192 = vst.msk [vmem:[%s3178 + $0xc8] sm:$0xff] %vm599, %v3159
      %3193 = vst.msk [vmem:[%s3178 + $0xe0] sm:$0xff] %vm599, %v3160
      %3194 = vst.msk [vmem:[%s3178 + $0xe8] sm:$0xff] %vm599, %v3161
      %3195 = vst.msk [vmem:[%s3178 + $0x100] sm:$0xff] %vm599, %v3162
      %3196 = vst.msk [vmem:[%s3178 + $0x108] sm:$0xff] %vm599, %v3163
      %3197 = vst.msk [vmem:[%s3178 + $0x120] sm:$0xff] %vm599, %v3164
      %3198 = vst.msk [vmem:[%s3178 + $0x128] sm:$0xff] %vm599, %v3165
      %3199 = vst.msk [vmem:[%s3178 + $0x140] sm:$0xff] %vm599, %v3166
      %3200 = vst.msk [vmem:[%s3178 + $0x148] sm:$0xff] %vm599, %v3167
      %3201 = vst.msk [vmem:[%s3178 + $0x160] sm:$0xff] %vm599, %v3168
      %3202 = vst.msk [vmem:[%s3178 + $0x168] sm:$0xff] %vm599, %v3169
      %3203 = vst.msk [vmem:[%s3178 + $0x180] sm:$0xff] %vm599, %v3170
      %3204 = vst.msk [vmem:[%s3178 + $0x188] sm:$0xff] %vm599, %v3171
      %3205 = vst.msk [vmem:[%s3178 + $0x1a0] sm:$0xff] %vm599, %v3172
      %3206 = vst.msk [vmem:[%s3178 + $0x1a8] sm:$0xff] %vm599, %v3173
      %3207 = vst.msk [vmem:[%s3178 + $0x1c0] sm:$0xff] %vm599, %v3174
      %3208 = vst.msk [vmem:[%s3178 + $0x1c8] sm:$0xff] %vm599, %v3175
      %3209 = vst.msk [vmem:[%s3178 + $0x1e0] sm:$0xff] %vm599, %v3176
      %3210 = vst.msk [vmem:[%s3178 + $0x1e8] sm:$0xff] %vm599, %v3177
      %v3211 = vld [vmem:[%s244] sm:$0xf]
      %v3212 = vld [vmem:[%s244 + $0x4] sm:$0xf]
      %v3213 = vld [vmem:[%s244 + $0x8] sm:$0xf]
      %v3214 = vld [vmem:[%s244 + $0xc] sm:$0xf]
      %v3215 = vld [vmem:[%s244 + $0x10] sm:$0xf]
      %v3216 = vld [vmem:[%s244 + $0x14] sm:$0xf]
      %v3217 = vld [vmem:[%s244 + $0x18] sm:$0xf]
      %v3218 = vld [vmem:[%s244 + $0x1c] sm:$0xf]
      %v3219 = vld [vmem:[%s244 + $0x20] sm:$0xf]
      %v3220 = vld [vmem:[%s244 + $0x24] sm:$0xf]
      %v3221 = vld [vmem:[%s244 + $0x28] sm:$0xf]
      %v3222 = vld [vmem:[%s244 + $0x2c] sm:$0xf]
      %v3223 = vld [vmem:[%s244 + $0x30] sm:$0xf]
      %v3224 = vld [vmem:[%s244 + $0x34] sm:$0xf]
      %v3225 = vld [vmem:[%s244 + $0x38] sm:$0xf]
      %v3226 = vld [vmem:[%s244 + $0x3c] sm:$0xf]
      %v3227 = vld [vmem:[%s244 + $0x40] sm:$0xf]
      %v3228 = vld [vmem:[%s244 + $0x44] sm:$0xf]
      %v3229 = vld [vmem:[%s244 + $0x48] sm:$0xf]
      %v3230 = vld [vmem:[%s244 + $0x4c] sm:$0xf]
      %v3231 = vld [vmem:[%s244 + $0x50] sm:$0xf]
      %v3232 = vld [vmem:[%s244 + $0x54] sm:$0xf]
      %v3233 = vld [vmem:[%s244 + $0x58] sm:$0xf]
      %v3234 = vld [vmem:[%s244 + $0x5c] sm:$0xf]
      %v3235 = vld [vmem:[%s244 + $0x60] sm:$0xf]
      %v3236 = vld [vmem:[%s244 + $0x64] sm:$0xf]
      %v3237 = vld [vmem:[%s244 + $0x68] sm:$0xf]
      %v3238 = vld [vmem:[%s244 + $0x6c] sm:$0xf]
      %v3239 = vld [vmem:[%s244 + $0x70] sm:$0xf]
      %v3240 = vld [vmem:[%s244 + $0x74] sm:$0xf]
      %v3241 = vld [vmem:[%s244 + $0x78] sm:$0xf]
      %v3242 = vld [vmem:[%s244 + $0x7c] sm:$0xf]
      %v3243 = vld [vmem:[%s2309] sm:$0xf]
      %v3244 = vld [vmem:[%s2309 + $0x4] sm:$0xf]
      %v3245 = vld [vmem:[%s2309 + $0x8] sm:$0xf]
      %v3246 = vld [vmem:[%s2309 + $0xc] sm:$0xf]
      %v3247 = vld [vmem:[%s2309 + $0x10] sm:$0xf]
      %v3248 = vld [vmem:[%s2309 + $0x14] sm:$0xf]
      %v3249 = vld [vmem:[%s2309 + $0x18] sm:$0xf]
      %v3250 = vld [vmem:[%s2309 + $0x1c] sm:$0xf]
      %v3251 = vld [vmem:[%s2309 + $0x20] sm:$0xf]
      %v3252 = vld [vmem:[%s2309 + $0x24] sm:$0xf]
      %v3253 = vld [vmem:[%s2309 + $0x28] sm:$0xf]
      %v3254 = vld [vmem:[%s2309 + $0x2c] sm:$0xf]
      %v3255 = vld [vmem:[%s2309 + $0x30] sm:$0xf]
      %v3256 = vld [vmem:[%s2309 + $0x34] sm:$0xf]
      %v3257 = vld [vmem:[%s2309 + $0x38] sm:$0xf]
      %v3258 = vld [vmem:[%s2309 + $0x3c] sm:$0xf]
      %v3259 = vld [vmem:[%s2309 + $0x40] sm:$0xf]
      %v3260 = vld [vmem:[%s2309 + $0x44] sm:$0xf]
      %v3261 = vld [vmem:[%s2309 + $0x48] sm:$0xf]
      %v3262 = vld [vmem:[%s2309 + $0x4c] sm:$0xf]
      %v3263 = vld [vmem:[%s2309 + $0x50] sm:$0xf]
      %v3264 = vld [vmem:[%s2309 + $0x54] sm:$0xf]
      %v3265 = vld [vmem:[%s2309 + $0x58] sm:$0xf]
      %v3266 = vld [vmem:[%s2309 + $0x5c] sm:$0xf]
      %v3267 = vld [vmem:[%s2309 + $0x60] sm:$0xf]
      %v3268 = vld [vmem:[%s2309 + $0x64] sm:$0xf]
      %v3269 = vld [vmem:[%s2309 + $0x68] sm:$0xf]
      %v3270 = vld [vmem:[%s2309 + $0x6c] sm:$0xf]
      %v3271 = vld [vmem:[%s2309 + $0x70] sm:$0xf]
      %v3272 = vld [vmem:[%s2309 + $0x74] sm:$0xf]
      %v3273 = vld [vmem:[%s2309 + $0x78] sm:$0xf]
      %v3274 = vld [vmem:[%s2309 + $0x7c] sm:$0xf]
      %s3275 = scalar_lea.vmem %s1, 192
      %v3276 = vld [vmem:[%s3275] sm:$0xf]
      %v3277 = vld [vmem:[%s3275 + $0x4] sm:$0xf]
      %v3278 = vld [vmem:[%s3275 + $0x8] sm:$0xf]
      %v3279 = vld [vmem:[%s3275 + $0xc] sm:$0xf]
      %v3280 = vld [vmem:[%s3275 + $0x10] sm:$0xf]
      %v3281 = vld [vmem:[%s3275 + $0x14] sm:$0xf]
      %v3282 = vld [vmem:[%s3275 + $0x18] sm:$0xf]
      %v3283 = vld [vmem:[%s3275 + $0x1c] sm:$0xf]
      %v3316 = vunpack.c.l.b16 %v3211
      %v3317 = vunpack.c.l.b16 %v3212
      %v3318 = vunpack.c.l.b16 %v3213
      %v3319 = vunpack.c.l.b16 %v3214
      %v3320 = vunpack.c.l.b16 %v3215
      %v3321 = vunpack.c.l.b16 %v3216
      %v3322 = vunpack.c.l.b16 %v3217
      %v3323 = vunpack.c.l.b16 %v3218
      %v3324 = vunpack.c.l.b16 %v3219
      %v3325 = vunpack.c.l.b16 %v3220
      %v3326 = vunpack.c.l.b16 %v3221
      %v3327 = vunpack.c.l.b16 %v3222
      %v3328 = vunpack.c.l.b16 %v3223
      %v3329 = vunpack.c.l.b16 %v3224
      %v3330 = vunpack.c.l.b16 %v3225
      %v3331 = vunpack.c.l.b16 %v3226
      %v3332 = vunpack.c.l.b16 %v3227
      %v3333 = vunpack.c.l.b16 %v3228
      %v3334 = vunpack.c.l.b16 %v3229
      %v3335 = vunpack.c.l.b16 %v3230
      %v3336 = vunpack.c.l.b16 %v3231
      %v3337 = vunpack.c.l.b16 %v3232
      %v3338 = vunpack.c.l.b16 %v3233
      %v3339 = vunpack.c.l.b16 %v3234
      %v3340 = vunpack.c.l.b16 %v3235
      %v3341 = vunpack.c.l.b16 %v3236
      %v3342 = vunpack.c.l.b16 %v3237
      %v3343 = vunpack.c.l.b16 %v3238
      %v3344 = vunpack.c.l.b16 %v3239
      %v3345 = vunpack.c.l.b16 %v3240
      %v3346 = vunpack.c.l.b16 %v3241
      %v3347 = vunpack.c.l.b16 %v3242
      %v3348 = vpack.c.b16 %v3317, %v3316
      %v3349 = vpack.c.b16 %v3319, %v3318
      %v3350 = vpack.c.b16 %v3321, %v3320
      %v3351 = vpack.c.b16 %v3323, %v3322
      %v3352 = vpack.c.b16 %v3325, %v3324
      %v3353 = vpack.c.b16 %v3327, %v3326
      %v3354 = vpack.c.b16 %v3329, %v3328
      %v3355 = vpack.c.b16 %v3331, %v3330
      %v3356 = vpack.c.b16 %v3333, %v3332
      %v3357 = vpack.c.b16 %v3335, %v3334
      %v3358 = vpack.c.b16 %v3337, %v3336
      %v3359 = vpack.c.b16 %v3339, %v3338
      %v3360 = vpack.c.b16 %v3341, %v3340
      %v3361 = vpack.c.b16 %v3343, %v3342
      %v3362 = vpack.c.b16 %v3345, %v3344
      %v3363 = vpack.c.b16 %v3347, %v3346
      %3364 = vrot.lane.b32.xlu0 %v3348, 96
      %v3365 = vpop.permute.xlu0 %3364
      %3366 = vrot.lane.b32.xlu0 %v3349, 96
      %v3367 = vpop.permute.xlu0 %3366
      %3368 = vrot.lane.b32.xlu0 %v3350, 96
      %v3369 = vpop.permute.xlu0 %3368
      %3370 = vrot.lane.b32.xlu0 %v3351, 96
      %v3371 = vpop.permute.xlu0 %3370
      %3372 = vrot.lane.b32.xlu0 %v3352, 96
      %v3373 = vpop.permute.xlu0 %3372
      %3374 = vrot.lane.b32.xlu0 %v3353, 96
      %v3375 = vpop.permute.xlu0 %3374
      %3376 = vrot.lane.b32.xlu0 %v3354, 96
      %v3377 = vpop.permute.xlu0 %3376
      %3378 = vrot.lane.b32.xlu0 %v3355, 96
      %v3379 = vpop.permute.xlu0 %3378
      %3380 = vrot.lane.b32.xlu0 %v3356, 96
      %v3381 = vpop.permute.xlu0 %3380
      %3382 = vrot.lane.b32.xlu0 %v3357, 96
      %v3383 = vpop.permute.xlu0 %3382
      %3384 = vrot.lane.b32.xlu0 %v3358, 96
      %v3385 = vpop.permute.xlu0 %3384
      %3386 = vrot.lane.b32.xlu0 %v3359, 96
      %v3387 = vpop.permute.xlu0 %3386
      %3388 = vrot.lane.b32.xlu0 %v3360, 96
      %v3389 = vpop.permute.xlu0 %3388
      %3390 = vrot.lane.b32.xlu0 %v3361, 96
      %v3391 = vpop.permute.xlu0 %3390
      %3392 = vrot.lane.b32.xlu0 %v3362, 96
      %v3393 = vpop.permute.xlu0 %3392
      %3394 = vrot.lane.b32.xlu0 %v3363, 96
      %v3395 = vpop.permute.xlu0 %3394
      %v3404 = vunpack.c.l.b16 %v3276
      %v3405 = vunpack.c.l.b16 %v3277
      %v3406 = vunpack.c.l.b16 %v3278
      %v3407 = vunpack.c.l.b16 %v3279
      %v3408 = vunpack.c.l.b16 %v3280
      %v3409 = vunpack.c.l.b16 %v3281
      %v3410 = vunpack.c.l.b16 %v3282
      %v3411 = vunpack.c.l.b16 %v3283
      %v3412 = vpack.c.b16 %v3405, %v3404
      %v3413 = vpack.c.b16 %v3407, %v3406
      %v3414 = vpack.c.b16 %v3409, %v3408
      %v3415 = vpack.c.b16 %v3411, %v3410
      %v3421 = vsel %vm389, %v3365, 0
      %v3424 = vsel %vm389, %v3367, 0
      %v3427 = vsel %vm389, %v3369, 0
      %v3430 = vsel %vm389, %v3371, 0
      %v3433 = vsel %vm389, %v3373, 0
      %v3436 = vsel %vm389, %v3375, 0
      %v3439 = vsel %vm389, %v3377, 0
      %v3442 = vsel %vm389, %v3379, 0
      %v3445 = vsel %vm389, %v3381, 0
      %v3448 = vsel %vm389, %v3383, 0
      %v3451 = vsel %vm389, %v3385, 0
      %v3454 = vsel %vm389, %v3387, 0
      %v3457 = vsel %vm389, %v3389, 0
      %v3460 = vsel %vm389, %v3391, 0
      %v3463 = vsel %vm389, %v3393, 0
      %v3466 = vsel %vm389, %v3395, 0
      %3468 = vmatprep.subr.bf16.mxu0 0
      %3469 = vmatpush1.bf16.msra.mxu0 %v3412
      %3470 = vmatprep.subr.bf16.mxu0 0
      %3471 = vmatpush1.bf16.msra.mxu0 %v3413
      %3472 = vmatprep.subr.bf16.mxu0 0
      %3473 = vmatpush1.bf16.msra.mxu0 %v3414
      %3474 = vmatprep.subr.bf16.mxu0 0
      %3475 = vmatpush1.bf16.msra.mxu0 %v3415
      %3476 = vmatprep.subr.bf16.mxu0 0
      %3477 = vmatpush1.bf16.msra.mxu0 0
      %3478 = vmatprep.subr.bf16.mxu0 0
      %3479 = vmatpush1.bf16.msra.mxu0 0
      %3480 = vmatprep.subr.bf16.mxu0 0
      %3481 = vmatpush1.bf16.msra.mxu0 0
      %3482 = vmatprep.subr.bf16.mxu0 0
      %3483 = vmatpush1.bf16.msra.mxu0 0
      %3484 = vmatprep.subr.bf16.mxu0 0
      %3485 = vmatpush1.bf16.msra.mxu0 0
      %3486 = vmatprep.subr.bf16.mxu0 0
      %3487 = vmatpush1.bf16.msra.mxu0 0
      %3488 = vmatprep.subr.bf16.mxu0 0
      %3489 = vmatpush1.bf16.msra.mxu0 0
      %3490 = vmatprep.subr.bf16.mxu0 0
      %3491 = vmatpush1.bf16.msra.mxu0 0
      %3492 = vmatprep.subr.bf16.mxu0 0
      %3493 = vmatpush1.bf16.msra.mxu0 0
      %3494 = vmatprep.subr.bf16.mxu0 0
      %3495 = vmatpush1.bf16.msra.mxu0 0
      %3496 = vmatprep.subr.bf16.mxu0 0
      %3497 = vmatpush1.bf16.msra.mxu0 0
      %3498 = vmatprep.subr.bf16.mxu0 0
      %3499 = vmatpush1.bf16.msra.mxu0 0
      %3500 = vmatprep.mubr.bf16.mxu0 0
      %3501 = vmatmul.mubr.bf16.gmra.mrb[0].mxu0 %v3421
      %v3502 = vpop.f32.mrb[0].mxu0
      %v3503 = vadd.f32 0.0, %v3502
      %v3504 = vpop.f32.mrb[0].mxu0
      %v3505 = vpop.f32.mrb[0].mxu0
      %v3506 = vadd.f32 0.0, %v3505
      %v3507 = vpop.f32.mrb[0].mxu0
      %3508 = vmatprep.mubr.bf16.mxu0 0
      %3509 = vmatmul.mubr.bf16.gmra.mrb[0].mxu0 %v3424
      %v3510 = vpop.f32.mrb[0].mxu0
      %v3511 = vadd.f32 0.0, %v3510
      %v3512 = vpop.f32.mrb[0].mxu0
      %v3513 = vpop.f32.mrb[0].mxu0
      %v3514 = vadd.f32 0.0, %v3513
      %v3515 = vpop.f32.mrb[0].mxu0
      %3516 = vmatprep.mubr.bf16.mxu0 0
      %3517 = vmatmul.mubr.bf16.gmra.mrb[0].mxu0 %v3427
      %v3518 = vpop.f32.mrb[0].mxu0
      %v3519 = vadd.f32 0.0, %v3518
      %v3520 = vpop.f32.mrb[0].mxu0
      %v3521 = vpop.f32.mrb[0].mxu0
      %v3522 = vadd.f32 0.0, %v3521
      %v3523 = vpop.f32.mrb[0].mxu0
      %3524 = vmatprep.mubr.bf16.mxu0 0
      %3525 = vmatmul.mubr.bf16.gmra.mrb[0].mxu0 %v3430
      %v3526 = vpop.f32.mrb[0].mxu0
      %v3527 = vadd.f32 0.0, %v3526
      %v3528 = vpop.f32.mrb[0].mxu0
      %v3529 = vpop.f32.mrb[0].mxu0
      %v3530 = vadd.f32 0.0, %v3529
      %v3531 = vpop.f32.mrb[0].mxu0
      %3532 = vmatprep.mubr.bf16.mxu0 0
      %3533 = vmatmul.mubr.bf16.gmra.mrb[0].mxu0 %v3433
      %v3534 = vpop.f32.mrb[0].mxu0
      %v3535 = vadd.f32 0.0, %v3534
      %v3536 = vpop.f32.mrb[0].mxu0
      %v3537 = vpop.f32.mrb[0].mxu0
      %v3538 = vadd.f32 0.0, %v3537
      %v3539 = vpop.f32.mrb[0].mxu0
      %3540 = vmatprep.mubr.bf16.mxu0 0
      %3541 = vmatmul.mubr.bf16.gmra.mrb[0].mxu0 %v3436
      %v3542 = vpop.f32.mrb[0].mxu0
      %v3543 = vadd.f32 0.0, %v3542
      %v3544 = vpop.f32.mrb[0].mxu0
      %v3545 = vpop.f32.mrb[0].mxu0
      %v3546 = vadd.f32 0.0, %v3545
      %v3547 = vpop.f32.mrb[0].mxu0
      %3548 = vmatprep.mubr.bf16.mxu0 0
      %3549 = vmatmul.mubr.bf16.gmra.mrb[0].mxu0 %v3439
      %v3550 = vpop.f32.mrb[0].mxu0
      %v3551 = vadd.f32 0.0, %v3550
      %v3552 = vpop.f32.mrb[0].mxu0
      %v3553 = vpop.f32.mrb[0].mxu0
      %v3554 = vadd.f32 0.0, %v3553
      %v3555 = vpop.f32.mrb[0].mxu0
      %3556 = vmatprep.mubr.bf16.mxu0 0
      %3557 = vmatmul.mubr.bf16.gmra.mrb[0].mxu0 %v3442
      %v3558 = vpop.f32.mrb[0].mxu0
      %v3559 = vadd.f32 0.0, %v3558
      %v3560 = vpop.f32.mrb[0].mxu0
      %v3561 = vpop.f32.mrb[0].mxu0
      %v3562 = vadd.f32 0.0, %v3561
      %v3563 = vpop.f32.mrb[0].mxu0
      %3564 = vmatprep.mubr.bf16.mxu0 0
      %3565 = vmatmul.mubr.bf16.gmra.mrb[0].mxu0 %v3445
      %v3566 = vpop.f32.mrb[0].mxu0
      %v3567 = vadd.f32 0.0, %v3566
      %v3568 = vpop.f32.mrb[0].mxu0
      %v3569 = vpop.f32.mrb[0].mxu0
      %v3570 = vadd.f32 0.0, %v3569
      %v3571 = vpop.f32.mrb[0].mxu0
      %3572 = vmatprep.mubr.bf16.mxu0 0
      %3573 = vmatmul.mubr.bf16.gmra.mrb[0].mxu0 %v3448
      %v3574 = vpop.f32.mrb[0].mxu0
      %v3575 = vadd.f32 0.0, %v3574
      %v3576 = vpop.f32.mrb[0].mxu0
      %v3577 = vpop.f32.mrb[0].mxu0
      %v3578 = vadd.f32 0.0, %v3577
      %v3579 = vpop.f32.mrb[0].mxu0
      %3580 = vmatprep.mubr.bf16.mxu0 0
      %3581 = vmatmul.mubr.bf16.gmra.mrb[0].mxu0 %v3451
      %v3582 = vpop.f32.mrb[0].mxu0
      %v3583 = vadd.f32 0.0, %v3582
      %v3584 = vpop.f32.mrb[0].mxu0
      %v3585 = vpop.f32.mrb[0].mxu0
      %v3586 = vadd.f32 0.0, %v3585
      %v3587 = vpop.f32.mrb[0].mxu0
      %3588 = vmatprep.mubr.bf16.mxu0 0
      %3589 = vmatmul.mubr.bf16.gmra.mrb[0].mxu0 %v3454
      %v3590 = vpop.f32.mrb[0].mxu0
      %v3591 = vadd.f32 0.0, %v3590
      %v3592 = vpop.f32.mrb[0].mxu0
      %v3593 = vpop.f32.mrb[0].mxu0
      %v3594 = vadd.f32 0.0, %v3593
      %v3595 = vpop.f32.mrb[0].mxu0
      %3596 = vmatprep.mubr.bf16.mxu0 0
      %3597 = vmatmul.mubr.bf16.gmra.mrb[0].mxu0 %v3457
      %v3598 = vpop.f32.mrb[0].mxu0
      %v3599 = vadd.f32 0.0, %v3598
      %v3600 = vpop.f32.mrb[0].mxu0
      %v3601 = vpop.f32.mrb[0].mxu0
      %v3602 = vadd.f32 0.0, %v3601
      %v3603 = vpop.f32.mrb[0].mxu0
      %3604 = vmatprep.mubr.bf16.mxu0 0
      %3605 = vmatmul.mubr.bf16.gmra.mrb[0].mxu0 %v3460
      %v3606 = vpop.f32.mrb[0].mxu0
      %v3607 = vadd.f32 0.0, %v3606
      %v3608 = vpop.f32.mrb[0].mxu0
      %v3609 = vpop.f32.mrb[0].mxu0
      %v3610 = vadd.f32 0.0, %v3609
      %v3611 = vpop.f32.mrb[0].mxu0
      %3612 = vmatprep.mubr.bf16.mxu0 0
      %3613 = vmatmul.mubr.bf16.gmra.mrb[0].mxu0 %v3463
      %v3614 = vpop.f32.mrb[0].mxu0
      %v3615 = vadd.f32 0.0, %v3614
      %v3616 = vpop.f32.mrb[0].mxu0
      %v3617 = vpop.f32.mrb[0].mxu0
      %v3618 = vadd.f32 0.0, %v3617
      %v3619 = vpop.f32.mrb[0].mxu0
      %3620 = vmatprep.mubr.bf16.mxu0 0
      %3621 = vmatmul.mubr.bf16.gmra.mrb[0].mxu0 %v3466
      %v3622 = vpop.f32.mrb[0].mxu0
      %v3623 = vadd.f32 0.0, %v3622
      %v3624 = vpop.f32.mrb[0].mxu0
      %v3625 = vpop.f32.mrb[0].mxu0
      %v3626 = vadd.f32 0.0, %v3625
      %v3627 = vpop.f32.mrb[0].mxu0
      %3628 = vdwg.mxu0
      %3629 = vst.msk [vmem:[#allocation2] sm:$0xff] %vm599, %v3503
      %3630 = vst.msk [vmem:[#allocation2 + $0x8] sm:$0xff] %vm599, %v3506
      %3631 = vst.msk [vmem:[#allocation2 + $0x10] sm:$0xff] %vm599, %v3511
      %3632 = vst.msk [vmem:[#allocation2 + $0x18] sm:$0xff] %vm599, %v3514
      %3633 = vst.msk [vmem:[#allocation2 + $0x20] sm:$0xff] %vm599, %v3519
      %3634 = vst.msk [vmem:[#allocation2 + $0x28] sm:$0xff] %vm599, %v3522
      %3635 = vst.msk [vmem:[#allocation2 + $0x30] sm:$0xff] %vm599, %v3527
      %3636 = vst.msk [vmem:[#allocation2 + $0x38] sm:$0xff] %vm599, %v3530
      %3637 = vst.msk [vmem:[#allocation2 + $0x40] sm:$0xff] %vm599, %v3535
      %3638 = vst.msk [vmem:[#allocation2 + $0x48] sm:$0xff] %vm599, %v3538
      %3639 = vst.msk [vmem:[#allocation2 + $0x50] sm:$0xff] %vm599, %v3543
      %3640 = vst.msk [vmem:[#allocation2 + $0x58] sm:$0xff] %vm599, %v3546
      %3641 = vst.msk [vmem:[#allocation2 + $0x60] sm:$0xff] %vm599, %v3551
      %3642 = vst.msk [vmem:[#allocation2 + $0x68] sm:$0xff] %vm599, %v3554
      %3643 = vst.msk [vmem:[#allocation2 + $0x70] sm:$0xff] %vm599, %v3559
      %3644 = vst.msk [vmem:[#allocation2 + $0x78] sm:$0xff] %vm599, %v3562
      %3645 = vst.msk [vmem:[#allocation2 + $0x80] sm:$0xff] %vm599, %v3567
      %3646 = vst.msk [vmem:[#allocation2 + $0x88] sm:$0xff] %vm599, %v3570
      %3647 = vst.msk [vmem:[#allocation2 + $0x90] sm:$0xff] %vm599, %v3575
      %3648 = vst.msk [vmem:[#allocation2 + $0x98] sm:$0xff] %vm599, %v3578
      %3649 = vst.msk [vmem:[#allocation2 + $0xa0] sm:$0xff] %vm599, %v3583
      %3650 = vst.msk [vmem:[#allocation2 + $0xa8] sm:$0xff] %vm599, %v3586
      %3651 = vst.msk [vmem:[#allocation2 + $0xb0] sm:$0xff] %vm599, %v3591
      %3652 = vst.msk [vmem:[#allocation2 + $0xb8] sm:$0xff] %vm599, %v3594
      %3653 = vst.msk [vmem:[#allocation2 + $0xc0] sm:$0xff] %vm599, %v3599
      %3654 = vst.msk [vmem:[#allocation2 + $0xc8] sm:$0xff] %vm599, %v3602
      %3655 = vst.msk [vmem:[#allocation2 + $0xd0] sm:$0xff] %vm599, %v3607
      %3656 = vst.msk [vmem:[#allocation2 + $0xd8] sm:$0xff] %vm599, %v3610
      %3657 = vst.msk [vmem:[#allocation2 + $0xe0] sm:$0xff] %vm599, %v3615
      %3658 = vst.msk [vmem:[#allocation2 + $0xe8] sm:$0xff] %vm599, %v3618
      %3659 = vst.msk [vmem:[#allocation2 + $0xf0] sm:$0xff] %vm599, %v3623
      %3660 = vst.msk [vmem:[#allocation2 + $0xf8] sm:$0xff] %vm599, %v3626
      %v3661 = vld [vmem:[#allocation2] sm:$0xff]
      %v3662 = vld [vmem:[#allocation2 + $0x8] sm:$0xff]
      %v3663 = vld [vmem:[#allocation2 + $0x10] sm:$0xff]
      %v3664 = vld [vmem:[#allocation2 + $0x18] sm:$0xff]
      %v3665 = vld [vmem:[#allocation2 + $0x20] sm:$0xff]
      %v3666 = vld [vmem:[#allocation2 + $0x28] sm:$0xff]
      %v3667 = vld [vmem:[#allocation2 + $0x30] sm:$0xff]
      %v3668 = vld [vmem:[#allocation2 + $0x38] sm:$0xff]
      %v3669 = vld [vmem:[#allocation2 + $0x40] sm:$0xff]
      %v3670 = vld [vmem:[#allocation2 + $0x48] sm:$0xff]
      %v3671 = vld [vmem:[#allocation2 + $0x50] sm:$0xff]
      %v3672 = vld [vmem:[#allocation2 + $0x58] sm:$0xff]
      %v3673 = vld [vmem:[#allocation2 + $0x60] sm:$0xff]
      %v3674 = vld [vmem:[#allocation2 + $0x68] sm:$0xff]
      %v3675 = vld [vmem:[#allocation2 + $0x70] sm:$0xff]
      %v3676 = vld [vmem:[#allocation2 + $0x78] sm:$0xff]
      %v3677 = vld [vmem:[#allocation2 + $0x80] sm:$0xff]
      %v3678 = vld [vmem:[#allocation2 + $0x88] sm:$0xff]
      %v3679 = vld [vmem:[#allocation2 + $0x90] sm:$0xff]
      %v3680 = vld [vmem:[#allocation2 + $0x98] sm:$0xff]
      %v3681 = vld [vmem:[#allocation2 + $0xa0] sm:$0xff]
      %v3682 = vld [vmem:[#allocation2 + $0xa8] sm:$0xff]
      %v3683 = vld [vmem:[#allocation2 + $0xb0] sm:$0xff]
      %v3684 = vld [vmem:[#allocation2 + $0xb8] sm:$0xff]
      %v3685 = vld [vmem:[#allocation2 + $0xc0] sm:$0xff]
      %v3686 = vld [vmem:[#allocation2 + $0xc8] sm:$0xff]
      %v3687 = vld [vmem:[#allocation2 + $0xd0] sm:$0xff]
      %v3688 = vld [vmem:[#allocation2 + $0xd8] sm:$0xff]
      %v3689 = vld [vmem:[#allocation2 + $0xe0] sm:$0xff]
      %v3690 = vld [vmem:[#allocation2 + $0xe8] sm:$0xff]
      %v3691 = vld [vmem:[#allocation2 + $0xf0] sm:$0xff]
      %v3692 = vld [vmem:[#allocation2 + $0xf8] sm:$0xff]
      %s3693 = scalar_lea.vmem %s1, 224
      %v3694 = vld [vmem:[%s3693] sm:$0xf]
      %v3695 = vld [vmem:[%s3693 + $0x4] sm:$0xf]
      %v3696 = vld [vmem:[%s3693 + $0x8] sm:$0xf]
      %v3697 = vld [vmem:[%s3693 + $0xc] sm:$0xf]
      %v3698 = vld [vmem:[%s3693 + $0x10] sm:$0xf]
      %v3699 = vld [vmem:[%s3693 + $0x14] sm:$0xf]
      %v3700 = vld [vmem:[%s3693 + $0x18] sm:$0xf]
      %v3701 = vld [vmem:[%s3693 + $0x1c] sm:$0xf]
      %v3734 = vunpack.c.l.b16 %v3243
      %v3735 = vunpack.c.l.b16 %v3244
      %v3736 = vunpack.c.l.b16 %v3245
      %v3737 = vunpack.c.l.b16 %v3246
      %v3738 = vunpack.c.l.b16 %v3247
      %v3739 = vunpack.c.l.b16 %v3248
      %v3740 = vunpack.c.l.b16 %v3249
      %v3741 = vunpack.c.l.b16 %v3250
      %v3742 = vunpack.c.l.b16 %v3251
      %v3743 = vunpack.c.l.b16 %v3252
      %v3744 = vunpack.c.l.b16 %v3253
      %v3745 = vunpack.c.l.b16 %v3254
      %v3746 = vunpack.c.l.b16 %v3255
      %v3747 = vunpack.c.l.b16 %v3256
      %v3748 = vunpack.c.l.b16 %v3257
      %v3749 = vunpack.c.l.b16 %v3258
      %v3750 = vunpack.c.l.b16 %v3259
      %v3751 = vunpack.c.l.b16 %v3260
      %v3752 = vunpack.c.l.b16 %v3261
      %v3753 = vunpack.c.l.b16 %v3262
      %v3754 = vunpack.c.l.b16 %v3263
      %v3755 = vunpack.c.l.b16 %v3264
      %v3756 = vunpack.c.l.b16 %v3265
      %v3757 = vunpack.c.l.b16 %v3266
      %v3758 = vunpack.c.l.b16 %v3267
      %v3759 = vunpack.c.l.b16 %v3268
      %v3760 = vunpack.c.l.b16 %v3269
      %v3761 = vunpack.c.l.b16 %v3270
      %v3762 = vunpack.c.l.b16 %v3271
      %v3763 = vunpack.c.l.b16 %v3272
      %v3764 = vunpack.c.l.b16 %v3273
      %v3765 = vunpack.c.l.b16 %v3274
      %v3766 = vpack.c.b16 %v3735, %v3734
      %v3767 = vpack.c.b16 %v3737, %v3736
      %v3768 = vpack.c.b16 %v3739, %v3738
      %v3769 = vpack.c.b16 %v3741, %v3740
      %v3770 = vpack.c.b16 %v3743, %v3742
      %v3771 = vpack.c.b16 %v3745, %v3744
      %v3772 = vpack.c.b16 %v3747, %v3746
      %v3773 = vpack.c.b16 %v3749, %v3748
      %v3774 = vpack.c.b16 %v3751, %v3750
      %v3775 = vpack.c.b16 %v3753, %v3752
      %v3776 = vpack.c.b16 %v3755, %v3754
      %v3777 = vpack.c.b16 %v3757, %v3756
      %v3778 = vpack.c.b16 %v3759, %v3758
      %v3779 = vpack.c.b16 %v3761, %v3760
      %v3780 = vpack.c.b16 %v3763, %v3762
      %v3781 = vpack.c.b16 %v3765, %v3764
      %3782 = vrot.lane.b32.xlu0 %v3766, 96
      %v3783 = vpop.permute.xlu0 %3782
      %3784 = vrot.lane.b32.xlu0 %v3767, 96
      %v3785 = vpop.permute.xlu0 %3784
      %3786 = vrot.lane.b32.xlu0 %v3768, 96
      %v3787 = vpop.permute.xlu0 %3786
      %3788 = vrot.lane.b32.xlu0 %v3769, 96
      %v3789 = vpop.permute.xlu0 %3788
      %3790 = vrot.lane.b32.xlu0 %v3770, 96
      %v3791 = vpop.permute.xlu0 %3790
      %3792 = vrot.lane.b32.xlu0 %v3771, 96
      %v3793 = vpop.permute.xlu0 %3792
      %3794 = vrot.lane.b32.xlu0 %v3772, 96
      %v3795 = vpop.permute.xlu0 %3794
      %3796 = vrot.lane.b32.xlu0 %v3773, 96
      %v3797 = vpop.permute.xlu0 %3796
      %3798 = vrot.lane.b32.xlu0 %v3774, 96
      %v3799 = vpop.permute.xlu0 %3798
      %3800 = vrot.lane.b32.xlu0 %v3775, 96
      %v3801 = vpop.permute.xlu0 %3800
      %3802 = vrot.lane.b32.xlu0 %v3776, 96
      %v3803 = vpop.permute.xlu0 %3802
      %3804 = vrot.lane.b32.xlu0 %v3777, 96
      %v3805 = vpop.permute.xlu0 %3804
      %3806 = vrot.lane.b32.xlu0 %v3778, 96
      %v3807 = vpop.permute.xlu0 %3806
      %3808 = vrot.lane.b32.xlu0 %v3779, 96
      %v3809 = vpop.permute.xlu0 %3808
      %3810 = vrot.lane.b32.xlu0 %v3780, 96
      %v3811 = vpop.permute.xlu0 %3810
      %3812 = vrot.lane.b32.xlu0 %v3781, 96
      %v3813 = vpop.permute.xlu0 %3812
      %v3822 = vunpack.c.l.b16 %v3694
      %v3823 = vunpack.c.l.b16 %v3695
      %v3824 = vunpack.c.l.b16 %v3696
      %v3825 = vunpack.c.l.b16 %v3697
      %v3826 = vunpack.c.l.b16 %v3698
      %v3827 = vunpack.c.l.b16 %v3699
      %v3828 = vunpack.c.l.b16 %v3700
      %v3829 = vunpack.c.l.b16 %v3701
      %v3830 = vpack.c.b16 %v3823, %v3822
      %v3831 = vpack.c.b16 %v3825, %v3824
      %v3832 = vpack.c.b16 %v3827, %v3826
      %v3833 = vpack.c.b16 %v3829, %v3828
      %v3839 = vsel %vm389, %v3783, 0
      %v3842 = vsel %vm389, %v3785, 0
      %v3845 = vsel %vm389, %v3787, 0
      %v3848 = vsel %vm389, %v3789, 0
      %v3851 = vsel %vm389, %v3791, 0
      %v3854 = vsel %vm389, %v3793, 0
      %v3857 = vsel %vm389, %v3795, 0
      %v3860 = vsel %vm389, %v3797, 0
      %v3863 = vsel %vm389, %v3799, 0
      %v3866 = vsel %vm389, %v3801, 0
      %v3869 = vsel %vm389, %v3803, 0
      %v3872 = vsel %vm389, %v3805, 0
      %v3875 = vsel %vm389, %v3807, 0
      %v3878 = vsel %vm389, %v3809, 0
      %v3881 = vsel %vm389, %v3811, 0
      %v3884 = vsel %vm389, %v3813, 0
      %3886 = vmatprep.subr.bf16.mxu0 0
      %3887 = vmatpush1.bf16.msra.mxu0 %v3830
      %3888 = vmatprep.subr.bf16.mxu0 0
      %3889 = vmatpush1.bf16.msra.mxu0 %v3831
      %3890 = vmatprep.subr.bf16.mxu0 0
      %3891 = vmatpush1.bf16.msra.mxu0 %v3832
      %3892 = vmatprep.subr.bf16.mxu0 0
      %3893 = vmatpush1.bf16.msra.mxu0 %v3833
      %3894 = vmatprep.subr.bf16.mxu0 0
      %3895 = vmatpush1.bf16.msra.mxu0 0
      %3896 = vmatprep.subr.bf16.mxu0 0
      %3897 = vmatpush1.bf16.msra.mxu0 0
      %3898 = vmatprep.subr.bf16.mxu0 0
      %3899 = vmatpush1.bf16.msra.mxu0 0
      %3900 = vmatprep.subr.bf16.mxu0 0
      %3901 = vmatpush1.bf16.msra.mxu0 0
      %3902 = vmatprep.subr.bf16.mxu0 0
      %3903 = vmatpush1.bf16.msra.mxu0 0
      %3904 = vmatprep.subr.bf16.mxu0 0
      %3905 = vmatpush1.bf16.msra.mxu0 0
      %3906 = vmatprep.subr.bf16.mxu0 0
      %3907 = vmatpush1.bf16.msra.mxu0 0
      %3908 = vmatprep.subr.bf16.mxu0 0
      %3909 = vmatpush1.bf16.msra.mxu0 0
      %3910 = vmatprep.subr.bf16.mxu0 0
      %3911 = vmatpush1.bf16.msra.mxu0 0
      %3912 = vmatprep.subr.bf16.mxu0 0
      %3913 = vmatpush1.bf16.msra.mxu0 0
      %3914 = vmatprep.subr.bf16.mxu0 0
      %3915 = vmatpush1.bf16.msra.mxu0 0
      %3916 = vmatprep.subr.bf16.mxu0 0
      %3917 = vmatpush1.bf16.msra.mxu0 0
      %3918 = vmatprep.mubr.bf16.mxu0 0
      %3919 = vmatmul.mubr.bf16.gmra.mrb[0].mxu0 %v3839
      %v3920 = vpop.f32.mrb[0].mxu0
      %v3921 = vadd.f32 0.0, %v3920
      %v3922 = vpop.f32.mrb[0].mxu0
      %v3923 = vpop.f32.mrb[0].mxu0
      %v3924 = vadd.f32 0.0, %v3923
      %v3925 = vpop.f32.mrb[0].mxu0
      %3926 = vmatprep.mubr.bf16.mxu0 0
      %3927 = vmatmul.mubr.bf16.gmra.mrb[0].mxu0 %v3842
      %v3928 = vpop.f32.mrb[0].mxu0
      %v3929 = vadd.f32 0.0, %v3928
      %v3930 = vpop.f32.mrb[0].mxu0
      %v3931 = vpop.f32.mrb[0].mxu0
      %v3932 = vadd.f32 0.0, %v3931
      %v3933 = vpop.f32.mrb[0].mxu0
      %3934 = vmatprep.mubr.bf16.mxu0 0
      %3935 = vmatmul.mubr.bf16.gmra.mrb[0].mxu0 %v3845
      %v3936 = vpop.f32.mrb[0].mxu0
      %v3937 = vadd.f32 0.0, %v3936
      %v3938 = vpop.f32.mrb[0].mxu0
      %v3939 = vpop.f32.mrb[0].mxu0
      %v3940 = vadd.f32 0.0, %v3939
      %v3941 = vpop.f32.mrb[0].mxu0
      %3942 = vmatprep.mubr.bf16.mxu0 0
      %3943 = vmatmul.mubr.bf16.gmra.mrb[0].mxu0 %v3848
      %v3944 = vpop.f32.mrb[0].mxu0
      %v3945 = vadd.f32 0.0, %v3944
      %v3946 = vpop.f32.mrb[0].mxu0
      %v3947 = vpop.f32.mrb[0].mxu0
      %v3948 = vadd.f32 0.0, %v3947
      %v3949 = vpop.f32.mrb[0].mxu0
      %3950 = vmatprep.mubr.bf16.mxu0 0
      %3951 = vmatmul.mubr.bf16.gmra.mrb[0].mxu0 %v3851
      %v3952 = vpop.f32.mrb[0].mxu0
      %v3953 = vadd.f32 0.0, %v3952
      %v3954 = vpop.f32.mrb[0].mxu0
      %v3955 = vpop.f32.mrb[0].mxu0
      %v3956 = vadd.f32 0.0, %v3955
      %v3957 = vpop.f32.mrb[0].mxu0
      %3958 = vmatprep.mubr.bf16.mxu0 0
      %3959 = vmatmul.mubr.bf16.gmra.mrb[0].mxu0 %v3854
      %v3960 = vpop.f32.mrb[0].mxu0
      %v3961 = vadd.f32 0.0, %v3960
      %v3962 = vpop.f32.mrb[0].mxu0
      %v3963 = vpop.f32.mrb[0].mxu0
      %v3964 = vadd.f32 0.0, %v3963
      %v3965 = vpop.f32.mrb[0].mxu0
      %3966 = vmatprep.mubr.bf16.mxu0 0
      %3967 = vmatmul.mubr.bf16.gmra.mrb[0].mxu0 %v3857
      %v3968 = vpop.f32.mrb[0].mxu0
      %v3969 = vadd.f32 0.0, %v3968
      %v3970 = vpop.f32.mrb[0].mxu0
      %v3971 = vpop.f32.mrb[0].mxu0
      %v3972 = vadd.f32 0.0, %v3971
      %v3973 = vpop.f32.mrb[0].mxu0
      %3974 = vmatprep.mubr.bf16.mxu0 0
      %3975 = vmatmul.mubr.bf16.gmra.mrb[0].mxu0 %v3860
      %v3976 = vpop.f32.mrb[0].mxu0
      %v3977 = vadd.f32 0.0, %v3976
      %v3978 = vpop.f32.mrb[0].mxu0
      %v3979 = vpop.f32.mrb[0].mxu0
      %v3980 = vadd.f32 0.0, %v3979
      %v3981 = vpop.f32.mrb[0].mxu0
      %3982 = vmatprep.mubr.bf16.mxu0 0
      %3983 = vmatmul.mubr.bf16.gmra.mrb[0].mxu0 %v3863
      %v3984 = vpop.f32.mrb[0].mxu0
      %v3985 = vadd.f32 0.0, %v3984
      %v3986 = vpop.f32.mrb[0].mxu0
      %v3987 = vpop.f32.mrb[0].mxu0
      %v3988 = vadd.f32 0.0, %v3987
      %v3989 = vpop.f32.mrb[0].mxu0
      %3990 = vmatprep.mubr.bf16.mxu0 0
      %3991 = vmatmul.mubr.bf16.gmra.mrb[0].mxu0 %v3866
      %v3992 = vpop.f32.mrb[0].mxu0
      %v3993 = vadd.f32 0.0, %v3992
      %v3994 = vpop.f32.mrb[0].mxu0
      %v3995 = vpop.f32.mrb[0].mxu0
      %v3996 = vadd.f32 0.0, %v3995
      %v3997 = vpop.f32.mrb[0].mxu0
      %3998 = vmatprep.mubr.bf16.mxu0 0
      %3999 = vmatmul.mubr.bf16.gmra.mrb[0].mxu0 %v3869
      %v4000 = vpop.f32.mrb[0].mxu0
      %v4001 = vadd.f32 0.0, %v4000
      %v4002 = vpop.f32.mrb[0].mxu0
      %v4003 = vpop.f32.mrb[0].mxu0
      %v4004 = vadd.f32 0.0, %v4003
      %v4005 = vpop.f32.mrb[0].mxu0
      %4006 = vmatprep.mubr.bf16.mxu0 0
      %4007 = vmatmul.mubr.bf16.gmra.mrb[0].mxu0 %v3872
      %v4008 = vpop.f32.mrb[0].mxu0
      %v4009 = vadd.f32 0.0, %v4008
      %v4010 = vpop.f32.mrb[0].mxu0
      %v4011 = vpop.f32.mrb[0].mxu0
      %v4012 = vadd.f32 0.0, %v4011
      %v4013 = vpop.f32.mrb[0].mxu0
      %4014 = vmatprep.mubr.bf16.mxu0 0
      %4015 = vmatmul.mubr.bf16.gmra.mrb[0].mxu0 %v3875
      %v4016 = vpop.f32.mrb[0].mxu0
      %v4017 = vadd.f32 0.0, %v4016
      %v4018 = vpop.f32.mrb[0].mxu0
      %v4019 = vpop.f32.mrb[0].mxu0
      %v4020 = vadd.f32 0.0, %v4019
      %v4021 = vpop.f32.mrb[0].mxu0
      %4022 = vmatprep.mubr.bf16.mxu0 0
      %4023 = vmatmul.mubr.bf16.gmra.mrb[0].mxu0 %v3878
      %v4024 = vpop.f32.mrb[0].mxu0
      %v4025 = vadd.f32 0.0, %v4024
      %v4026 = vpop.f32.mrb[0].mxu0
      %v4027 = vpop.f32.mrb[0].mxu0
      %v4028 = vadd.f32 0.0, %v4027
      %v4029 = vpop.f32.mrb[0].mxu0
      %4030 = vmatprep.mubr.bf16.mxu0 0
      %4031 = vmatmul.mubr.bf16.gmra.mrb[0].mxu0 %v3881
      %v4032 = vpop.f32.mrb[0].mxu0
      %v4033 = vadd.f32 0.0, %v4032
      %v4034 = vpop.f32.mrb[0].mxu0
      %v4035 = vpop.f32.mrb[0].mxu0
      %v4036 = vadd.f32 0.0, %v4035
      %v4037 = vpop.f32.mrb[0].mxu0
      %4038 = vmatprep.mubr.bf16.mxu0 0
      %4039 = vmatmul.mubr.bf16.gmra.mrb[0].mxu0 %v3884
      %v4040 = vpop.f32.mrb[0].mxu0
      %v4041 = vadd.f32 0.0, %v4040
      %v4042 = vpop.f32.mrb[0].mxu0
      %v4043 = vpop.f32.mrb[0].mxu0
      %v4044 = vadd.f32 0.0, %v4043
      %v4045 = vpop.f32.mrb[0].mxu0
      %4046 = vdwg.mxu0
      %v4047 = vadd.f32 %v3661, %v3921
      %v4048 = vadd.f32 %v3662, %v3924
      %v4049 = vadd.f32 %v3663, %v3929
      %v4050 = vadd.f32 %v3664, %v3932
      %v4051 = vadd.f32 %v3665, %v3937
      %v4052 = vadd.f32 %v3666, %v3940
      %v4053 = vadd.f32 %v3667, %v3945
      %v4054 = vadd.f32 %v3668, %v3948
      %v4055 = vadd.f32 %v3669, %v3953
      %v4056 = vadd.f32 %v3670, %v3956
      %v4057 = vadd.f32 %v3671, %v3961
      %v4058 = vadd.f32 %v3672, %v3964
      %v4059 = vadd.f32 %v3673, %v3969
      %v4060 = vadd.f32 %v3674, %v3972
      %v4061 = vadd.f32 %v3675, %v3977
      %v4062 = vadd.f32 %v3676, %v3980
      %v4063 = vadd.f32 %v3677, %v3985
      %v4064 = vadd.f32 %v3678, %v3988
      %v4065 = vadd.f32 %v3679, %v3993
      %v4066 = vadd.f32 %v3680, %v3996
      %v4067 = vadd.f32 %v3681, %v4001
      %v4068 = vadd.f32 %v3682, %v4004
      %v4069 = vadd.f32 %v3683, %v4009
      %v4070 = vadd.f32 %v3684, %v4012
      %v4071 = vadd.f32 %v3685, %v4017
      %v4072 = vadd.f32 %v3686, %v4020
      %v4073 = vadd.f32 %v3687, %v4025
      %v4074 = vadd.f32 %v3688, %v4028
      %v4075 = vadd.f32 %v3689, %v4033
      %v4076 = vadd.f32 %v3690, %v4036
      %v4077 = vadd.f32 %v3691, %v4041
      %v4078 = vadd.f32 %v3692, %v4044
      %4079 = vst.msk [vmem:[#allocation2] sm:$0xff] %vm599, %v4047
      %4080 = vst.msk [vmem:[#allocation2 + $0x8] sm:$0xff] %vm599, %v4048
      %4081 = vst.msk [vmem:[#allocation2 + $0x10] sm:$0xff] %vm599, %v4049
      %4082 = vst.msk [vmem:[#allocation2 + $0x18] sm:$0xff] %vm599, %v4050
      %4083 = vst.msk [vmem:[#allocation2 + $0x20] sm:$0xff] %vm599, %v4051
      %4084 = vst.msk [vmem:[#allocation2 + $0x28] sm:$0xff] %vm599, %v4052
      %4085 = vst.msk [vmem:[#allocation2 + $0x30] sm:$0xff] %vm599, %v4053
      %4086 = vst.msk [vmem:[#allocation2 + $0x38] sm:$0xff] %vm599, %v4054
      %4087 = vst.msk [vmem:[#allocation2 + $0x40] sm:$0xff] %vm599, %v4055
      %4088 = vst.msk [vmem:[#allocation2 + $0x48] sm:$0xff] %vm599, %v4056
      %4089 = vst.msk [vmem:[#allocation2 + $0x50] sm:$0xff] %vm599, %v4057
      %4090 = vst.msk [vmem:[#allocation2 + $0x58] sm:$0xff] %vm599, %v4058
      %4091 = vst.msk [vmem:[#allocation2 + $0x60] sm:$0xff] %vm599, %v4059
      %4092 = vst.msk [vmem:[#allocation2 + $0x68] sm:$0xff] %vm599, %v4060
      %4093 = vst.msk [vmem:[#allocation2 + $0x70] sm:$0xff] %vm599, %v4061
      %4094 = vst.msk [vmem:[#allocation2 + $0x78] sm:$0xff] %vm599, %v4062
      %4095 = vst.msk [vmem:[#allocation2 + $0x80] sm:$0xff] %vm599, %v4063
      %4096 = vst.msk [vmem:[#allocation2 + $0x88] sm:$0xff] %vm599, %v4064
      %4097 = vst.msk [vmem:[#allocation2 + $0x90] sm:$0xff] %vm599, %v4065
      %4098 = vst.msk [vmem:[#allocation2 + $0x98] sm:$0xff] %vm599, %v4066
      %4099 = vst.msk [vmem:[#allocation2 + $0xa0] sm:$0xff] %vm599, %v4067
      %4100 = vst.msk [vmem:[#allocation2 + $0xa8] sm:$0xff] %vm599, %v4068
      %4101 = vst.msk [vmem:[#allocation2 + $0xb0] sm:$0xff] %vm599, %v4069
      %4102 = vst.msk [vmem:[#allocation2 + $0xb8] sm:$0xff] %vm599, %v4070
      %4103 = vst.msk [vmem:[#allocation2 + $0xc0] sm:$0xff] %vm599, %v4071
      %4104 = vst.msk [vmem:[#allocation2 + $0xc8] sm:$0xff] %vm599, %v4072
      %4105 = vst.msk [vmem:[#allocation2 + $0xd0] sm:$0xff] %vm599, %v4073
      %4106 = vst.msk [vmem:[#allocation2 + $0xd8] sm:$0xff] %vm599, %v4074
      %4107 = vst.msk [vmem:[#allocation2 + $0xe0] sm:$0xff] %vm599, %v4075
      %4108 = vst.msk [vmem:[#allocation2 + $0xe8] sm:$0xff] %vm599, %v4076
      %4109 = vst.msk [vmem:[#allocation2 + $0xf0] sm:$0xff] %vm599, %v4077
      %4110 = vst.msk [vmem:[#allocation2 + $0xf8] sm:$0xff] %vm599, %v4078
      %v4111 = vld [vmem:[#allocation2] sm:$0xff]
      %v4112 = vld [vmem:[#allocation2 + $0x8] sm:$0xff]
      %v4113 = vld [vmem:[#allocation2 + $0x10] sm:$0xff]
      %v4114 = vld [vmem:[#allocation2 + $0x18] sm:$0xff]
      %v4115 = vld [vmem:[#allocation2 + $0x20] sm:$0xff]
      %v4116 = vld [vmem:[#allocation2 + $0x28] sm:$0xff]
      %v4117 = vld [vmem:[#allocation2 + $0x30] sm:$0xff]
      %v4118 = vld [vmem:[#allocation2 + $0x38] sm:$0xff]
      %v4119 = vld [vmem:[#allocation2 + $0x40] sm:$0xff]
      %v4120 = vld [vmem:[#allocation2 + $0x48] sm:$0xff]
      %v4121 = vld [vmem:[#allocation2 + $0x50] sm:$0xff]
      %v4122 = vld [vmem:[#allocation2 + $0x58] sm:$0xff]
      %v4123 = vld [vmem:[#allocation2 + $0x60] sm:$0xff]
      %v4124 = vld [vmem:[#allocation2 + $0x68] sm:$0xff]
      %v4125 = vld [vmem:[#allocation2 + $0x70] sm:$0xff]
      %v4126 = vld [vmem:[#allocation2 + $0x78] sm:$0xff]
      %v4127 = vld [vmem:[#allocation2 + $0x80] sm:$0xff]
      %v4128 = vld [vmem:[#allocation2 + $0x88] sm:$0xff]
      %v4129 = vld [vmem:[#allocation2 + $0x90] sm:$0xff]
      %v4130 = vld [vmem:[#allocation2 + $0x98] sm:$0xff]
      %v4131 = vld [vmem:[#allocation2 + $0xa0] sm:$0xff]
      %v4132 = vld [vmem:[#allocation2 + $0xa8] sm:$0xff]
      %v4133 = vld [vmem:[#allocation2 + $0xb0] sm:$0xff]
      %v4134 = vld [vmem:[#allocation2 + $0xb8] sm:$0xff]
      %v4135 = vld [vmem:[#allocation2 + $0xc0] sm:$0xff]
      %v4136 = vld [vmem:[#allocation2 + $0xc8] sm:$0xff]
      %v4137 = vld [vmem:[#allocation2 + $0xd0] sm:$0xff]
      %v4138 = vld [vmem:[#allocation2 + $0xd8] sm:$0xff]
      %v4139 = vld [vmem:[#allocation2 + $0xe0] sm:$0xff]
      %v4140 = vld [vmem:[#allocation2 + $0xe8] sm:$0xff]
      %v4141 = vld [vmem:[#allocation2 + $0xf0] sm:$0xff]
      %v4142 = vld [vmem:[#allocation2 + $0xf8] sm:$0xff]
      %v4143 = vadd.f32 %v4111, %v1086
      %v4144 = vadd.f32 %v4112, %v1086
      %v4145 = vadd.f32 %v4113, %v1086
      %v4146 = vadd.f32 %v4114, %v1086
      %v4147 = vadd.f32 %v4115, %v1086
      %v4148 = vadd.f32 %v4116, %v1086
      %v4149 = vadd.f32 %v4117, %v1086
      %v4150 = vadd.f32 %v4118, %v1086
      %v4151 = vadd.f32 %v4119, %v1086
      %v4152 = vadd.f32 %v4120, %v1086
      %v4153 = vadd.f32 %v4121, %v1086
      %v4154 = vadd.f32 %v4122, %v1086
      %v4155 = vadd.f32 %v4123, %v1086
      %v4156 = vadd.f32 %v4124, %v1086
      %v4157 = vadd.f32 %v4125, %v1086
      %v4158 = vadd.f32 %v4126, %v1086
      %v4159 = vadd.f32 %v4127, %v1086
      %v4160 = vadd.f32 %v4128, %v1086
      %v4161 = vadd.f32 %v4129, %v1086
      %v4162 = vadd.f32 %v4130, %v1086
      %v4163 = vadd.f32 %v4131, %v1086
      %v4164 = vadd.f32 %v4132, %v1086
      %v4165 = vadd.f32 %v4133, %v1086
      %v4166 = vadd.f32 %v4134, %v1086
      %v4167 = vadd.f32 %v4135, %v1086
      %v4168 = vadd.f32 %v4136, %v1086
      %v4169 = vadd.f32 %v4137, %v1086
      %v4170 = vadd.f32 %v4138, %v1086
      %v4171 = vadd.f32 %v4139, %v1086
      %v4172 = vadd.f32 %v4140, %v1086
      %v4173 = vadd.f32 %v4141, %v1086
      %v4174 = vadd.f32 %v4142, %v1086
      %4207 = vrot.lane.b32.xlu0 %v4143, 32
      %v4208 = vpop.permute.xlu0 %4207
      %4209 = vrot.lane.b32.xlu0 %v4144, 32
      %v4210 = vpop.permute.xlu0 %4209
      %4211 = vrot.lane.b32.xlu0 %v4145, 32
      %v4212 = vpop.permute.xlu0 %4211
      %4213 = vrot.lane.b32.xlu0 %v4146, 32
      %v4214 = vpop.permute.xlu0 %4213
      %4215 = vrot.lane.b32.xlu0 %v4147, 32
      %v4216 = vpop.permute.xlu0 %4215
      %4217 = vrot.lane.b32.xlu0 %v4148, 32
      %v4218 = vpop.permute.xlu0 %4217
      %4219 = vrot.lane.b32.xlu0 %v4149, 32
      %v4220 = vpop.permute.xlu0 %4219
      %4221 = vrot.lane.b32.xlu0 %v4150, 32
      %v4222 = vpop.permute.xlu0 %4221
      %4223 = vrot.lane.b32.xlu0 %v4151, 32
      %v4224 = vpop.permute.xlu0 %4223
      %4225 = vrot.lane.b32.xlu0 %v4152, 32
      %v4226 = vpop.permute.xlu0 %4225
      %4227 = vrot.lane.b32.xlu0 %v4153, 32
      %v4228 = vpop.permute.xlu0 %4227
      %4229 = vrot.lane.b32.xlu0 %v4154, 32
      %v4230 = vpop.permute.xlu0 %4229
      %4231 = vrot.lane.b32.xlu0 %v4155, 32
      %v4232 = vpop.permute.xlu0 %4231
      %4233 = vrot.lane.b32.xlu0 %v4156, 32
      %v4234 = vpop.permute.xlu0 %4233
      %4235 = vrot.lane.b32.xlu0 %v4157, 32
      %v4236 = vpop.permute.xlu0 %4235
      %4237 = vrot.lane.b32.xlu0 %v4158, 32
      %v4238 = vpop.permute.xlu0 %4237
      %4239 = vrot.lane.b32.xlu0 %v4159, 32
      %v4240 = vpop.permute.xlu0 %4239
      %4241 = vrot.lane.b32.xlu0 %v4160, 32
      %v4242 = vpop.permute.xlu0 %4241
      %4243 = vrot.lane.b32.xlu0 %v4161, 32
      %v4244 = vpop.permute.xlu0 %4243
      %4245 = vrot.lane.b32.xlu0 %v4162, 32
      %v4246 = vpop.permute.xlu0 %4245
      %4247 = vrot.lane.b32.xlu0 %v4163, 32
      %v4248 = vpop.permute.xlu0 %4247
      %4249 = vrot.lane.b32.xlu0 %v4164, 32
      %v4250 = vpop.permute.xlu0 %4249
      %4251 = vrot.lane.b32.xlu0 %v4165, 32
      %v4252 = vpop.permute.xlu0 %4251
      %4253 = vrot.lane.b32.xlu0 %v4166, 32
      %v4254 = vpop.permute.xlu0 %4253
      %4255 = vrot.lane.b32.xlu0 %v4167, 32
      %v4256 = vpop.permute.xlu0 %4255
      %4257 = vrot.lane.b32.xlu0 %v4168, 32
      %v4258 = vpop.permute.xlu0 %4257
      %4259 = vrot.lane.b32.xlu0 %v4169, 32
      %v4260 = vpop.permute.xlu0 %4259
      %4261 = vrot.lane.b32.xlu0 %v4170, 32
      %v4262 = vpop.permute.xlu0 %4261
      %4263 = vrot.lane.b32.xlu0 %v4171, 32
      %v4264 = vpop.permute.xlu0 %4263
      %4265 = vrot.lane.b32.xlu0 %v4172, 32
      %v4266 = vpop.permute.xlu0 %4265
      %4267 = vrot.lane.b32.xlu0 %v4173, 32
      %v4268 = vpop.permute.xlu0 %4267
      %4269 = vrot.lane.b32.xlu0 %v4174, 32
      %v4270 = vpop.permute.xlu0 %4269
      %4303 = vst.msk [vmem:[%s3178] sm:$0xff] %vm2244, %v4208
      %4304 = vst.msk [vmem:[%s3178 + $0x8] sm:$0xff] %vm2244, %v4210
      %4305 = vst.msk [vmem:[%s3178 + $0x20] sm:$0xff] %vm2244, %v4212
      %4306 = vst.msk [vmem:[%s3178 + $0x28] sm:$0xff] %vm2244, %v4214
      %4307 = vst.msk [vmem:[%s3178 + $0x40] sm:$0xff] %vm2244, %v4216
      %4308 = vst.msk [vmem:[%s3178 + $0x48] sm:$0xff] %vm2244, %v4218
      %4309 = vst.msk [vmem:[%s3178 + $0x60] sm:$0xff] %vm2244, %v4220
      %4310 = vst.msk [vmem:[%s3178 + $0x68] sm:$0xff] %vm2244, %v4222
      %4311 = vst.msk [vmem:[%s3178 + $0x80] sm:$0xff] %vm2244, %v4224
      %4312 = vst.msk [vmem:[%s3178 + $0x88] sm:$0xff] %vm2244, %v4226
      %4313 = vst.msk [vmem:[%s3178 + $0xa0] sm:$0xff] %vm2244, %v4228
      %4314 = vst.msk [vmem:[%s3178 + $0xa8] sm:$0xff] %vm2244, %v4230
      %4315 = vst.msk [vmem:[%s3178 + $0xc0] sm:$0xff] %vm2244, %v4232
      %4316 = vst.msk [vmem:[%s3178 + $0xc8] sm:$0xff] %vm2244, %v4234
      %4317 = vst.msk [vmem:[%s3178 + $0xe0] sm:$0xff] %vm2244, %v4236
      %4318 = vst.msk [vmem:[%s3178 + $0xe8] sm:$0xff] %vm2244, %v4238
      %4319 = vst.msk [vmem:[%s3178 + $0x100] sm:$0xff] %vm2244, %v4240
      %4320 = vst.msk [vmem:[%s3178 + $0x108] sm:$0xff] %vm2244, %v4242
      %4321 = vst.msk [vmem:[%s3178 + $0x120] sm:$0xff] %vm2244, %v4244
      %4322 = vst.msk [vmem:[%s3178 + $0x128] sm:$0xff] %vm2244, %v4246
      %4323 = vst.msk [vmem:[%s3178 + $0x140] sm:$0xff] %vm2244, %v4248
      %4324 = vst.msk [vmem:[%s3178 + $0x148] sm:$0xff] %vm2244, %v4250
      %4325 = vst.msk [vmem:[%s3178 + $0x160] sm:$0xff] %vm2244, %v4252
      %4326 = vst.msk [vmem:[%s3178 + $0x168] sm:$0xff] %vm2244, %v4254
      %4327 = vst.msk [vmem:[%s3178 + $0x180] sm:$0xff] %vm2244, %v4256
      %4328 = vst.msk [vmem:[%s3178 + $0x188] sm:$0xff] %vm2244, %v4258
      %4329 = vst.msk [vmem:[%s3178 + $0x1a0] sm:$0xff] %vm2244, %v4260
      %4330 = vst.msk [vmem:[%s3178 + $0x1a8] sm:$0xff] %vm2244, %v4262
      %4331 = vst.msk [vmem:[%s3178 + $0x1c0] sm:$0xff] %vm2244, %v4264
      %4332 = vst.msk [vmem:[%s3178 + $0x1c8] sm:$0xff] %vm2244, %v4266
      %4333 = vst.msk [vmem:[%s3178 + $0x1e0] sm:$0xff] %vm2244, %v4268
      %4334 = vst.msk [vmem:[%s3178 + $0x1e8] sm:$0xff] %vm2244, %v4270
      %s4335 = smul.u32 2, %s18
      %p4336 = scmp.lt.s32.totalorder %s19, 1
      %s4337 = scalar_select %p4336, %s19, 1
      %p4338 = scmp.lt.s32.totalorder %s4335, 1
      %s4339 = scalar_select %p4338, %s4335, 1
      %s4340 = smul.addr %s4337, 64
      %s4341 = sadd.s32 %s4339, %s4340
      %s4342 = smul.addr %s4341, 8
      %s4343 = scalar_lea.vmem %s3, %s4342
      // Predicated region
      $region33: #{tt_upsample2d_forward.1} parent=31 // pred_check
        %p4344 = pneg %p116
      $region34: #{tt_upsample2d_forward.1} parent=31 // pred_check_branch
        %4346 = sbr.rel (%p4344) target = $region36
      $region35: #{tt_upsample2d_forward.1} parent=31 // pred_region
        %s4347 = smul.u32 2, %s18
      $region36: #{tt_upsample2d_forward.1} parent=31 // pred_fallthru
        _
    $region32: #{tt_upsample2d_forward.1} parent=5 // pred_fallthru
      _
    %p4348 = scmp.le.s32.totalorder 2, %s9
    // Predicated region
    $region37: #{tt_upsample2d_forward.1} parent=5 // pred_check
      %p4349 = pneg %p4348
    $region38: #{tt_upsample2d_forward.1} parent=5 // pred_check_branch
      %4351 = sbr.rel (%p4349) target = $region40
    $region39: #{tt_upsample2d_forward.1} parent=5 // pred_region
      %s4352 = ssub.s32 %s9, 2
      // Predicated region
      $region41: #{tt_upsample2d_forward.1} parent=39 // pred_check
        %p4353 = pneg %p122
      $region42: #{tt_upsample2d_forward.1} parent=39 // pred_check_branch
        %4355 = sbr.rel (%p4353) target = $region44
      $region43: #{tt_upsample2d_forward.1} parent=39 // pred_region
        %s4356 = smul.u32 2, %s20
        %p4357 = scmp.lt.s32.totalorder %s21, 1
        %s4358 = scalar_select %p4357, %s21, 1
        %p4359 = scmp.lt.s32.totalorder %s4356, 1
        %s4360 = scalar_select %p4359, %s4356, 1
        %s4361 = smul.addr %s4358, 64
        %s4362 = sadd.s32 %s4360, %s4361
        %s4363 = smul.addr %s4362, 8
        %s4364 = scalar_lea.vmem %s3, %s4363
      $region44: #{tt_upsample2d_forward.1} parent=39 // pred_fallthru
        _
    $region40: #{tt_upsample2d_forward.1} parent=5 // pred_fallthru
      _
  $region6: #{tt_upsample2d_forward.1} parent=0 // loop_footer
    %s13 = sadd.s32 1, %s9
  $region7: #{tt_upsample2d_forward.1} parent=0 // loop_footer_branch
    %8 = sbr.rel target = $region3
  $region8: #{tt_upsample2d_forward.1} parent=0 // loop_exit
    _

</llo_original>
